<compile_context>
chip_gen: v7x
topology: tpu7x:2x2x1
jax: 0.10.0
libtpu: 0.0.40
codegen_flags: <defaults>
</compile_context>

<pallas_src>
import functools

import jax
import jax.numpy as jnp
from jax.experimental import pallas as pl
from jax.experimental.pallas import tpu as pltpu


# ----------------------------------------------------------------------------
# Kernel 1: one segment of the synthetic infini-attention block.
# grid = (B,), one batch row per grid step (parallel -> megacore on v7x).
# Produces hidden states y (pre-vocab-projection) and the updated memories.
# ----------------------------------------------------------------------------
def seg_attn_kernel(x_ref, wq_ref, wk_ref, wv_ref, wo_ref, gate_ref,
                    m_ref, z_ref,
                    y_ref, m_out_ref, z_out_ref):
    H = m_ref.shape[0]
    DH = m_ref.shape[2]

    x = x_ref[...]                                   # (L, D) bf16
    L, D = x.shape
    scale = 1.0 / float(DH) ** 0.5

    # batched per-head projections: (H, L, D) x (H, D, DH) -> (H, L, DH)
    xb = jnp.broadcast_to(x[None, :, :], (H, L, D))
    q = jnp.einsum('hld,hde->hle', xb, wq_ref[...],
                   preferred_element_type=jnp.float32)
    k = jnp.einsum('hld,hde->hle', xb, wk_ref[...],
                   preferred_element_type=jnp.float32)
    v = jnp.einsum('hld,hde->hle', xb, wv_ref[...],
                   preferred_element_type=jnp.float32)

    # --- local causal softmax attention (heads batched) ---
    # scale folded into q (cheaper than scaling the (L, L) score matrix)
    qs = (q * scale).astype(jnp.bfloat16)
    s = jnp.einsum('hld,hmd->hlm', qs, k.astype(jnp.bfloat16),
                   preferred_element_type=jnp.float32)
    row = jax.lax.broadcasted_iota(jnp.int32, (H, L, L), 1)
    col = jax.lax.broadcasted_iota(jnp.int32, (H, L, L), 2)
    s = jnp.where(col <= row, s, -1e30)
    s = s - jnp.max(s, axis=-1, keepdims=True)
    p = jnp.exp(s)
    p = p * pl.reciprocal(jnp.sum(p, axis=-1, keepdims=True), approx=True)
    a_local = jnp.einsum('hlm,hmd->hld', p.astype(jnp.bfloat16),
                         v.astype(jnp.bfloat16),
                         preferred_element_type=jnp.float32)

    # --- compressive-memory retrieval, elu(.)+1 feature map (f32 state) ---
    sq = jnp.where(q > 0, q + 1.0, jnp.exp(q))               # (H, L, DH)
    m_in = m_ref[...]                                        # (H, DH, DH)
    z_in = z_ref[...]                                        # (H, DH)
    a_num = jnp.einsum('hld,hde->hle', sq, m_in,
                       preferred_element_type=jnp.float32)
    a_den = jnp.sum(sq * z_in[:, None, :], axis=-1, keepdims=True) + 1e-6
    a_mem = a_num * pl.reciprocal(a_den, approx=True)

    # --- learned gate combining memory and local attention ---
    g = jax.nn.sigmoid(gate_ref[...])                        # (H, 1, 1)
    out = g * a_mem + (1.0 - g) * a_local                    # (H, L, DH)

    # output projection (per-head Wo, batched) + residual
    proj = jnp.einsum('hle,hed->hld', out.astype(jnp.bfloat16), wo_ref[...],
                      preferred_element_type=jnp.float32)    # (H, L, D)
    y = x.astype(jnp.float32) + jnp.sum(proj, axis=0)
    y_ref[...] = y.astype(y_ref.dtype)

    # --- memory update: one store per tensor, all heads at once ---
    sk = jnp.where(k > 0, k + 1.0, jnp.exp(k))               # (H, L, DH)
    m_out_ref[...] = m_in + jnp.einsum('hld,hle->hde', sk, v,
                                       preferred_element_type=jnp.float32)
    z_out_ref[...] = z_in + jnp.sum(sk, axis=1)


def segment_attention(x_emb, params, m_in, z_in):
    B, L, D = x_emb.shape
    H, DH = m_in.shape[1], m_in.shape[3]

    out_shape = (
        jax.ShapeDtypeStruct((B, L, D), jnp.bfloat16),          # hidden y
        jax.ShapeDtypeStruct((B, H, DH, DH), jnp.float32),      # M
        jax.ShapeDtypeStruct((B, H, DH), jnp.float32),          # z
    )
    in_specs = [
        pl.BlockSpec((None, L, D), lambda b: (b, 0, 0)),        # x_emb (bf16)
        pl.BlockSpec((H, D, DH), lambda b: (0, 0, 0)),          # wq (bf16)
        pl.BlockSpec((H, D, DH), lambda b: (0, 0, 0)),          # wk
        pl.BlockSpec((H, D, DH), lambda b: (0, 0, 0)),          # wv
        pl.BlockSpec((H, DH, D), lambda b: (0, 0, 0)),          # wo
        pl.BlockSpec((H, 1, 1), lambda b: (0, 0, 0)),           # gate (f32)
        pl.BlockSpec((None, H, DH, DH), lambda b: (b, 0, 0, 0)),  # M in
        pl.BlockSpec((None, H, DH), lambda b: (b, 0, 0)),         # z in
    ]
    out_specs = (
        pl.BlockSpec((None, L, D), lambda b: (b, 0, 0)),
        pl.BlockSpec((None, H, DH, DH), lambda b: (b, 0, 0, 0)),
        pl.BlockSpec((None, H, DH), lambda b: (b, 0, 0)),
    )
    return pl.pallas_call(
        seg_attn_kernel,
        out_shape=out_shape,
        grid=(B,),
        in_specs=in_specs,
        out_specs=out_specs,
        compiler_params=pltpu.CompilerParams(
            dimension_semantics=("parallel",),
            vmem_limit_bytes=48 * 1024 * 1024),
    )(x_emb, params["wq"], params["wk"], params["wv"], params["wo"],
      params["gate"], m_in, z_in)


# ----------------------------------------------------------------------------
# Kernel 2: fused vocab projection + masked cross-entropy (per-token losses).
# grid = (row_tiles [parallel], vocab_tiles [arbitrary / reduction]).
# Online logsumexp over the vocab-tile axis; (B*L, V) logits never hit HBM.
# Each row tile writes its own (tr, 1) masked per-token losses at the last
# vocab step -> no shared scalar accumulator, rows shard across v7x cores.
# ----------------------------------------------------------------------------
def proj_ce_kernel(y_ref, wl_ref, lab_ref, loss_ref,
                   m_sc, l_sc, p_sc, *, ignore_index, tv):
    v = pl.program_id(1)

    @pl.when(v == 0)
    def _():
        m_sc[...] = jnp.full_like(m_sc, -jnp.inf)
        l_sc[...] = jnp.zeros_like(l_sc)
        p_sc[...] = jnp.zeros_like(p_sc)

    # (TR, D) bf16 @ (D, TV) bf16 -> (TR, TV) f32 logits tile (VMEM only)
    logits = jnp.dot(y_ref[...], wl_ref[...],
                     preferred_element_type=jnp.float32)
    labels = lab_ref[...]                                    # (TR, 1) int32

    # online logsumexp
    m_new = jnp.maximum(m_sc[...], jnp.max(logits, axis=-1, keepdims=True))
    alpha = jnp.exp(m_sc[...] - m_new)
    l_sc[...] = alpha * l_sc[...] + jnp.sum(jnp.exp(logits - m_new),
                                            axis=-1, keepdims=True)
    m_sc[...] = m_new

    # gather the label logit if it falls inside this vocab tile
    col = jax.lax.broadcasted_iota(jnp.int32, logits.shape, 1) + v * tv
    onehot = (col == labels).astype(jnp.float32)
    p_sc[...] = p_sc[...] + jnp.sum(logits * onehot, axis=-1, keepdims=True)

    @pl.when(v == pl.num_programs(1) - 1)
    def _():
        lse = m_sc[...] + jnp.log(l_sc[...])
        mask = (labels != ignore_index).astype(jnp.float32)
        loss_ref[...] = (lse - p_sc[...]) * mask


def _pick_tile(n, pref, align):
    """Largest divisor of n that is <= pref; fall back to the full dim if the
    divisor would violate the (8,128) block-shape alignment rule."""
    t = min(pref, n)
    while t > 1 and n % t != 0:
        t -= 1
    if t != n and t % align != 0:
        t = n
    return t


def projected_ce_sum(y, wl, labels, ignore_index, *, tile_rows=256, tile_v=512):
    B, L, D = y.shape
    V = wl.shape[-1]
    N = B * L
    y2 = y.reshape(N, D)
    lab2 = labels.reshape(N, 1).astype(jnp.int32)

    tr = _pick_tile(N, tile_rows, 8)
    tv = _pick_tile(V, tile_v, 128)

    kernel = functools.partial(proj_ce_kernel, ignore_index=ignore_index, tv=tv)
    per_tok = pl.pallas_call(
        kernel,
        out_shape=jax.ShapeDtypeStruct((N, 1), jnp.float32),
        grid=(N // tr, V // tv),
        in_specs=[
            pl.BlockSpec((tr, D), lambda r, v: (r, 0)),          # hidden (bf16)
            pl.BlockSpec((D, tv), lambda r, v: (0, v)),          # wl tile (bf16)
            pl.BlockSpec((tr, 1), lambda r, v: (r, 0)),          # labels
        ],
        out_specs=pl.BlockSpec((tr, 1), lambda r, v: (r, 0)),    # per-token loss
        scratch_shapes=[pltpu.VMEM((tr, 1), jnp.float32)] * 3,   # m, l, picked
        compiler_params=pltpu.CompilerParams(
            dimension_semantics=("parallel", "arbitrary"),
            vmem_limit_bytes=48 * 1024 * 1024),
    )(y2, wl, lab2)
    return jnp.sum(per_tok)


# ----------------------------------------------------------------------------
# Wrapper (mirrors InfiniTransformerWrapper.forward, forward-only)
# ----------------------------------------------------------------------------
class InfiniTransformerWrapperPallas:
    def __init__(self, params, *, segment_length=512,
                 detach_mems_every_num_segments=2, ignore_index=-1):
        self.params = params
        self.segment_length = segment_length
        self.detach_mems_every_num_segments = detach_mems_every_num_segments
        self.ignore_index = ignore_index

    def forward(self, seq):
        params = self.params
        H = params["gate"].shape[0]
        DH = params["wq"].shape[2]

        seq_in, labels = seq[:, :-1], seq[:, 1:]
        B = seq_in.shape[0]

        total_loss = jnp.zeros((), jnp.float32)
        past_memories = None

        # NOTE: the reference iterates `range(0, len(seq), segment_length)`,
        # i.e. the loop bound is the *batch* dimension while the slice is along
        # the sequence dim.  Reproduced exactly.
        for i in range(0, B, self.segment_length):
            segment_seq = seq_in[:, i:i + self.segment_length]
            segment_labels = labels[:, i:i + self.segment_length]

            if past_memories is None:
                m_in = jnp.zeros((B, H, DH, DH), jnp.float32)
                z_in = jnp.zeros((B, H, DH), jnp.float32)
            else:
                m_in, z_in = past_memories

            # TODO(synk): embedding gather kept as JAX glue (data-dependent
            # gather); could be fused via scalar-prefetch + pl.Element rows.
            x_emb = jnp.take(params["embed"], segment_seq,
                             axis=0).astype(jnp.bfloat16)

            y, m_new, z_new = segment_attention(x_emb, params, m_in, z_in)

            keep = ((i // self.segment_length + 1)
                    % self.detach_mems_every_num_segments != 0)
            # TODO(synk): reproduces the reference's `else None` memory reset;
            # a literal torch .detach() would keep the values (forward no-op).
            past_memories = (m_new, z_new) if keep else None

            # loss.item() * (labels != ignore).sum() == masked per-token sum,
            # computed by the fused projection + cross-entropy kernel.
            total_loss = total_loss + projected_ce_sum(
                y, params["wl"], segment_labels, self.ignore_index)

        total_count = jnp.sum(labels != self.ignore_index).astype(jnp.float32)
        return total_loss / total_count


def init_params(key, vocab, dim, heads, dim_head):
    ks = jax.random.split(key, 7)
    s = 0.02

    def per_head_qkv(w):  # (D, H*DH) -> (H, D, DH) bf16
        return jnp.transpose(w.reshape(dim, heads, dim_head),
                             (1, 0, 2)).astype(jnp.bfloat16)

    wq = jax.random.normal(ks[1], (dim, heads * dim_head), jnp.float32) * s
    wk = jax.random.normal(ks[2], (dim, heads * dim_head), jnp.float32) * s
    wv = jax.random.normal(ks[3], (dim, heads * dim_head), jnp.float32) * s
    wo = jax.random.normal(ks[4], (heads * dim_head, dim), jnp.float32) * s

    return {
        "embed": jax.random.normal(ks[0], (vocab, dim), jnp.float32) * s,
        "wq": per_head_qkv(wq),
        "wk": per_head_qkv(wk),
        "wv": per_head_qkv(wv),
        "wo": wo.reshape(heads, dim_head, dim).astype(jnp.bfloat16),
        "wl": (jax.random.normal(ks[5], (dim, vocab), jnp.float32)
               * s).astype(jnp.bfloat16),
        "gate": (jax.random.normal(ks[6], (1, heads), jnp.float32)
                 * s).reshape(heads, 1, 1),
    }


if __name__ == "__main__":
    # small shapes: batch=8, total seq=9 (-> 8 input / 8 label positions),
    # vocab=32, dim=32, heads=2, head_dim=16, segment_length=4 -> 2 segments.
    B, TOTAL, VOCAB, DIM, HEADS, DH = 8, 9, 32, 32, 2, 16
    SEG_LEN = 4

    key = jax.random.PRNGKey(0)
    k_seq, k_params = jax.random.split(key)

    seq = jax.random.randint(k_seq, (B, TOTAL), 0, VOCAB, dtype=jnp.int32)
    # mark the last token of the first two rows as ignored labels
    seq = seq.at[:2, -1].set(-1)

    params = init_params(k_params, VOCAB, DIM, HEADS, DH)

    wrapper = InfiniTransformerWrapperPallas(
        params, segment_length=SEG_LEN,
        detach_mems_every_num_segments=2, ignore_index=-1)

    loss = jax.jit(wrapper.forward)(seq)
    loss = jax.block_until_ready(loss)
    assert jnp.isfinite(loss)
    print("KERNEL_OK")
</pallas_src>

<mosaic_0001>
module attributes {stable_mosaic.version = 11 : i64} {
  func.func @seg_attn_kernel(%arg0: i32, %arg1: memref<1x4x32xbf16, #tpu.memory_space<vmem>>, %arg2: memref<2x32x16xbf16, #tpu.memory_space<vmem>>, %arg3: memref<2x32x16xbf16, #tpu.memory_space<vmem>>, %arg4: memref<2x32x16xbf16, #tpu.memory_space<vmem>>, %arg5: memref<2x16x32xbf16, #tpu.memory_space<vmem>>, %arg6: memref<2x1x1xf32, #tpu.memory_space<vmem>>, %arg7: memref<1x2x16x16xf32, #tpu.memory_space<vmem>>, %arg8: memref<1x2x16xf32, #tpu.memory_space<vmem>>, %arg9: memref<1x4x32xbf16, #tpu.memory_space<vmem>>, %arg10: memref<1x2x16x16xf32, #tpu.memory_space<vmem>>, %arg11: memref<1x2x16xf32, #tpu.memory_space<vmem>>) attributes {dimension_semantics = [#tpu.dimension_semantics<parallel>], iteration_bounds = array<i64: 8>, scalar_prefetch = 0 : i64, scratch_operands = 0 : i64, tpu.core_type = #tpu.core_type<tc>, window_params = [{transform_indices = @transform_0, window_bounds = array<i64: 1, 4, 32>}, {pipeline_mode = #tpu.pipeline_mode<synchronous>, transform_indices = @transform_1, window_bounds = array<i64: 2, 32, 16>}, {pipeline_mode = #tpu.pipeline_mode<synchronous>, transform_indices = @transform_2, window_bounds = array<i64: 2, 32, 16>}, {pipeline_mode = #tpu.pipeline_mode<synchronous>, transform_indices = @transform_3, window_bounds = array<i64: 2, 32, 16>}, {pipeline_mode = #tpu.pipeline_mode<synchronous>, transform_indices = @transform_4, window_bounds = array<i64: 2, 16, 32>}, {pipeline_mode = #tpu.pipeline_mode<synchronous>, transform_indices = @transform_5, window_bounds = array<i64: 2, 1, 1>}, {transform_indices = @transform_6, window_bounds = array<i64: 1, 2, 16, 16>}, {transform_indices = @transform_7, window_bounds = array<i64: 1, 2, 16>}, {transform_indices = @transform_8, window_bounds = array<i64: 1, 4, 32>}, {transform_indices = @transform_9, window_bounds = array<i64: 1, 2, 16, 16>}, {transform_indices = @transform_10, window_bounds = array<i64: 1, 2, 16>}]} {
    %c0 = arith.constant 0 : index
    %c0_0 = arith.constant 0 : index
    %c0_1 = arith.constant 0 : index
    %0 = vector.load %arg1[%c0, %c0_0, %c0_1] : memref<1x4x32xbf16, #tpu.memory_space<vmem>>, vector<1x4x32xbf16>
    %1 = vector.shape_cast %0 : vector<1x4x32xbf16> to vector<4x32xbf16>
    %2 = vector.shape_cast %1 : vector<4x32xbf16> to vector<1x4x32xbf16>
    %3 = vector.shape_cast %2 : vector<1x4x32xbf16> to vector<1x4x32xbf16>
    %4 = vector.broadcast %3 : vector<1x4x32xbf16> to vector<2x4x32xbf16>
    %c0_2 = arith.constant 0 : index
    %c0_3 = arith.constant 0 : index
    %c0_4 = arith.constant 0 : index
    %5 = vector.load %arg2[%c0_2, %c0_3, %c0_4] : memref<2x32x16xbf16, #tpu.memory_space<vmem>>, vector<2x32x16xbf16>
    "tpu.trace_start"() <{level = 10 : i32, message = "hld,hde->hle"}> : () -> ()
    %cst = arith.constant dense<0.000000e+00> : vector<2x4x16xf32>
    %6 = tpu.matmul %4, %5, %cst {dimension_numbers = #tpu.dot_dimension_numbers<[2], [1], [1], [2], [0, 0, 0, 1, 1, 2], [0], [0]>} : vector<2x4x32xbf16>, vector<2x32x16xbf16>, vector<2x4x16xf32> -> vector<2x4x16xf32>
    "tpu.trace_stop"() : () -> ()
    %c0_5 = arith.constant 0 : index
    %c0_6 = arith.constant 0 : index
    %c0_7 = arith.constant 0 : index
    %7 = vector.load %arg3[%c0_5, %c0_6, %c0_7] : memref<2x32x16xbf16, #tpu.memory_space<vmem>>, vector<2x32x16xbf16>
    "tpu.trace_start"() <{level = 10 : i32, message = "hld,hde->hle"}> : () -> ()
    %cst_8 = arith.constant dense<0.000000e+00> : vector<2x4x16xf32>
    %8 = tpu.matmul %4, %7, %cst_8 {dimension_numbers = #tpu.dot_dimension_numbers<[2], [1], [1], [2], [0, 0, 0, 1, 1, 2], [0], [0]>} : vector<2x4x32xbf16>, vector<2x32x16xbf16>, vector<2x4x16xf32> -> vector<2x4x16xf32>
    "tpu.trace_stop"() : () -> ()
    %c0_9 = arith.constant 0 : index
    %c0_10 = arith.constant 0 : index
    %c0_11 = arith.constant 0 : index
    %9 = vector.load %arg4[%c0_9, %c0_10, %c0_11] : memref<2x32x16xbf16, #tpu.memory_space<vmem>>, vector<2x32x16xbf16>
    "tpu.trace_start"() <{level = 10 : i32, message = "hld,hde->hle"}> : () -> ()
    %cst_12 = arith.constant dense<0.000000e+00> : vector<2x4x16xf32>
    %10 = tpu.matmul %4, %9, %cst_12 {dimension_numbers = #tpu.dot_dimension_numbers<[2], [1], [1], [2], [0, 0, 0, 1, 1, 2], [0], [0]>} : vector<2x4x32xbf16>, vector<2x32x16xbf16>, vector<2x4x16xf32> -> vector<2x4x16xf32>
    "tpu.trace_stop"() : () -> ()
    %cst_13 = arith.constant 2.500000e-01 : f32
    %11 = vector.broadcast %cst_13 : f32 to vector<2x4x16xf32>
    %12 = arith.mulf %6, %11 : vector<2x4x16xf32>
    %13 = arith.truncf %12 : vector<2x4x16xf32> to vector<2x4x16xbf16>
    %14 = arith.truncf %8 : vector<2x4x16xf32> to vector<2x4x16xbf16>
    "tpu.trace_start"() <{level = 10 : i32, message = "hld,hmd->hlm"}> : () -> ()
    %cst_14 = arith.constant dense<0.000000e+00> : vector<2x4x4xf32>
    %15 = tpu.matmul %13, %14, %cst_14 {dimension_numbers = #tpu.dot_dimension_numbers<[2], [2], [1], [1], [0, 0, 0, 1, 1, 1], [0], [0]>} : vector<2x4x16xbf16>, vector<2x4x16xbf16>, vector<2x4x4xf32> -> vector<2x4x4xf32>
    "tpu.trace_stop"() : () -> ()
    %16 = tpu.iota {dimensions = array<i32: 1>} : vector<2x4x4xi32>
    %17 = tpu.iota {dimensions = array<i32: 2>} : vector<2x4x4xi32>
    %18 = arith.cmpi sle, %17, %16 : vector<2x4x4xi32>
    %cst_15 = arith.constant -1.000000e+30 : f32
    %19 = vector.broadcast %cst_15 : f32 to vector<2x4x4xf32>
    %20 = arith.select %18, %15, %19 : vector<2x4x4xi1>, vector<2x4x4xf32>
    %cst_16 = arith.constant dense<0xFF800000> : vector<2x4xf32>
    %21 = vector.multi_reduction <maximumf>, %20, %cst_16 [2] : vector<2x4x4xf32> to vector<2x4xf32>
    %22 = vector.shape_cast %21 : vector<2x4xf32> to vector<2x4x1xf32>
    %23 = vector.broadcast %22 : vector<2x4x1xf32> to vector<2x4x4xf32>
    %24 = arith.subf %20, %23 : vector<2x4x4xf32>
    %25 = math.exp %24 : vector<2x4x4xf32>
    %cst_17 = arith.constant dense<0.000000e+00> : vector<2x4xf32>
    %26 = vector.multi_reduction <add>, %25, %cst_17 [2] : vector<2x4x4xf32> to vector<2x4xf32>
    %27 = vector.shape_cast %26 : vector<2x4xf32> to vector<2x4x1xf32>
    %28 = tpu.reciprocal %27 {approx = true} : vector<2x4x1xf32> -> vector<2x4x1xf32>
    %29 = vector.broadcast %28 : vector<2x4x1xf32> to vector<2x4x4xf32>
    %30 = arith.mulf %25, %29 : vector<2x4x4xf32>
    %31 = arith.truncf %30 : vector<2x4x4xf32> to vector<2x4x4xbf16>
    %32 = arith.truncf %10 : vector<2x4x16xf32> to vector<2x4x16xbf16>
    "tpu.trace_start"() <{level = 10 : i32, message = "hlm,hmd->hld"}> : () -> ()
    %cst_18 = arith.constant dense<0.000000e+00> : vector<2x4x16xf32>
    %33 = tpu.matmul %31, %32, %cst_18 {dimension_numbers = #tpu.dot_dimension_numbers<[2], [1], [1], [2], [0, 0, 0, 1, 1, 2], [0], [0]>} : vector<2x4x4xbf16>, vector<2x4x16xbf16>, vector<2x4x16xf32> -> vector<2x4x16xf32>
    %cst_19 = arith.constant 0.000000e+00 : f32
    "tpu.trace_stop"() : () -> ()
    %34 = vector.broadcast %cst_19 : f32 to vector<2x4x16xf32>
    %35 = arith.cmpf ogt, %6, %34 : vector<2x4x16xf32>
    %cst_20 = arith.constant 1.000000e+00 : f32
    %36 = vector.broadcast %cst_20 : f32 to vector<2x4x16xf32>
    %37 = arith.addf %6, %36 : vector<2x4x16xf32>
    %38 = math.exp %6 : vector<2x4x16xf32>
    %39 = arith.select %35, %37, %38 : vector<2x4x16xi1>, vector<2x4x16xf32>
    %c0_21 = arith.constant 0 : index
    %c0_22 = arith.constant 0 : index
    %c0_23 = arith.constant 0 : index
    %c0_24 = arith.constant 0 : index
    %40 = vector.load %arg7[%c0_21, %c0_22, %c0_23, %c0_24] : memref<1x2x16x16xf32, #tpu.memory_space<vmem>>, vector<1x2x16x16xf32>
    %41 = vector.shape_cast %40 : vector<1x2x16x16xf32> to vector<2x16x16xf32>
    %c0_25 = arith.constant 0 : index
    %c0_26 = arith.constant 0 : index
    %c0_27 = arith.constant 0 : index
    %42 = vector.load %arg8[%c0_25, %c0_26, %c0_27] : memref<1x2x16xf32, #tpu.memory_space<vmem>>, vector<1x2x16xf32>
    %43 = vector.shape_cast %42 : vector<1x2x16xf32> to vector<2x16xf32>
    "tpu.trace_start"() <{level = 10 : i32, message = "hld,hde->hle"}> : () -> ()
    %cst_28 = arith.constant dense<0.000000e+00> : vector<2x4x16xf32>
    %44 = tpu.matmul %39, %41, %cst_28 {dimension_numbers = #tpu.dot_dimension_numbers<[2], [1], [1], [2], [0, 0, 0, 1, 1, 2], [0], [0]>} : vector<2x4x16xf32>, vector<2x16x16xf32>, vector<2x4x16xf32> -> vector<2x4x16xf32>
    "tpu.trace_stop"() : () -> ()
    %45 = vector.shape_cast %43 : vector<2x16xf32> to vector<2x1x16xf32>
    %46 = vector.broadcast %45 : vector<2x1x16xf32> to vector<2x4x16xf32>
    %47 = arith.mulf %39, %46 : vector<2x4x16xf32>
    %cst_29 = arith.constant dense<0.000000e+00> : vector<2x4xf32>
    %48 = vector.multi_reduction <add>, %47, %cst_29 [2] : vector<2x4x16xf32> to vector<2x4xf32>
    %49 = vector.shape_cast %48 : vector<2x4xf32> to vector<2x4x1xf32>
    %cst_30 = arith.constant 9.99999997E-7 : f32
    %50 = vector.broadcast %cst_30 : f32 to vector<2x4x1xf32>
    %51 = arith.addf %49, %50 : vector<2x4x1xf32>
    %52 = tpu.reciprocal %51 {approx = true} : vector<2x4x1xf32> -> vector<2x4x1xf32>
    %53 = vector.broadcast %52 : vector<2x4x1xf32> to vector<2x4x16xf32>
    %54 = arith.mulf %44, %53 : vector<2x4x16xf32>
    %c0_31 = arith.constant 0 : index
    %c0_32 = arith.constant 0 : index
    %c0_33 = arith.constant 0 : index
    %55 = vector.load %arg6[%c0_31, %c0_32, %c0_33] : memref<2x1x1xf32, #tpu.memory_space<vmem>>, vector<2x1x1xf32>
    %56 = arith.negf %55 : vector<2x1x1xf32>
    %57 = math.exp %56 : vector<2x1x1xf32>
    %cst_34 = arith.constant 1.000000e+00 : f32
    %58 = vector.broadcast %cst_34 : f32 to vector<2x1x1xf32>
    %59 = arith.addf %58, %57 : vector<2x1x1xf32>
    %60 = arith.divf %58, %59 : vector<2x1x1xf32>
    %61 = vector.broadcast %60 : vector<2x1x1xf32> to vector<2x4x16xf32>
    %62 = arith.mulf %61, %54 : vector<2x4x16xf32>
    %cst_35 = arith.constant 1.000000e+00 : f32
    %63 = vector.broadcast %cst_35 : f32 to vector<2x1x1xf32>
    %64 = arith.subf %63, %60 : vector<2x1x1xf32>
    %65 = vector.broadcast %64 : vector<2x1x1xf32> to vector<2x4x16xf32>
    %66 = arith.mulf %65, %33 : vector<2x4x16xf32>
    %67 = arith.addf %62, %66 : vector<2x4x16xf32>
    %68 = arith.truncf %67 : vector<2x4x16xf32> to vector<2x4x16xbf16>
    %c0_36 = arith.constant 0 : index
    %c0_37 = arith.constant 0 : index
    %c0_38 = arith.constant 0 : index
    %69 = vector.load %arg5[%c0_36, %c0_37, %c0_38] : memref<2x16x32xbf16, #tpu.memory_space<vmem>>, vector<2x16x32xbf16>
    "tpu.trace_start"() <{level = 10 : i32, message = "hle,hed->hld"}> : () -> ()
    %cst_39 = arith.constant dense<0.000000e+00> : vector<2x4x32xf32>
    %70 = tpu.matmul %68, %69, %cst_39 {dimension_numbers = #tpu.dot_dimension_numbers<[2], [1], [1], [2], [0, 0, 0, 1, 1, 2], [0], [0]>} : vector<2x4x16xbf16>, vector<2x16x32xbf16>, vector<2x4x32xf32> -> vector<2x4x32xf32>
    "tpu.trace_stop"() : () -> ()
    %71 = arith.extf %1 : vector<4x32xbf16> to vector<4x32xf32>
    %cst_40 = arith.constant dense<0.000000e+00> : vector<4x32xf32>
    %72 = vector.multi_reduction <add>, %70, %cst_40 [0] : vector<2x4x32xf32> to vector<4x32xf32>
    %73 = arith.addf %71, %72 : vector<4x32xf32>
    %74 = arith.truncf %73 : vector<4x32xf32> to vector<4x32xbf16>
    %c0_41 = arith.constant 0 : index
    %c0_42 = arith.constant 0 : index
    %c0_43 = arith.constant 0 : index
    %75 = vector.load %arg9[%c0_41, %c0_42, %c0_43] : memref<1x4x32xbf16, #tpu.memory_space<vmem>>, vector<1x4x32xbf16>
    %76 = vector.shape_cast %75 : vector<1x4x32xbf16> to vector<4x32xbf16>
    %77 = vector.shape_cast %74 : vector<4x32xbf16> to vector<1x4x32xbf16>
    tpu.vector_store %arg9[%c0_41, %c0_42, %c0_43], %77 {strides = array<i32>} : memref<1x4x32xbf16, #tpu.memory_space<vmem>>, vector<1x4x32xbf16>,
    %cst_44 = arith.constant 0.000000e+00 : f32
    %78 = vector.broadcast %cst_44 : f32 to vector<2x4x16xf32>
    %79 = arith.cmpf ogt, %8, %78 : vector<2x4x16xf32>
    %cst_45 = arith.constant 1.000000e+00 : f32
    %80 = vector.broadcast %cst_45 : f32 to vector<2x4x16xf32>
    %81 = arith.addf %8, %80 : vector<2x4x16xf32>
    %82 = math.exp %8 : vector<2x4x16xf32>
    %83 = arith.select %79, %81, %82 : vector<2x4x16xi1>, vector<2x4x16xf32>
    "tpu.trace_start"() <{level = 10 : i32, message = "hld,hle->hde"}> : () -> ()
    %cst_46 = arith.constant dense<0.000000e+00> : vector<2x16x16xf32>
    %84 = tpu.matmul %83, %10, %cst_46 {dimension_numbers = #tpu.dot_dimension_numbers<[1], [1], [2], [2], [0, 0, 0, 2, 1, 2], [0], [0]>} : vector<2x4x16xf32>, vector<2x4x16xf32>, vector<2x16x16xf32> -> vector<2x16x16xf32>
    "tpu.trace_stop"() : () -> ()
    %85 = arith.addf %41, %84 : vector<2x16x16xf32>
    %c0_47 = arith.constant 0 : index
    %c0_48 = arith.constant 0 : index
    %c0_49 = arith.constant 0 : index
    %c0_50 = arith.constant 0 : index
    %86 = vector.load %arg10[%c0_47, %c0_48, %c0_49, %c0_50] : memref<1x2x16x16xf32, #tpu.memory_space<vmem>>, vector<1x2x16x16xf32>
    %87 = vector.shape_cast %86 : vector<1x2x16x16xf32> to vector<2x16x16xf32>
    %88 = vector.shape_cast %85 : vector<2x16x16xf32> to vector<1x2x16x16xf32>
    tpu.vector_store %arg10[%c0_47, %c0_48, %c0_49, %c0_50], %88 {strides = array<i32>} : memref<1x2x16x16xf32, #tpu.memory_space<vmem>>, vector<1x2x16x16xf32>,
    %cst_51 = arith.constant dense<0.000000e+00> : vector<2x16xf32>
    %89 = vector.multi_reduction <add>, %83, %cst_51 [1] : vector<2x4x16xf32> to vector<2x16xf32>
    %90 = arith.addf %43, %89 : vector<2x16xf32>
    %c0_52 = arith.constant 0 : index
    %c0_53 = arith.constant 0 : index
    %c0_54 = arith.constant 0 : index
    %91 = vector.load %arg11[%c0_52, %c0_53, %c0_54] : memref<1x2x16xf32, #tpu.memory_space<vmem>>, vector<1x2x16xf32>
    %92 = vector.shape_cast %91 : vector<1x2x16xf32> to vector<2x16xf32>
    %93 = vector.shape_cast %90 : vector<2x16xf32> to vector<1x2x16xf32>
    tpu.vector_store %arg11[%c0_52, %c0_53, %c0_54], %93 {strides = array<i32>} : memref<1x2x16xf32, #tpu.memory_space<vmem>>, vector<1x2x16xf32>,
    return
  }
  func.func @transform_0(%arg0: i32) -> (i32, i32, i32) {
    %c0_i32 = arith.constant 0 : i32
    %c0_i32_0 = arith.constant 0 : i32
    %c0_i32_1 = arith.constant 0 : i32
    return %arg0, %c0_i32, %c0_i32_0 : i32, i32, i32
  }
  func.func @transform_1(%arg0: i32) -> (i32, i32, i32) {
    %c0_i32 = arith.constant 0 : i32
    %c0_i32_0 = arith.constant 0 : i32
    %c0_i32_1 = arith.constant 0 : i32
    %c0_i32_2 = arith.constant 0 : i32
    return %c0_i32, %c0_i32_0, %c0_i32_1 : i32, i32, i32
  }
  func.func @transform_2(%arg0: i32) -> (i32, i32, i32) {
    %c0_i32 = arith.constant 0 : i32
    %c0_i32_0 = arith.constant 0 : i32
    %c0_i32_1 = arith.constant 0 : i32
    %c0_i32_2 = arith.constant 0 : i32
    return %c0_i32, %c0_i32_0, %c0_i32_1 : i32, i32, i32
  }
  func.func @transform_3(%arg0: i32) -> (i32, i32, i32) {
    %c0_i32 = arith.constant 0 : i32
    %c0_i32_0 = arith.constant 0 : i32
    %c0_i32_1 = arith.constant 0 : i32
    %c0_i32_2 = arith.constant 0 : i32
    return %c0_i32, %c0_i32_0, %c0_i32_1 : i32, i32, i32
  }
  func.func @transform_4(%arg0: i32) -> (i32, i32, i32) {
    %c0_i32 = arith.constant 0 : i32
    %c0_i32_0 = arith.constant 0 : i32
    %c0_i32_1 = arith.constant 0 : i32
    %c0_i32_2 = arith.constant 0 : i32
    return %c0_i32, %c0_i32_0, %c0_i32_1 : i32, i32, i32
  }
  func.func @transform_5(%arg0: i32) -> (i32, i32, i32) {
    %c0_i32 = arith.constant 0 : i32
    %c0_i32_0 = arith.constant 0 : i32
    %c0_i32_1 = arith.constant 0 : i32
    %c0_i32_2 = arith.constant 0 : i32
    return %c0_i32, %c0_i32_0, %c0_i32_1 : i32, i32, i32
  }
  func.func @transform_6(%arg0: i32) -> (i32, i32, i32, i32) {
    %c0_i32 = arith.constant 0 : i32
    %c0_i32_0 = arith.constant 0 : i32
    %c0_i32_1 = arith.constant 0 : i32
    %c0_i32_2 = arith.constant 0 : i32
    return %arg0, %c0_i32, %c0_i32_0, %c0_i32_1 : i32, i32, i32, i32
  }
  func.func @transform_7(%arg0: i32) -> (i32, i32, i32) {
    %c0_i32 = arith.constant 0 : i32
    %c0_i32_0 = arith.constant 0 : i32
    %c0_i32_1 = arith.constant 0 : i32
    return %arg0, %c0_i32, %c0_i32_0 : i32, i32, i32
  }
  func.func @transform_8(%arg0: i32) -> (i32, i32, i32) {
    %c0_i32 = arith.constant 0 : i32
    %c0_i32_0 = arith.constant 0 : i32
    %c0_i32_1 = arith.constant 0 : i32
    return %arg0, %c0_i32, %c0_i32_0 : i32, i32, i32
  }
  func.func @transform_9(%arg0: i32) -> (i32, i32, i32, i32) {
    %c0_i32 = arith.constant 0 : i32
    %c0_i32_0 = arith.constant 0 : i32
    %c0_i32_1 = arith.constant 0 : i32
    %c0_i32_2 = arith.constant 0 : i32
    return %arg0, %c0_i32, %c0_i32_0, %c0_i32_1 : i32, i32, i32, i32
  }
  func.func @transform_10(%arg0: i32) -> (i32, i32, i32) {
    %c0_i32 = arith.constant 0 : i32
    %c0_i32_0 = arith.constant 0 : i32
    %c0_i32_1 = arith.constant 0 : i32
    return %arg0, %c0_i32, %c0_i32_0 : i32, i32, i32
  }
}

module attributes {stable_mosaic.version = 11 : i64} {
  func.func @proj_ce_kernel(%arg0: i32, %arg1: i32, %arg2: memref<32x32xbf16, #tpu.memory_space<vmem>>, %arg3: memref<32x32xbf16, #tpu.memory_space<vmem>>, %arg4: memref<32x1xi32, #tpu.memory_space<vmem>>, %arg5: memref<32x1xf32, #tpu.memory_space<vmem>>, %arg6: memref<32x1xf32, #tpu.memory_space<vmem>>, %arg7: memref<32x1xf32, #tpu.memory_space<vmem>>, %arg8: memref<32x1xf32, #tpu.memory_space<vmem>>) attributes {dimension_semantics = [#tpu.dimension_semantics<parallel>, #tpu.dimension_semantics<arbitrary>], iteration_bounds = array<i64: 1, 1>, scalar_prefetch = 0 : i64, scratch_operands = 3 : i64, tpu.core_type = #tpu.core_type<tc>, window_params = [{transform_indices = @transform_0, window_bounds = array<i64: 32, 32>}, {transform_indices = @transform_1, window_bounds = array<i64: 32, 32>}, {transform_indices = @transform_2, window_bounds = array<i64: 32, 1>}, {transform_indices = @transform_3, window_bounds = array<i64: 32, 1>}]} {
    %c0_i32 = arith.constant 0 : i32
    %0 = arith.cmpi eq, %arg1, %c0_i32 : i32
    %1 = arith.extui %0 : i1 to i32
    %c0_i32_0 = arith.constant 0 : i32
    %2 = arith.cmpi ne, %1, %c0_i32_0 : i32
    scf.if %2 {
      %cst_25 = arith.constant 0xFF800000 : f32
      %41 = vector.broadcast %cst_25 : f32 to vector<32x1xf32>
      %c0_26 = arith.constant 0 : index
      %c0_27 = arith.constant 0 : index
      %42 = vector.load %arg6[%c0_26, %c0_27] : memref<32x1xf32, #tpu.memory_space<vmem>>, vector<32x1xf32>
      tpu.vector_store %arg6[%c0_26, %c0_27], %41 {strides = array<i32>} : memref<32x1xf32, #tpu.memory_space<vmem>>, vector<32x1xf32>,
      %cst_28 = arith.constant 0.000000e+00 : f32
      %43 = vector.broadcast %cst_28 : f32 to vector<32x1xf32>
      %c0_29 = arith.constant 0 : index
      %c0_30 = arith.constant 0 : index
      %44 = vector.load %arg7[%c0_29, %c0_30] : memref<32x1xf32, #tpu.memory_space<vmem>>, vector<32x1xf32>
      tpu.vector_store %arg7[%c0_29, %c0_30], %43 {strides = array<i32>} : memref<32x1xf32, #tpu.memory_space<vmem>>, vector<32x1xf32>,
      %cst_31 = arith.constant 0.000000e+00 : f32
      %45 = vector.broadcast %cst_31 : f32 to vector<32x1xf32>
      %c0_32 = arith.constant 0 : index
      %c0_33 = arith.constant 0 : index
      %46 = vector.load %arg8[%c0_32, %c0_33] : memref<32x1xf32, #tpu.memory_space<vmem>>, vector<32x1xf32>
      tpu.vector_store %arg8[%c0_32, %c0_33], %45 {strides = array<i32>} : memref<32x1xf32, #tpu.memory_space<vmem>>, vector<32x1xf32>,
    } else {
    }
    %c0 = arith.constant 0 : index
    %c0_1 = arith.constant 0 : index
    %3 = vector.load %arg2[%c0, %c0_1] : memref<32x32xbf16, #tpu.memory_space<vmem>>, vector<32x32xbf16>
    %c0_2 = arith.constant 0 : index
    %c0_3 = arith.constant 0 : index
    %4 = vector.load %arg3[%c0_2, %c0_3] : memref<32x32xbf16, #tpu.memory_space<vmem>>, vector<32x32xbf16>
    %cst = arith.constant dense<0.000000e+00> : vector<32x32xf32>
    %5 = tpu.matmul %3, %4, %cst {dimension_numbers = #tpu.dot_dimension_numbers<[1], [0], [0], [1], [0, 0, 1, 1], [], []>} : vector<32x32xbf16>, vector<32x32xbf16>, vector<32x32xf32> -> vector<32x32xf32>
    %c0_4 = arith.constant 0 : index
    %c0_5 = arith.constant 0 : index
    %6 = vector.load %arg4[%c0_4, %c0_5] : memref<32x1xi32, #tpu.memory_space<vmem>>, vector<32x1xi32>
    %c0_6 = arith.constant 0 : index
    %c0_7 = arith.constant 0 : index
    %7 = vector.load %arg6[%c0_6, %c0_7] : memref<32x1xf32, #tpu.memory_space<vmem>>, vector<32x1xf32>
    %cst_8 = arith.constant dense<0xFF800000> : vector<32xf32>
    %8 = vector.multi_reduction <maximumf>, %5, %cst_8 [1] : vector<32x32xf32> to vector<32xf32>
    %9 = vector.shape_cast %8 : vector<32xf32> to vector<32x1xf32>
    %10 = arith.maximumf %7, %9 : vector<32x1xf32>
    %c0_9 = arith.constant 0 : index
    %c0_10 = arith.constant 0 : index
    %11 = vector.load %arg6[%c0_9, %c0_10] : memref<32x1xf32, #tpu.memory_space<vmem>>, vector<32x1xf32>
    %12 = arith.subf %11, %10 : vector<32x1xf32>
    %13 = math.exp %12 : vector<32x1xf32>
    %c0_11 = arith.constant 0 : index
    %c0_12 = arith.constant 0 : index
    %14 = vector.load %arg7[%c0_11, %c0_12] : memref<32x1xf32, #tpu.memory_space<vmem>>, vector<32x1xf32>
    %15 = arith.mulf %13, %14 : vector<32x1xf32>
    %16 = vector.broadcast %10 : vector<32x1xf32> to vector<32x32xf32>
    %17 = arith.subf %5, %16 : vector<32x32xf32>
    %18 = math.exp %17 : vector<32x32xf32>
    %cst_13 = arith.constant dense<0.000000e+00> : vector<32xf32>
    %19 = vector.multi_reduction <add>, %18, %cst_13 [1] : vector<32x32xf32> to vector<32xf32>
    %20 = vector.shape_cast %19 : vector<32xf32> to vector<32x1xf32>
    %21 = arith.addf %15, %20 : vector<32x1xf32>
    %c0_14 = arith.constant 0 : index
    %c0_15 = arith.constant 0 : index
    %22 = vector.load %arg7[%c0_14, %c0_15] : memref<32x1xf32, #tpu.memory_space<vmem>>, vector<32x1xf32>
    tpu.vector_store %arg7[%c0_14, %c0_15], %21 {strides = array<i32>} : memref<32x1xf32, #tpu.memory_space<vmem>>, vector<32x1xf32>,
    %c0_16 = arith.constant 0 : index
    %c0_17 = arith.constant 0 : index
    %23 = vector.load %arg6[%c0_16, %c0_17] : memref<32x1xf32, #tpu.memory_space<vmem>>, vector<32x1xf32>
    tpu.vector_store %arg6[%c0_16, %c0_17], %10 {strides = array<i32>} : memref<32x1xf32, #tpu.memory_space<vmem>>, vector<32x1xf32>,
    %24 = tpu.iota {dimensions = array<i32: 1>} : vector<32x32xi32>
    %c32_i32 = arith.constant 32 : i32
    %25 = arith.muli %arg1, %c32_i32 : i32
    %26 = vector.broadcast %25 : i32 to vector<32x32xi32>
    %27 = arith.addi %24, %26 : vector<32x32xi32>
    %28 = vector.broadcast %6 : vector<32x1xi32> to vector<32x32xi32>
    %29 = arith.cmpi eq, %27, %28 : vector<32x32xi32>
    %30 = arith.extui %29 : vector<32x32xi1> to vector<32x32xi32>
    %31 = arith.sitofp %30 : vector<32x32xi32> to vector<32x32xf32>
    %c0_18 = arith.constant 0 : index
    %c0_19 = arith.constant 0 : index
    %32 = vector.load %arg8[%c0_18, %c0_19] : memref<32x1xf32, #tpu.memory_space<vmem>>, vector<32x1xf32>
    %33 = arith.mulf %5, %31 : vector<32x32xf32>
    %cst_20 = arith.constant dense<0.000000e+00> : vector<32xf32>
    %34 = vector.multi_reduction <add>, %33, %cst_20 [1] : vector<32x32xf32> to vector<32xf32>
    %35 = vector.shape_cast %34 : vector<32xf32> to vector<32x1xf32>
    %36 = arith.addf %32, %35 : vector<32x1xf32>
    %c0_21 = arith.constant 0 : index
    %c0_22 = arith.constant 0 : index
    %37 = vector.load %arg8[%c0_21, %c0_22] : memref<32x1xf32, #tpu.memory_space<vmem>>, vector<32x1xf32>
    tpu.vector_store %arg8[%c0_21, %c0_22], %36 {strides = array<i32>} : memref<32x1xf32, #tpu.memory_space<vmem>>, vector<32x1xf32>,
    %c0_i32_23 = arith.constant 0 : i32
    %38 = arith.cmpi eq, %arg1, %c0_i32_23 : i32
    %39 = arith.extui %38 : i1 to i32
    %c0_i32_24 = arith.constant 0 : i32
    %40 = arith.cmpi ne, %39, %c0_i32_24 : i32
    scf.if %40 {
      %c0_25 = arith.constant 0 : index
      %c0_26 = arith.constant 0 : index
      %41 = vector.load %arg6[%c0_25, %c0_26] : memref<32x1xf32, #tpu.memory_space<vmem>>, vector<32x1xf32>
      %c0_27 = arith.constant 0 : index
      %c0_28 = arith.constant 0 : index
      %42 = vector.load %arg7[%c0_27, %c0_28] : memref<32x1xf32, #tpu.memory_space<vmem>>, vector<32x1xf32>
      %43 = math.log %42 : vector<32x1xf32>
      %44 = arith.addf %41, %43 : vector<32x1xf32>
      %c-1_i32 = arith.constant -1 : i32
      %45 = vector.broadcast %c-1_i32 : i32 to vector<32x1xi32>
      %46 = arith.cmpi ne, %6, %45 : vector<32x1xi32>
      %47 = arith.extui %46 : vector<32x1xi1> to vector<32x1xi32>
      %48 = arith.sitofp %47 : vector<32x1xi32> to vector<32x1xf32>
      %c0_29 = arith.constant 0 : index
      %c0_30 = arith.constant 0 : index
      %49 = vector.load %arg8[%c0_29, %c0_30] : memref<32x1xf32, #tpu.memory_space<vmem>>, vector<32x1xf32>
      %50 = arith.subf %44, %49 : vector<32x1xf32>
      %51 = arith.mulf %50, %48 : vector<32x1xf32>
      %c0_31 = arith.constant 0 : index
      %c0_32 = arith.constant 0 : index
      %52 = vector.load %arg5[%c0_31, %c0_32] : memref<32x1xf32, #tpu.memory_space<vmem>>, vector<32x1xf32>
      tpu.vector_store %arg5[%c0_31, %c0_32], %51 {strides = array<i32>} : memref<32x1xf32, #tpu.memory_space<vmem>>, vector<32x1xf32>,
    } else {
    }
    return
  }
  func.func @transform_0(%arg0: i32, %arg1: i32) -> (i32, i32) {
    %c0_i32 = arith.constant 0 : i32
    %c0_i32_0 = arith.constant 0 : i32
    return %arg0, %c0_i32 : i32, i32
  }
  func.func @transform_1(%arg0: i32, %arg1: i32) -> (i32, i32) {
    %c0_i32 = arith.constant 0 : i32
    %c0_i32_0 = arith.constant 0 : i32
    return %c0_i32, %arg1 : i32, i32
  }
  func.func @transform_2(%arg0: i32, %arg1: i32) -> (i32, i32) {
    %c0_i32 = arith.constant 0 : i32
    %c0_i32_0 = arith.constant 0 : i32
    return %arg0, %c0_i32 : i32, i32
  }
  func.func @transform_3(%arg0: i32, %arg1: i32) -> (i32, i32) {
    %c0_i32 = arith.constant 0 : i32
    %c0_i32_0 = arith.constant 0 : i32
    return %arg0, %c0_i32 : i32, i32
  }
}

module attributes {stable_mosaic.version = 11 : i64} {
  func.func @seg_attn_kernel(%arg0: i32, %arg1: memref<1x4x32xbf16, #tpu.memory_space<vmem>>, %arg2: memref<2x32x16xbf16, #tpu.memory_space<vmem>>, %arg3: memref<2x32x16xbf16, #tpu.memory_space<vmem>>, %arg4: memref<2x32x16xbf16, #tpu.memory_space<vmem>>, %arg5: memref<2x16x32xbf16, #tpu.memory_space<vmem>>, %arg6: memref<2x1x1xf32, #tpu.memory_space<vmem>>, %arg7: memref<1x2x16x16xf32, #tpu.memory_space<vmem>>, %arg8: memref<1x2x16xf32, #tpu.memory_space<vmem>>, %arg9: memref<1x4x32xbf16, #tpu.memory_space<vmem>>, %arg10: memref<1x2x16x16xf32, #tpu.memory_space<vmem>>, %arg11: memref<1x2x16xf32, #tpu.memory_space<vmem>>) attributes {dimension_semantics = [#tpu.dimension_semantics<parallel>], iteration_bounds = array<i64: 8>, scalar_prefetch = 0 : i64, scratch_operands = 0 : i64, tpu.core_type = #tpu.core_type<tc>, window_params = [{transform_indices = @transform_0, window_bounds = array<i64: 1, 4, 32>}, {pipeline_mode = #tpu.pipeline_mode<synchronous>, transform_indices = @transform_1, window_bounds = array<i64: 2, 32, 16>}, {pipeline_mode = #tpu.pipeline_mode<synchronous>, transform_indices = @transform_2, window_bounds = array<i64: 2, 32, 16>}, {pipeline_mode = #tpu.pipeline_mode<synchronous>, transform_indices = @transform_3, window_bounds = array<i64: 2, 32, 16>}, {pipeline_mode = #tpu.pipeline_mode<synchronous>, transform_indices = @transform_4, window_bounds = array<i64: 2, 16, 32>}, {pipeline_mode = #tpu.pipeline_mode<synchronous>, transform_indices = @transform_5, window_bounds = array<i64: 2, 1, 1>}, {transform_indices = @transform_6, window_bounds = array<i64: 1, 2, 16, 16>}, {transform_indices = @transform_7, window_bounds = array<i64: 1, 2, 16>}, {transform_indices = @transform_8, window_bounds = array<i64: 1, 4, 32>}, {transform_indices = @transform_9, window_bounds = array<i64: 1, 2, 16, 16>}, {transform_indices = @transform_10, window_bounds = array<i64: 1, 2, 16>}]} {
    %c0 = arith.constant 0 : index
    %c0_0 = arith.constant 0 : index
    %c0_1 = arith.constant 0 : index
    %0 = vector.load %arg1[%c0, %c0_0, %c0_1] : memref<1x4x32xbf16, #tpu.memory_space<vmem>>, vector<1x4x32xbf16>
    %1 = vector.shape_cast %0 : vector<1x4x32xbf16> to vector<4x32xbf16>
    %2 = vector.shape_cast %1 : vector<4x32xbf16> to vector<1x4x32xbf16>
    %3 = vector.shape_cast %2 : vector<1x4x32xbf16> to vector<1x4x32xbf16>
    %4 = vector.broadcast %3 : vector<1x4x32xbf16> to vector<2x4x32xbf16>
    %c0_2 = arith.constant 0 : index
    %c0_3 = arith.constant 0 : index
    %c0_4 = arith.constant 0 : index
    %5 = vector.load %arg2[%c0_2, %c0_3, %c0_4] : memref<2x32x16xbf16, #tpu.memory_space<vmem>>, vector<2x32x16xbf16>
    "tpu.trace_start"() <{level = 10 : i32, message = "hld,hde->hle"}> : () -> ()
    %cst = arith.constant dense<0.000000e+00> : vector<2x4x16xf32>
    %6 = tpu.matmul %4, %5, %cst {dimension_numbers = #tpu.dot_dimension_numbers<[2], [1], [1], [2], [0, 0, 0, 1, 1, 2], [0], [0]>} : vector<2x4x32xbf16>, vector<2x32x16xbf16>, vector<2x4x16xf32> -> vector<2x4x16xf32>
    "tpu.trace_stop"() : () -> ()
    %c0_5 = arith.constant 0 : index
    %c0_6 = arith.constant 0 : index
    %c0_7 = arith.constant 0 : index
    %7 = vector.load %arg3[%c0_5, %c0_6, %c0_7] : memref<2x32x16xbf16, #tpu.memory_space<vmem>>, vector<2x32x16xbf16>
    "tpu.trace_start"() <{level = 10 : i32, message = "hld,hde->hle"}> : () -> ()
    %cst_8 = arith.constant dense<0.000000e+00> : vector<2x4x16xf32>
    %8 = tpu.matmul %4, %7, %cst_8 {dimension_numbers = #tpu.dot_dimension_numbers<[2], [1], [1], [2], [0, 0, 0, 1, 1, 2], [0], [0]>} : vector<2x4x32xbf16>, vector<2x32x16xbf16>, vector<2x4x16xf32> -> vector<2x4x16xf32>
    "tpu.trace_stop"() : () -> ()
    %c0_9 = arith.constant 0 : index
    %c0_10 = arith.constant 0 : index
    %c0_11 = arith.constant 0 : index
    %9 = vector.load %arg4[%c0_9, %c0_10, %c0_11] : memref<2x32x16xbf16, #tpu.memory_space<vmem>>, vector<2x32x16xbf16>
    "tpu.trace_start"() <{level = 10 : i32, message = "hld,hde->hle"}> : () -> ()
    %cst_12 = arith.constant dense<0.000000e+00> : vector<2x4x16xf32>
    %10 = tpu.matmul %4, %9, %cst_12 {dimension_numbers = #tpu.dot_dimension_numbers<[2], [1], [1], [2], [0, 0, 0, 1, 1, 2], [0], [0]>} : vector<2x4x32xbf16>, vector<2x32x16xbf16>, vector<2x4x16xf32> -> vector<2x4x16xf32>
    "tpu.trace_stop"() : () -> ()
    %cst_13 = arith.constant 2.500000e-01 : f32
    %11 = vector.broadcast %cst_13 : f32 to vector<2x4x16xf32>
    %12 = arith.mulf %6, %11 : vector<2x4x16xf32>
    %13 = arith.truncf %12 : vector<2x4x16xf32> to vector<2x4x16xbf16>
    %14 = arith.truncf %8 : vector<2x4x16xf32> to vector<2x4x16xbf16>
    "tpu.trace_start"() <{level = 10 : i32, message = "hld,hmd->hlm"}> : () -> ()
    %cst_14 = arith.constant dense<0.000000e+00> : vector<2x4x4xf32>
    %15 = tpu.matmul %13, %14, %cst_14 {dimension_numbers = #tpu.dot_dimension_numbers<[2], [2], [1], [1], [0, 0, 0, 1, 1, 1], [0], [0]>} : vector<2x4x16xbf16>, vector<2x4x16xbf16>, vector<2x4x4xf32> -> vector<2x4x4xf32>
    "tpu.trace_stop"() : () -> ()
    %16 = tpu.iota {dimensions = array<i32: 1>} : vector<2x4x4xi32>
    %17 = tpu.iota {dimensions = array<i32: 2>} : vector<2x4x4xi32>
    %18 = arith.cmpi sle, %17, %16 : vector<2x4x4xi32>
    %cst_15 = arith.constant -1.000000e+30 : f32
    %19 = vector.broadcast %cst_15 : f32 to vector<2x4x4xf32>
    %20 = arith.select %18, %15, %19 : vector<2x4x4xi1>, vector<2x4x4xf32>
    %cst_16 = arith.constant dense<0xFF800000> : vector<2x4xf32>
    %21 = vector.multi_reduction <maximumf>, %20, %cst_16 [2] : vector<2x4x4xf32> to vector<2x4xf32>
    %22 = vector.shape_cast %21 : vector<2x4xf32> to vector<2x4x1xf32>
    %23 = vector.broadcast %22 : vector<2x4x1xf32> to vector<2x4x4xf32>
    %24 = arith.subf %20, %23 : vector<2x4x4xf32>
    %25 = math.exp %24 : vector<2x4x4xf32>
    %cst_17 = arith.constant dense<0.000000e+00> : vector<2x4xf32>
    %26 = vector.multi_reduction <add>, %25, %cst_17 [2] : vector<2x4x4xf32> to vector<2x4xf32>
    %27 = vector.shape_cast %26 : vector<2x4xf32> to vector<2x4x1xf32>
    %28 = tpu.reciprocal %27 {approx = true} : vector<2x4x1xf32> -> vector<2x4x1xf32>
    %29 = vector.broadcast %28 : vector<2x4x1xf32> to vector<2x4x4xf32>
    %30 = arith.mulf %25, %29 : vector<2x4x4xf32>
    %31 = arith.truncf %30 : vector<2x4x4xf32> to vector<2x4x4xbf16>
    %32 = arith.truncf %10 : vector<2x4x16xf32> to vector<2x4x16xbf16>
    "tpu.trace_start"() <{level = 10 : i32, message = "hlm,hmd->hld"}> : () -> ()
    %cst_18 = arith.constant dense<0.000000e+00> : vector<2x4x16xf32>
    %33 = tpu.matmul %31, %32, %cst_18 {dimension_numbers = #tpu.dot_dimension_numbers<[2], [1], [1], [2], [0, 0, 0, 1, 1, 2], [0], [0]>} : vector<2x4x4xbf16>, vector<2x4x16xbf16>, vector<2x4x16xf32> -> vector<2x4x16xf32>
    %cst_19 = arith.constant 0.000000e+00 : f32
    "tpu.trace_stop"() : () -> ()
    %34 = vector.broadcast %cst_19 : f32 to vector<2x4x16xf32>
    %35 = arith.cmpf ogt, %6, %34 : vector<2x4x16xf32>
    %cst_20 = arith.constant 1.000000e+00 : f32
    %36 = vector.broadcast %cst_20 : f32 to vector<2x4x16xf32>
    %37 = arith.addf %6, %36 : vector<2x4x16xf32>
    %38 = math.exp %6 : vector<2x4x16xf32>
    %39 = arith.select %35, %37, %38 : vector<2x4x16xi1>, vector<2x4x16xf32>
    %c0_21 = arith.constant 0 : index
    %c0_22 = arith.constant 0 : index
    %c0_23 = arith.constant 0 : index
    %c0_24 = arith.constant 0 : index
    %40 = vector.load %arg7[%c0_21, %c0_22, %c0_23, %c0_24] : memref<1x2x16x16xf32, #tpu.memory_space<vmem>>, vector<1x2x16x16xf32>
    %41 = vector.shape_cast %40 : vector<1x2x16x16xf32> to vector<2x16x16xf32>
    %c0_25 = arith.constant 0 : index
    %c0_26 = arith.constant 0 : index
    %c0_27 = arith.constant 0 : index
    %42 = vector.load %arg8[%c0_25, %c0_26, %c0_27] : memref<1x2x16xf32, #tpu.memory_space<vmem>>, vector<1x2x16xf32>
    %43 = vector.shape_cast %42 : vector<1x2x16xf32> to vector<2x16xf32>
    "tpu.trace_start"() <{level = 10 : i32, message = "hld,hde->hle"}> : () -> ()
    %cst_28 = arith.constant dense<0.000000e+00> : vector<2x4x16xf32>
    %44 = tpu.matmul %39, %41, %cst_28 {dimension_numbers = #tpu.dot_dimension_numbers<[2], [1], [1], [2], [0, 0, 0, 1, 1, 2], [0], [0]>} : vector<2x4x16xf32>, vector<2x16x16xf32>, vector<2x4x16xf32> -> vector<2x4x16xf32>
    "tpu.trace_stop"() : () -> ()
    %45 = vector.shape_cast %43 : vector<2x16xf32> to vector<2x1x16xf32>
    %46 = vector.broadcast %45 : vector<2x1x16xf32> to vector<2x4x16xf32>
    %47 = arith.mulf %39, %46 : vector<2x4x16xf32>
    %cst_29 = arith.constant dense<0.000000e+00> : vector<2x4xf32>
    %48 = vector.multi_reduction <add>, %47, %cst_29 [2] : vector<2x4x16xf32> to vector<2x4xf32>
    %49 = vector.shape_cast %48 : vector<2x4xf32> to vector<2x4x1xf32>
    %cst_30 = arith.constant 9.99999997E-7 : f32
    %50 = vector.broadcast %cst_30 : f32 to vector<2x4x1xf32>
    %51 = arith.addf %49, %50 : vector<2x4x1xf32>
    %52 = tpu.reciprocal %51 {approx = true} : vector<2x4x1xf32> -> vector<2x4x1xf32>
    %53 = vector.broadcast %52 : vector<2x4x1xf32> to vector<2x4x16xf32>
    %54 = arith.mulf %44, %53 : vector<2x4x16xf32>
    %c0_31 = arith.constant 0 : index
    %c0_32 = arith.constant 0 : index
    %c0_33 = arith.constant 0 : index
    %55 = vector.load %arg6[%c0_31, %c0_32, %c0_33] : memref<2x1x1xf32, #tpu.memory_space<vmem>>, vector<2x1x1xf32>
    %56 = arith.negf %55 : vector<2x1x1xf32>
    %57 = math.exp %56 : vector<2x1x1xf32>
    %cst_34 = arith.constant 1.000000e+00 : f32
    %58 = vector.broadcast %cst_34 : f32 to vector<2x1x1xf32>
    %59 = arith.addf %58, %57 : vector<2x1x1xf32>
    %60 = arith.divf %58, %59 : vector<2x1x1xf32>
    %61 = vector.broadcast %60 : vector<2x1x1xf32> to vector<2x4x16xf32>
    %62 = arith.mulf %61, %54 : vector<2x4x16xf32>
    %cst_35 = arith.constant 1.000000e+00 : f32
    %63 = vector.broadcast %cst_35 : f32 to vector<2x1x1xf32>
    %64 = arith.subf %63, %60 : vector<2x1x1xf32>
    %65 = vector.broadcast %64 : vector<2x1x1xf32> to vector<2x4x16xf32>
    %66 = arith.mulf %65, %33 : vector<2x4x16xf32>
    %67 = arith.addf %62, %66 : vector<2x4x16xf32>
    %68 = arith.truncf %67 : vector<2x4x16xf32> to vector<2x4x16xbf16>
    %c0_36 = arith.constant 0 : index
    %c0_37 = arith.constant 0 : index
    %c0_38 = arith.constant 0 : index
    %69 = vector.load %arg5[%c0_36, %c0_37, %c0_38] : memref<2x16x32xbf16, #tpu.memory_space<vmem>>, vector<2x16x32xbf16>
    "tpu.trace_start"() <{level = 10 : i32, message = "hle,hed->hld"}> : () -> ()
    %cst_39 = arith.constant dense<0.000000e+00> : vector<2x4x32xf32>
    %70 = tpu.matmul %68, %69, %cst_39 {dimension_numbers = #tpu.dot_dimension_numbers<[2], [1], [1], [2], [0, 0, 0, 1, 1, 2], [0], [0]>} : vector<2x4x16xbf16>, vector<2x16x32xbf16>, vector<2x4x32xf32> -> vector<2x4x32xf32>
    "tpu.trace_stop"() : () -> ()
    %71 = arith.extf %1 : vector<4x32xbf16> to vector<4x32xf32>
    %cst_40 = arith.constant dense<0.000000e+00> : vector<4x32xf32>
    %72 = vector.multi_reduction <add>, %70, %cst_40 [0] : vector<2x4x32xf32> to vector<4x32xf32>
    %73 = arith.addf %71, %72 : vector<4x32xf32>
    %74 = arith.truncf %73 : vector<4x32xf32> to vector<4x32xbf16>
    %c0_41 = arith.constant 0 : index
    %c0_42 = arith.constant 0 : index
    %c0_43 = arith.constant 0 : index
    %75 = vector.load %arg9[%c0_41, %c0_42, %c0_43] : memref<1x4x32xbf16, #tpu.memory_space<vmem>>, vector<1x4x32xbf16>
    %76 = vector.shape_cast %75 : vector<1x4x32xbf16> to vector<4x32xbf16>
    %77 = vector.shape_cast %74 : vector<4x32xbf16> to vector<1x4x32xbf16>
    tpu.vector_store %arg9[%c0_41, %c0_42, %c0_43], %77 {strides = array<i32>} : memref<1x4x32xbf16, #tpu.memory_space<vmem>>, vector<1x4x32xbf16>,
    %cst_44 = arith.constant 0.000000e+00 : f32
    %78 = vector.broadcast %cst_44 : f32 to vector<2x4x16xf32>
    %79 = arith.cmpf ogt, %8, %78 : vector<2x4x16xf32>
    %cst_45 = arith.constant 1.000000e+00 : f32
    %80 = vector.broadcast %cst_45 : f32 to vector<2x4x16xf32>
    %81 = arith.addf %8, %80 : vector<2x4x16xf32>
    %82 = math.exp %8 : vector<2x4x16xf32>
    %83 = arith.select %79, %81, %82 : vector<2x4x16xi1>, vector<2x4x16xf32>
    "tpu.trace_start"() <{level = 10 : i32, message = "hld,hle->hde"}> : () -> ()
    %cst_46 = arith.constant dense<0.000000e+00> : vector<2x16x16xf32>
    %84 = tpu.matmul %83, %10, %cst_46 {dimension_numbers = #tpu.dot_dimension_numbers<[1], [1], [2], [2], [0, 0, 0, 2, 1, 2], [0], [0]>} : vector<2x4x16xf32>, vector<2x4x16xf32>, vector<2x16x16xf32> -> vector<2x16x16xf32>
    "tpu.trace_stop"() : () -> ()
    %85 = arith.addf %41, %84 : vector<2x16x16xf32>
    %c0_47 = arith.constant 0 : index
    %c0_48 = arith.constant 0 : index
    %c0_49 = arith.constant 0 : index
    %c0_50 = arith.constant 0 : index
    %86 = vector.load %arg10[%c0_47, %c0_48, %c0_49, %c0_50] : memref<1x2x16x16xf32, #tpu.memory_space<vmem>>, vector<1x2x16x16xf32>
    %87 = vector.shape_cast %86 : vector<1x2x16x16xf32> to vector<2x16x16xf32>
    %88 = vector.shape_cast %85 : vector<2x16x16xf32> to vector<1x2x16x16xf32>
    tpu.vector_store %arg10[%c0_47, %c0_48, %c0_49, %c0_50], %88 {strides = array<i32>} : memref<1x2x16x16xf32, #tpu.memory_space<vmem>>, vector<1x2x16x16xf32>,
    %cst_51 = arith.constant dense<0.000000e+00> : vector<2x16xf32>
    %89 = vector.multi_reduction <add>, %83, %cst_51 [1] : vector<2x4x16xf32> to vector<2x16xf32>
    %90 = arith.addf %43, %89 : vector<2x16xf32>
    %c0_52 = arith.constant 0 : index
    %c0_53 = arith.constant 0 : index
    %c0_54 = arith.constant 0 : index
    %91 = vector.load %arg11[%c0_52, %c0_53, %c0_54] : memref<1x2x16xf32, #tpu.memory_space<vmem>>, vector<1x2x16xf32>
    %92 = vector.shape_cast %91 : vector<1x2x16xf32> to vector<2x16xf32>
    %93 = vector.shape_cast %90 : vector<2x16xf32> to vector<1x2x16xf32>
    tpu.vector_store %arg11[%c0_52, %c0_53, %c0_54], %93 {strides = array<i32>} : memref<1x2x16xf32, #tpu.memory_space<vmem>>, vector<1x2x16xf32>,
    return
  }
  func.func @transform_0(%arg0: i32) -> (i32, i32, i32) {
    %c0_i32 = arith.constant 0 : i32
    %c0_i32_0 = arith.constant 0 : i32
    %c0_i32_1 = arith.constant 0 : i32
    return %arg0, %c0_i32, %c0_i32_0 : i32, i32, i32
  }
  func.func @transform_1(%arg0: i32) -> (i32, i32, i32) {
    %c0_i32 = arith.constant 0 : i32
    %c0_i32_0 = arith.constant 0 : i32
    %c0_i32_1 = arith.constant 0 : i32
    %c0_i32_2 = arith.constant 0 : i32
    return %c0_i32, %c0_i32_0, %c0_i32_1 : i32, i32, i32
  }
  func.func @transform_2(%arg0: i32) -> (i32, i32, i32) {
    %c0_i32 = arith.constant 0 : i32
    %c0_i32_0 = arith.constant 0 : i32
    %c0_i32_1 = arith.constant 0 : i32
    %c0_i32_2 = arith.constant 0 : i32
    return %c0_i32, %c0_i32_0, %c0_i32_1 : i32, i32, i32
  }
  func.func @transform_3(%arg0: i32) -> (i32, i32, i32) {
    %c0_i32 = arith.constant 0 : i32
    %c0_i32_0 = arith.constant 0 : i32
    %c0_i32_1 = arith.constant 0 : i32
    %c0_i32_2 = arith.constant 0 : i32
    return %c0_i32, %c0_i32_0, %c0_i32_1 : i32, i32, i32
  }
  func.func @transform_4(%arg0: i32) -> (i32, i32, i32) {
    %c0_i32 = arith.constant 0 : i32
    %c0_i32_0 = arith.constant 0 : i32
    %c0_i32_1 = arith.constant 0 : i32
    %c0_i32_2 = arith.constant 0 : i32
    return %c0_i32, %c0_i32_0, %c0_i32_1 : i32, i32, i32
  }
  func.func @transform_5(%arg0: i32) -> (i32, i32, i32) {
    %c0_i32 = arith.constant 0 : i32
    %c0_i32_0 = arith.constant 0 : i32
    %c0_i32_1 = arith.constant 0 : i32
    %c0_i32_2 = arith.constant 0 : i32
    return %c0_i32, %c0_i32_0, %c0_i32_1 : i32, i32, i32
  }
  func.func @transform_6(%arg0: i32) -> (i32, i32, i32, i32) {
    %c0_i32 = arith.constant 0 : i32
    %c0_i32_0 = arith.constant 0 : i32
    %c0_i32_1 = arith.constant 0 : i32
    %c0_i32_2 = arith.constant 0 : i32
    return %arg0, %c0_i32, %c0_i32_0, %c0_i32_1 : i32, i32, i32, i32
  }
  func.func @transform_7(%arg0: i32) -> (i32, i32, i32) {
    %c0_i32 = arith.constant 0 : i32
    %c0_i32_0 = arith.constant 0 : i32
    %c0_i32_1 = arith.constant 0 : i32
    return %arg0, %c0_i32, %c0_i32_0 : i32, i32, i32
  }
  func.func @transform_8(%arg0: i32) -> (i32, i32, i32) {
    %c0_i32 = arith.constant 0 : i32
    %c0_i32_0 = arith.constant 0 : i32
    %c0_i32_1 = arith.constant 0 : i32
    return %arg0, %c0_i32, %c0_i32_0 : i32, i32, i32
  }
  func.func @transform_9(%arg0: i32) -> (i32, i32, i32, i32) {
    %c0_i32 = arith.constant 0 : i32
    %c0_i32_0 = arith.constant 0 : i32
    %c0_i32_1 = arith.constant 0 : i32
    %c0_i32_2 = arith.constant 0 : i32
    return %arg0, %c0_i32, %c0_i32_0, %c0_i32_1 : i32, i32, i32, i32
  }
  func.func @transform_10(%arg0: i32) -> (i32, i32, i32) {
    %c0_i32 = arith.constant 0 : i32
    %c0_i32_0 = arith.constant 0 : i32
    %c0_i32_1 = arith.constant 0 : i32
    return %arg0, %c0_i32, %c0_i32_0 : i32, i32, i32
  }
}

</mosaic_0001>

<llo_original>
// kernel: forward.7
$region0: #{forward.7}
  #allocation0 [shape = 'u32[]', space=smem, size = 0x4, offset = 0x4, fixed_abs, tag = 'smem constant byte address 0x4 - core index']
  #allocation1 [shape = 'u32[144,128]{1,0:T(1,128)}', space=vmem, size = 0x12000, scoped, tag = 'internal scratch']
  #allocation2 [shape = 'f32[32,1]{1,0:T(8,128)}', space=vmem, size = 0x4000, scoped, tag = 'scratch operand']
  #allocation3 [shape = 'f32[32,1]{1,0:T(8,128)}', space=vmem, size = 0x4000, scoped, tag = 'scratch operand']
  #allocation4 [shape = 'f32[32,1]{1,0:T(8,128)}', space=vmem, size = 0x4000, scoped, tag = 'scratch operand']
  %s0 = inlined_call_operand.vmem [shape: bf16[32,32], index: 0, kind: input, shape index: {}]
  %s1 = inlined_call_operand.vmem [shape: bf16[32,32], index: 1, kind: input, shape index: {}]
  %s2 = inlined_call_operand.vmem [shape: s32[32,1], index: 2, kind: input, shape index: {}]
  %s3 = inlined_call_operand.vmem [shape: f32[32,1], index: 3, kind: output, shape index: {}]
  %s4 = sld [smem:[#allocation0]]
  $region30: #{forward.7} parent=0
    _
  %s6 = ssub.s32 1, %s4
  %s7 = scalar_select 0, %s6, %s4
  // Predicated region
  $region2: #{forward.7} parent=0 // pred_check
    _
  $region3: #{forward.7} parent=0 // pred_check_branch
    %9 = sbr.rel (0) target = $region5
  $region4: #{forward.7} parent=0 // pred_region
    _
  $region5: #{forward.7} parent=0 // pred_fallthru
    _
  // Predicated region
  $region6: #{forward.7} parent=0 // pred_check
    _
  $region7: #{forward.7} parent=0 // pred_check_branch
    %11 = sbr.rel (0) target = $region9
  $region8: #{forward.7} parent=0 // pred_region
    _
  $region9: #{forward.7} parent=0 // pred_fallthru
    _
  // Predicated region
  $region10: #{forward.7} parent=0 // pred_check
    _
  $region11: #{forward.7} parent=0 // pred_check_branch
    %13 = sbr.rel (0) target = $region13
  $region12: #{forward.7} parent=0 // pred_region
    _
  $region13: #{forward.7} parent=0 // pred_fallthru
    _
  %p15 = scmp.eq.s32.totalorder 0, 0
  // Predicated region
  $region14: #{forward.7} parent=0 // pred_check
    %p16 = pneg %p15
  $region15: #{forward.7} parent=0 // pred_check_branch
    %18 = sbr.rel (%p16) target = $region17
  $region16: #{forward.7} parent=0 // pred_region
    %vm19 = vcmask 7168
    %20 = vst.msk [vmem:[#allocation2] sm:$0xff] %vm19, -inf
    %21 = vst.msk [vmem:[#allocation2 + $0x8] sm:$0xff] %vm19, -inf
    %22 = vst.msk [vmem:[#allocation2 + $0x10] sm:$0xff] %vm19, -inf
    %23 = vst.msk [vmem:[#allocation2 + $0x18] sm:$0xff] %vm19, -inf
    %24 = vst.msk [vmem:[#allocation3] sm:$0xff] %vm19, 0.0
    %25 = vst.msk [vmem:[#allocation3 + $0x8] sm:$0xff] %vm19, 0.0
    %26 = vst.msk [vmem:[#allocation3 + $0x10] sm:$0xff] %vm19, 0.0
    %27 = vst.msk [vmem:[#allocation3 + $0x18] sm:$0xff] %vm19, 0.0
    %28 = vst.msk [vmem:[#allocation4] sm:$0xff] %vm19, 0.0
    %29 = vst.msk [vmem:[#allocation4 + $0x8] sm:$0xff] %vm19, 0.0
    %30 = vst.msk [vmem:[#allocation4 + $0x10] sm:$0xff] %vm19, 0.0
    %31 = vst.msk [vmem:[#allocation4 + $0x18] sm:$0xff] %vm19, 0.0
  $region17: #{forward.7} parent=0 // pred_fallthru
    _
  %v32 = vld [vmem:[%s0] sm:$0xf]
  %v33 = vld [vmem:[%s0 + $0x4] sm:$0xf]
  %v34 = vld [vmem:[%s0 + $0x8] sm:$0xf]
  %v35 = vld [vmem:[%s0 + $0xc] sm:$0xf]
  %v36 = vld [vmem:[%s1] sm:$0xf]
  %v37 = vld [vmem:[%s1 + $0x4] sm:$0xf]
  %v38 = vld [vmem:[%s1 + $0x8] sm:$0xf]
  %v39 = vld [vmem:[%s1 + $0xc] sm:$0xf]
  %v44 = vunpack.c.l.b16 %v32
  %v45 = vunpack.c.l.b16 %v33
  %v46 = vunpack.c.l.b16 %v34
  %v47 = vunpack.c.l.b16 %v35
  %v48 = vpack.c.b16 %v45, %v44
  %v49 = vpack.c.b16 %v47, %v46
  %v54 = vunpack.c.l.b16 %v36
  %v55 = vunpack.c.l.b16 %v37
  %v56 = vunpack.c.l.b16 %v38
  %v57 = vunpack.c.l.b16 %v39
  %v58 = vpack.c.b16 %v55, %v54
  %v59 = vpack.c.b16 %v57, %v56
  %vm62 = vcmask 261120
  %v64 = vsel %vm62, %v48, 0
  %v67 = vsel %vm62, %v49, 0
  %69 = vmatprep.subr.bf16.mxu0 0
  %70 = vmatpush1.bf16.msra.mxu0 %v58
  %71 = vmatprep.subr.bf16.mxu0 0
  %72 = vmatpush1.bf16.msra.mxu0 %v59
  %73 = vmatprep.subr.bf16.mxu0 0
  %74 = vmatpush1.bf16.msra.mxu0 0
  %75 = vmatprep.subr.bf16.mxu0 0
  %76 = vmatpush1.bf16.msra.mxu0 0
  %77 = vmatprep.subr.bf16.mxu0 0
  %78 = vmatpush1.bf16.msra.mxu0 0
  %79 = vmatprep.subr.bf16.mxu0 0
  %80 = vmatpush1.bf16.msra.mxu0 0
  %81 = vmatprep.subr.bf16.mxu0 0
  %82 = vmatpush1.bf16.msra.mxu0 0
  %83 = vmatprep.subr.bf16.mxu0 0
  %84 = vmatpush1.bf16.msra.mxu0 0
  %85 = vmatprep.subr.bf16.mxu0 0
  %86 = vmatpush1.bf16.msra.mxu0 0
  %87 = vmatprep.subr.bf16.mxu0 0
  %88 = vmatpush1.bf16.msra.mxu0 0
  %89 = vmatprep.subr.bf16.mxu0 0
  %90 = vmatpush1.bf16.msra.mxu0 0
  %91 = vmatprep.subr.bf16.mxu0 0
  %92 = vmatpush1.bf16.msra.mxu0 0
  %93 = vmatprep.subr.bf16.mxu0 0
  %94 = vmatpush1.bf16.msra.mxu0 0
  %95 = vmatprep.subr.bf16.mxu0 0
  %96 = vmatpush1.bf16.msra.mxu0 0
  %97 = vmatprep.subr.bf16.mxu0 0
  %98 = vmatpush1.bf16.msra.mxu0 0
  %99 = vmatprep.subr.bf16.mxu0 0
  %100 = vmatpush1.bf16.msra.mxu0 0
  %101 = vmatprep.mubr.bf16.mxu0 0
  %102 = vmatmul.mubr.bf16.gmra.mrb[0].mxu0 %v64
  %v103 = vpop.f32.mrb[0].mxu0
  %v104 = vadd.f32 0.0, %v103
  %v105 = vpop.f32.mrb[0].mxu0
  %v106 = vpop.f32.mrb[0].mxu0
  %v107 = vadd.f32 0.0, %v106
  %v108 = vpop.f32.mrb[0].mxu0
  %109 = vmatprep.mubr.bf16.mxu0 0
  %110 = vmatmul.mubr.bf16.gmra.mrb[0].mxu0 %v67
  %v111 = vpop.f32.mrb[0].mxu0
  %v112 = vadd.f32 0.0, %v111
  %v113 = vpop.f32.mrb[0].mxu0
  %v114 = vpop.f32.mrb[0].mxu0
  %v115 = vadd.f32 0.0, %v114
  %v116 = vpop.f32.mrb[0].mxu0
  %117 = vdwg.mxu0
  %v118 = vld [vmem:[%s2] sm:$0xff]
  %v119 = vld [vmem:[%s2 + $0x8] sm:$0xff]
  %v120 = vld [vmem:[%s2 + $0x10] sm:$0xff]
  %v121 = vld [vmem:[%s2 + $0x18] sm:$0xff]
  %v122 = vld [vmem:[#allocation2] sm:$0xff]
  %v123 = vld [vmem:[#allocation2 + $0x8] sm:$0xff]
  %v124 = vld [vmem:[#allocation2 + $0x10] sm:$0xff]
  %v125 = vld [vmem:[#allocation2 + $0x18] sm:$0xff]
  %v126 = vsel %vm62, %v104, -inf
  %127 = vmax.xlane.f32.xlu0 %v126
  %v128 = vpop.xlane.xlu0 %127
  %v129 = vsel %vm62, %v107, -inf
  %130 = vmax.xlane.f32.xlu0 %v129
  %v131 = vpop.xlane.xlu0 %130
  %v132 = vsel %vm62, %v112, -inf
  %133 = vmax.xlane.f32.xlu0 %v132
  %v134 = vpop.xlane.xlu0 %133
  %v135 = vsel %vm62, %v115, -inf
  %136 = vmax.xlane.f32.xlu0 %v135
  %v137 = vpop.xlane.xlu0 %136
  %v138 = vmax.f32 %v122, %v128
  %v139 = vmax.f32 %v123, %v131
  %v140 = vmax.f32 %v124, %v134
  %v141 = vmax.f32 %v125, %v137
  %v142 = vsub.f32 %v122, %v138
  %v143 = vsub.f32 %v123, %v139
  %v144 = vsub.f32 %v124, %v140
  %v145 = vsub.f32 %v125, %v141
  %v146 = vmul.f32 %v142, 1.442695
  %v147 = vpow.pop %v146
  %v148 = vmul.f32 %v143, 1.442695
  %v149 = vpow.pop %v148
  %v150 = vmul.f32 %v144, 1.442695
  %v151 = vpow.pop %v150
  %v152 = vmul.f32 %v145, 1.442695
  %v153 = vpow.pop %v152
  %v154 = vld [vmem:[#allocation3] sm:$0xff]
  %v155 = vld [vmem:[#allocation3 + $0x8] sm:$0xff]
  %v156 = vld [vmem:[#allocation3 + $0x10] sm:$0xff]
  %v157 = vld [vmem:[#allocation3 + $0x18] sm:$0xff]
  %v158 = vmul.f32 %v147, %v154
  %v159 = vmul.f32 %v149, %v155
  %v160 = vmul.f32 %v151, %v156
  %v161 = vmul.f32 %v153, %v157
  %163 = vset.pattern.permute.xlu0 0
  %164 = vperm.xlu0 %163, %v138
  %v165 = vpop.permute.xlu0 %164
  %168 = vset.pattern.permute.xlu0 0
  %169 = vperm.xlu0 %168, %v139
  %v170 = vpop.permute.xlu0 %169
  %173 = vset.pattern.permute.xlu0 0
  %174 = vperm.xlu0 %173, %v140
  %v175 = vpop.permute.xlu0 %174
  %178 = vset.pattern.permute.xlu0 0
  %179 = vperm.xlu0 %178, %v141
  %v180 = vpop.permute.xlu0 %179
  %v182 = vsub.f32 %v104, %v165
  %v183 = vsub.f32 %v107, %v170
  %v184 = vsub.f32 %v112, %v175
  %v185 = vsub.f32 %v115, %v180
  %v186 = vmul.f32 %v182, 1.442695
  %v187 = vpow.pop %v186
  %v188 = vmul.f32 %v183, 1.442695
  %v189 = vpow.pop %v188
  %v190 = vmul.f32 %v184, 1.442695
  %v191 = vpow.pop %v190
  %v192 = vmul.f32 %v185, 1.442695
  %v193 = vpow.pop %v192
  %v194 = vsel %vm62, %v187, 0.0
  %195 = vadd.xlane.f32.xlu0 %v194
  %v196 = vpop.xlane.xlu0 %195
  %v197 = vsel %vm62, %v189, 0.0
  %198 = vadd.xlane.f32.xlu0 %v197
  %v199 = vpop.xlane.xlu0 %198
  %v200 = vsel %vm62, %v191, 0.0
  %201 = vadd.xlane.f32.xlu0 %v200
  %v202 = vpop.xlane.xlu0 %201
  %v203 = vsel %vm62, %v193, 0.0
  %204 = vadd.xlane.f32.xlu0 %v203
  %v205 = vpop.xlane.xlu0 %204
  %v206 = vadd.f32 %v158, %v196
  %v207 = vadd.f32 %v159, %v199
  %v208 = vadd.f32 %v160, %v202
  %v209 = vadd.f32 %v161, %v205
  %vm210 = vcmask 7168
  %211 = vst.msk [vmem:[#allocation3] sm:$0xff] %vm210, %v206
  %212 = vst.msk [vmem:[#allocation3 + $0x8] sm:$0xff] %vm210, %v207
  %213 = vst.msk [vmem:[#allocation3 + $0x10] sm:$0xff] %vm210, %v208
  %214 = vst.msk [vmem:[#allocation3 + $0x18] sm:$0xff] %vm210, %v209
  %215 = vst.msk [vmem:[#allocation2] sm:$0xff] %vm210, %v138
  %216 = vst.msk [vmem:[#allocation2 + $0x8] sm:$0xff] %vm210, %v139
  %217 = vst.msk [vmem:[#allocation2 + $0x10] sm:$0xff] %vm210, %v140
  %218 = vst.msk [vmem:[#allocation2 + $0x18] sm:$0xff] %vm210, %v141
  %v219 = vlaneseq
  %v220 = vand.u32 %v219, 127
  %s221 = smul.u32 0, 32
  %v222 = vstv %s221
  %v223 = vadd.s32 %v220, %v222
  %224 = vset.pattern.permute.xlu0 0
  %225 = vperm.xlu0 %224, %v118
  %v226 = vpop.permute.xlu0 %225
  %227 = vset.pattern.permute.xlu0 0
  %228 = vperm.xlu0 %227, %v119
  %v229 = vpop.permute.xlu0 %228
  %230 = vset.pattern.permute.xlu0 0
  %231 = vperm.xlu0 %230, %v120
  %v232 = vpop.permute.xlu0 %231
  %233 = vset.pattern.permute.xlu0 0
  %234 = vperm.xlu0 %233, %v121
  %v235 = vpop.permute.xlu0 %234
  %vm236 = vcmp.eq.s32.totalorder %v223, %v226
  %vm237 = vcmp.eq.s32.totalorder %v223, %v229
  %vm238 = vcmp.eq.s32.totalorder %v223, %v232
  %vm239 = vcmp.eq.s32.totalorder %v223, %v235
  %v240 = vsel %vm236, 1, 0
  %v241 = vsel %vm237, 1, 0
  %v242 = vsel %vm238, 1, 0
  %v243 = vsel %vm239, 1, 0
  %v244 = vcvt.s32.f32 %v240
  %v245 = vcvt.s32.f32 %v241
  %v246 = vcvt.s32.f32 %v242
  %v247 = vcvt.s32.f32 %v243
  %v248 = vld [vmem:[#allocation4] sm:$0xff]
  %v249 = vld [vmem:[#allocation4 + $0x8] sm:$0xff]
  %v250 = vld [vmem:[#allocation4 + $0x10] sm:$0xff]
  %v251 = vld [vmem:[#allocation4 + $0x18] sm:$0xff]
  %v252 = vmul.f32 %v104, %v244
  %v253 = vmul.f32 %v107, %v245
  %v254 = vmul.f32 %v112, %v246
  %v255 = vmul.f32 %v115, %v247
  %v256 = vsel %vm62, %v252, 0.0
  %257 = vadd.xlane.f32.xlu0 %v256
  %v258 = vpop.xlane.xlu0 %257
  %v259 = vsel %vm62, %v253, 0.0
  %260 = vadd.xlane.f32.xlu0 %v259
  %v261 = vpop.xlane.xlu0 %260
  %v262 = vsel %vm62, %v254, 0.0
  %263 = vadd.xlane.f32.xlu0 %v262
  %v264 = vpop.xlane.xlu0 %263
  %v265 = vsel %vm62, %v255, 0.0
  %266 = vadd.xlane.f32.xlu0 %v265
  %v267 = vpop.xlane.xlu0 %266
  %v268 = vadd.f32 %v248, %v258
  %v269 = vadd.f32 %v249, %v261
  %v270 = vadd.f32 %v250, %v264
  %v271 = vadd.f32 %v251, %v267
  %272 = vst.msk [vmem:[#allocation4] sm:$0xff] %vm210, %v268
  %273 = vst.msk [vmem:[#allocation4 + $0x8] sm:$0xff] %vm210, %v269
  %274 = vst.msk [vmem:[#allocation4 + $0x10] sm:$0xff] %vm210, %v270
  %275 = vst.msk [vmem:[#allocation4 + $0x18] sm:$0xff] %vm210, %v271
  // Predicated region
  $region18: #{forward.7} parent=0 // pred_check
    %p276 = pneg %p15
  $region19: #{forward.7} parent=0 // pred_check_branch
    %278 = sbr.rel (%p276) target = $region21
  $region20: #{forward.7} parent=0 // pred_region
    %v279 = vld [vmem:[#allocation2] sm:$0xff]
    %v280 = vld [vmem:[#allocation2 + $0x8] sm:$0xff]
    %v281 = vld [vmem:[#allocation2 + $0x10] sm:$0xff]
    %v282 = vld [vmem:[#allocation2 + $0x18] sm:$0xff]
    %v283 = vld [vmem:[#allocation3] sm:$0xff]
    %v284 = vld [vmem:[#allocation3 + $0x8] sm:$0xff]
    %v285 = vld [vmem:[#allocation3 + $0x10] sm:$0xff]
    %v286 = vld [vmem:[#allocation3 + $0x18] sm:$0xff]
    %v287 = vlog2.pop %v283
    %v288 = vmul.f32 %v287, 0.6931472
    %v289 = vlog2.pop %v284
    %v290 = vmul.f32 %v289, 0.6931472
    %v291 = vlog2.pop %v285
    %v292 = vmul.f32 %v291, 0.6931472
    %v293 = vlog2.pop %v286
    %v294 = vmul.f32 %v293, 0.6931472
    %v295 = vadd.f32 %v279, %v288
    %v296 = vadd.f32 %v280, %v290
    %v297 = vadd.f32 %v281, %v292
    %v298 = vadd.f32 %v282, %v294
    %vm299 = vcmp.ne.s32.totalorder %v118, 4294967295
    %vm300 = vcmp.ne.s32.totalorder %v119, 4294967295
    %vm301 = vcmp.ne.s32.totalorder %v120, 4294967295
    %vm302 = vcmp.ne.s32.totalorder %v121, 4294967295
    %v303 = vsel %vm299, 1, 0
    %v304 = vsel %vm300, 1, 0
    %v305 = vsel %vm301, 1, 0
    %v306 = vsel %vm302, 1, 0
    %v307 = vcvt.s32.f32 %v303
    %v308 = vcvt.s32.f32 %v304
    %v309 = vcvt.s32.f32 %v305
    %v310 = vcvt.s32.f32 %v306
    %v311 = vld [vmem:[#allocation4] sm:$0xff]
    %v312 = vld [vmem:[#allocation4 + $0x8] sm:$0xff]
    %v313 = vld [vmem:[#allocation4 + $0x10] sm:$0xff]
    %v314 = vld [vmem:[#allocation4 + $0x18] sm:$0xff]
    %v315 = vsub.f32 %v295, %v311
    %v316 = vsub.f32 %v296, %v312
    %v317 = vsub.f32 %v297, %v313
    %v318 = vsub.f32 %v298, %v314
    %v319 = vmul.f32 %v315, %v307
    %v320 = vmul.f32 %v316, %v308
    %v321 = vmul.f32 %v317, %v309
    %v322 = vmul.f32 %v318, %v310
    %323 = vst.msk [vmem:[%s3] sm:$0xff] %vm210, %v319
    %324 = vst.msk [vmem:[%s3 + $0x8] sm:$0xff] %vm210, %v320
    %325 = vst.msk [vmem:[%s3 + $0x10] sm:$0xff] %vm210, %v321
    %326 = vst.msk [vmem:[%s3 + $0x18] sm:$0xff] %vm210, %v322
  $region21: #{forward.7} parent=0 // pred_fallthru
    _
  // Predicated region
  $region22: #{forward.7} parent=0 // pred_check
    _
  $region23: #{forward.7} parent=0 // pred_check_branch
    %328 = sbr.rel (0) target = $region25
  $region24: #{forward.7} parent=0 // pred_region
    _
  $region25: #{forward.7} parent=0 // pred_fallthru
    _
  // Predicated region
  $region26: #{forward.7} parent=0 // pred_check
    _
  $region27: #{forward.7} parent=0 // pred_check_branch
    %330 = sbr.rel (0) target = $region29
  $region28: #{forward.7} parent=0 // pred_region
    _
  $region29: #{forward.7} parent=0 // pred_fallthru
    _

// kernel: forward.6
$region0: #{forward.6}
  #allocation0 [shape = 'u32[]', space=smem, size = 0x4, offset = 0x4, fixed_abs, tag = 'smem constant byte address 0x4 - core index']
  #allocation1 [shape = 'u32[144,128]{1,0:T(1,128)}', space=vmem, size = 0x12000, scoped, tag = 'internal scratch']
  %s0 = inlined_call_operand.vmem [shape: bf16[8,4,32], index: 0, kind: input, shape index: {}]
  %s1 = inlined_call_operand.vmem [shape: bf16[2,32,16], index: 1, kind: input, shape index: {}]
  %s2 = inlined_call_operand.vmem [shape: bf16[2,32,16], index: 2, kind: input, shape index: {}]
  %s3 = inlined_call_operand.vmem [shape: bf16[2,32,16], index: 3, kind: input, shape index: {}]
  %s4 = inlined_call_operand.vmem [shape: bf16[2,16,32], index: 4, kind: input, shape index: {}]
  %s5 = inlined_call_operand.vmem [shape: f32[2,1,1], index: 5, kind: input, shape index: {}]
  %s6 = inlined_call_operand.vmem [shape: f32[8,2,16,16], index: 6, kind: input, shape index: {}]
  %s7 = inlined_call_operand.vmem [shape: f32[8,2,16], index: 7, kind: input, shape index: {}]
  %s8 = inlined_call_operand.vmem [shape: bf16[8,4,32], index: 8, kind: output, shape index: {0}]
  %s9 = inlined_call_operand.hbm [shape: f32[8,2,16,16], index: 9, kind: output, shape index: {1}]
  %s10 = inlined_call_operand.hbm [shape: f32[8,2,16], index: 10, kind: output, shape index: {2}]
  %11 = xla_tuple %s8, %s9, %s10
  %s12 = sld [smem:[#allocation0]]
  $region81: #{forward.6} parent=0
    _
  %s14 = ssub.s32 1, %s12
  %s15 = scalar_select 0, %s14, %s12
  $region1: #{forward.6} parent=0
    #allocation2 [shape = 'u8[32768]{0}', space=vmem, size = 0x8000, scoped, tag = 'output window, operand 1']
    #allocation3 [shape = 's32[2]{0}', space=sflag, size = 0x8, scoped, tag = 'scoped memory for forward.6']
    #allocation4 [shape = 'u8[2048]{0}', space=vmem, size = 0x800, scoped, tag = 'output window, operand 2']
    #allocation5 [shape = 's32[2]{0}', space=sflag, size = 0x8, scoped, tag = 'scoped memory for forward.6']
    %16 = vsyncpa [#allocation3], 0
    %s17 = scalar_lea.sflag [#allocation3], 1
    %18 = vsyncpa %s17, 0
    %19 = vsyncpa [#allocation5], 0
    %s20 = scalar_lea.sflag [#allocation5], 1
    %21 = vsyncpa %s20, 0
    loop: start=0, step=1, limit=10
    $region2: #{forward.6} parent=1 // loop_pre_header
      _
    $region3: #{forward.6} parent=1 // loop_header
      %s23 = sphi 0, %s27
      %p24 = scmp.ge.s32.totalorder %s23, 10
      %s33 = sphi 0, %s35
      %s36 = sphi 0, %s33
      %s37 = sphi 0, %s36
      %s53 = sphi 0, %s37
      %s57 = sphi 0, %s57
      %s59 = sphi 0, %s57
      %s60 = sphi 0, %s59
      %s74 = sphi 0, %s60
      %s78 = sphi 0, %s78
      %s80 = sphi 0, %s78
      %s81 = sphi 0, %s80
      %s95 = sphi 0, %s81
      %s99 = sphi 0, %s99
      %s101 = sphi 0, %s99
      %s102 = sphi 0, %s101
      %s116 = sphi 0, %s102
      %s120 = sphi 0, %s120
      %s122 = sphi 0, %s120
      %s123 = sphi 0, %s122
      %s137 = sphi 0, %s123
      %s141 = sphi 0, %s141
      %s143 = sphi 0, %s141
      %s144 = sphi 0, %s143
      %s158 = sphi 0, %s144
      %s164 = sphi 0, %s166
      %s167 = sphi 0, %s164
      %s168 = sphi 0, %s167
      %s184 = sphi 0, %s168
      %s190 = sphi 0, %s192
      %s193 = sphi 0, %s190
      %s194 = sphi 0, %s193
      %s210 = sphi 0, %s194
      %s216 = sphi 0, %s218
      %s219 = sphi 0, %s216
      %s220 = sphi 0, %s219
      %s236 = sphi 0, %s220
      %s242 = sphi 0, %s244
      %s245 = sphi 0, %s242
      %s246 = sphi 0, %s245
      %s262 = sphi 0, %s246
      %s268 = sphi 0, %s270
      %s271 = sphi 0, %s268
      %s272 = sphi 0, %s271
      %s288 = sphi 0, %s272
    $region4: #{forward.6} parent=1 // loop_header_branch
      %26 = sbr.rel (%p24) target = $region8
    $region5: #{forward.6} parent=1 // loop_body
      %s28 = ssub.s32 %s23, 1
      %s29 = ssub.s32 %s23, 2
      %s30 = sadd.s32 %s23, 1
      %s31 = ssub.s32 %s23, %s30
      %p32 = scmp.eq.s32.totalorder %s31, 0
      %s34 = sadd.s32 %s33, 1
      %s35 = scalar_select %p32, %s33, %s34
      %p38 = pneg %p32
      %p39 = scmp.eq.s32.totalorder %s23, 7
      %p40 = por %p38, %p39
      %p41 = scmp.ne.s32.totalorder %s33, %s36
      %p42 = scmp.eq.s32.totalorder %s23, 0
      %p43 = por %p41, %p42
      %p44 = scmp.ne.s32.totalorder %s33, %s36
      %p45 = scmp.eq.s32.totalorder %s28, 7
      %p46 = por %p44, %p45
      %p47 = scmp.ne.s32.totalorder %s36, %s37
      %p48 = scmp.eq.s32.totalorder %s28, 0
      %p49 = por %p47, %p48
      %p50 = scmp.ne.s32.totalorder %s36, %s37
      %p51 = scmp.eq.s32.totalorder %s29, 7
      %p52 = por %p50, %p51
      %p54 = scmp.ne.s32.totalorder %s37, %s53
      %p55 = scmp.eq.s32.totalorder %s29, 0
      %p56 = por %p54, %p55
      %s58 = sadd.s32 %s57, 1
      %p61 = scmp.eq.s32.totalorder %s23, 7
      %p62 = scmp.ne.s32.totalorder %s57, %s59
      %p63 = scmp.eq.s32.totalorder %s23, 0
      %p64 = por %p62, %p63
      %p65 = scmp.ne.s32.totalorder %s57, %s59
      %p66 = scmp.eq.s32.totalorder %s28, 7
      %p67 = por %p65, %p66
      %p68 = scmp.ne.s32.totalorder %s59, %s60
      %p69 = scmp.eq.s32.totalorder %s28, 0
      %p70 = por %p68, %p69
      %p71 = scmp.ne.s32.totalorder %s59, %s60
      %p72 = scmp.eq.s32.totalorder %s29, 7
      %p73 = por %p71, %p72
      %p75 = scmp.ne.s32.totalorder %s60, %s74
      %p76 = scmp.eq.s32.totalorder %s29, 0
      %p77 = por %p75, %p76
      %s79 = sadd.s32 %s78, 1
      %p82 = scmp.eq.s32.totalorder %s23, 7
      %p83 = scmp.ne.s32.totalorder %s78, %s80
      %p84 = scmp.eq.s32.totalorder %s23, 0
      %p85 = por %p83, %p84
      %p86 = scmp.ne.s32.totalorder %s78, %s80
      %p87 = scmp.eq.s32.totalorder %s28, 7
      %p88 = por %p86, %p87
      %p89 = scmp.ne.s32.totalorder %s80, %s81
      %p90 = scmp.eq.s32.totalorder %s28, 0
      %p91 = por %p89, %p90
      %p92 = scmp.ne.s32.totalorder %s80, %s81
      %p93 = scmp.eq.s32.totalorder %s29, 7
      %p94 = por %p92, %p93
      %p96 = scmp.ne.s32.totalorder %s81, %s95
      %p97 = scmp.eq.s32.totalorder %s29, 0
      %p98 = por %p96, %p97
      %s100 = sadd.s32 %s99, 1
      %p103 = scmp.eq.s32.totalorder %s23, 7
      %p104 = scmp.ne.s32.totalorder %s99, %s101
      %p105 = scmp.eq.s32.totalorder %s23, 0
      %p106 = por %p104, %p105
      %p107 = scmp.ne.s32.totalorder %s99, %s101
      %p108 = scmp.eq.s32.totalorder %s28, 7
      %p109 = por %p107, %p108
      %p110 = scmp.ne.s32.totalorder %s101, %s102
      %p111 = scmp.eq.s32.totalorder %s28, 0
      %p112 = por %p110, %p111
      %p113 = scmp.ne.s32.totalorder %s101, %s102
      %p114 = scmp.eq.s32.totalorder %s29, 7
      %p115 = por %p113, %p114
      %p117 = scmp.ne.s32.totalorder %s102, %s116
      %p118 = scmp.eq.s32.totalorder %s29, 0
      %p119 = por %p117, %p118
      %s121 = sadd.s32 %s120, 1
      %p124 = scmp.eq.s32.totalorder %s23, 7
      %p125 = scmp.ne.s32.totalorder %s120, %s122
      %p126 = scmp.eq.s32.totalorder %s23, 0
      %p127 = por %p125, %p126
      %p128 = scmp.ne.s32.totalorder %s120, %s122
      %p129 = scmp.eq.s32.totalorder %s28, 7
      %p130 = por %p128, %p129
      %p131 = scmp.ne.s32.totalorder %s122, %s123
      %p132 = scmp.eq.s32.totalorder %s28, 0
      %p133 = por %p131, %p132
      %p134 = scmp.ne.s32.totalorder %s122, %s123
      %p135 = scmp.eq.s32.totalorder %s29, 7
      %p136 = por %p134, %p135
      %p138 = scmp.ne.s32.totalorder %s123, %s137
      %p139 = scmp.eq.s32.totalorder %s29, 0
      %p140 = por %p138, %p139
      %s142 = sadd.s32 %s141, 1
      %p145 = scmp.eq.s32.totalorder %s23, 7
      %p146 = scmp.ne.s32.totalorder %s141, %s143
      %p147 = scmp.eq.s32.totalorder %s23, 0
      %p148 = por %p146, %p147
      %p149 = scmp.ne.s32.totalorder %s141, %s143
      %p150 = scmp.eq.s32.totalorder %s28, 7
      %p151 = por %p149, %p150
      %p152 = scmp.ne.s32.totalorder %s143, %s144
      %p153 = scmp.eq.s32.totalorder %s28, 0
      %p154 = por %p152, %p153
      %p155 = scmp.ne.s32.totalorder %s143, %s144
      %p156 = scmp.eq.s32.totalorder %s29, 7
      %p157 = por %p155, %p156
      %p159 = scmp.ne.s32.totalorder %s144, %s158
      %p160 = scmp.eq.s32.totalorder %s29, 0
      %p161 = por %p159, %p160
      %s162 = ssub.s32 %s23, %s30
      %p163 = scmp.eq.s32.totalorder %s162, 0
      %s165 = sadd.s32 %s164, 1
      %s166 = scalar_select %p163, %s164, %s165
      %p169 = pneg %p163
      %p170 = scmp.eq.s32.totalorder %s23, 7
      %p171 = por %p169, %p170
      %p172 = scmp.ne.s32.totalorder %s164, %s167
      %p173 = scmp.eq.s32.totalorder %s23, 0
      %p174 = por %p172, %p173
      %p175 = scmp.ne.s32.totalorder %s164, %s167
      %p176 = scmp.eq.s32.totalorder %s28, 7
      %p177 = por %p175, %p176
      %p178 = scmp.ne.s32.totalorder %s167, %s168
      %p179 = scmp.eq.s32.totalorder %s28, 0
      %p180 = por %p178, %p179
      %p181 = scmp.ne.s32.totalorder %s167, %s168
      %p182 = scmp.eq.s32.totalorder %s29, 7
      %p183 = por %p181, %p182
      %p185 = scmp.ne.s32.totalorder %s168, %s184
      %p186 = scmp.eq.s32.totalorder %s29, 0
      %p187 = por %p185, %p186
      %s188 = ssub.s32 %s23, %s30
      %p189 = scmp.eq.s32.totalorder %s188, 0
      %s191 = sadd.s32 %s190, 1
      %s192 = scalar_select %p189, %s190, %s191
      %p195 = pneg %p189
      %p196 = scmp.eq.s32.totalorder %s23, 7
      %p197 = por %p195, %p196
      %p198 = scmp.ne.s32.totalorder %s190, %s193
      %p199 = scmp.eq.s32.totalorder %s23, 0
      %p200 = por %p198, %p199
      %p201 = scmp.ne.s32.totalorder %s190, %s193
      %p202 = scmp.eq.s32.totalorder %s28, 7
      %p203 = por %p201, %p202
      %p204 = scmp.ne.s32.totalorder %s193, %s194
      %p205 = scmp.eq.s32.totalorder %s28, 0
      %p206 = por %p204, %p205
      %p207 = scmp.ne.s32.totalorder %s193, %s194
      %p208 = scmp.eq.s32.totalorder %s29, 7
      %p209 = por %p207, %p208
      %p211 = scmp.ne.s32.totalorder %s194, %s210
      %p212 = scmp.eq.s32.totalorder %s29, 0
      %p213 = por %p211, %p212
      %s214 = ssub.s32 %s23, %s30
      %p215 = scmp.eq.s32.totalorder %s214, 0
      %s217 = sadd.s32 %s216, 1
      %s218 = scalar_select %p215, %s216, %s217
      %p221 = pneg %p215
      %p222 = scmp.eq.s32.totalorder %s23, 7
      %p223 = por %p221, %p222
      %p224 = scmp.ne.s32.totalorder %s216, %s219
      %p225 = scmp.eq.s32.totalorder %s23, 0
      %p226 = por %p224, %p225
      %p227 = scmp.ne.s32.totalorder %s216, %s219
      %p228 = scmp.eq.s32.totalorder %s28, 7
      %p229 = por %p227, %p228
      %p230 = scmp.ne.s32.totalorder %s219, %s220
      %p231 = scmp.eq.s32.totalorder %s28, 0
      %p232 = por %p230, %p231
      %p233 = scmp.ne.s32.totalorder %s219, %s220
      %p234 = scmp.eq.s32.totalorder %s29, 7
      %p235 = por %p233, %p234
      %p237 = scmp.ne.s32.totalorder %s220, %s236
      %p238 = scmp.eq.s32.totalorder %s29, 0
      %p239 = por %p237, %p238
      %s240 = ssub.s32 %s23, %s30
      %p241 = scmp.eq.s32.totalorder %s240, 0
      %s243 = sadd.s32 %s242, 1
      %s244 = scalar_select %p241, %s242, %s243
      %p247 = pneg %p241
      %p248 = scmp.eq.s32.totalorder %s23, 7
      %p249 = por %p247, %p248
      %p250 = scmp.ne.s32.totalorder %s242, %s245
      %p251 = scmp.eq.s32.totalorder %s23, 0
      %p252 = por %p250, %p251
      %p253 = scmp.ne.s32.totalorder %s242, %s245
      %p254 = scmp.eq.s32.totalorder %s28, 7
      %p255 = por %p253, %p254
      %p256 = scmp.ne.s32.totalorder %s245, %s246
      %p257 = scmp.eq.s32.totalorder %s28, 0
      %p258 = por %p256, %p257
      %p259 = scmp.ne.s32.totalorder %s245, %s246
      %p260 = scmp.eq.s32.totalorder %s29, 7
      %p261 = por %p259, %p260
      %p263 = scmp.ne.s32.totalorder %s246, %s262
      %p264 = scmp.eq.s32.totalorder %s29, 0
      %p265 = por %p263, %p264
      %s266 = ssub.s32 %s23, %s30
      %p267 = scmp.eq.s32.totalorder %s266, 0
      %s269 = sadd.s32 %s268, 1
      %s270 = scalar_select %p267, %s268, %s269
      %p273 = pneg %p267
      %p274 = scmp.eq.s32.totalorder %s23, 7
      %p275 = por %p273, %p274
      %p276 = scmp.ne.s32.totalorder %s268, %s271
      %p277 = scmp.eq.s32.totalorder %s23, 0
      %p278 = por %p276, %p277
      %p279 = scmp.ne.s32.totalorder %s268, %s271
      %p280 = scmp.eq.s32.totalorder %s28, 7
      %p281 = por %p279, %p280
      %p282 = scmp.ne.s32.totalorder %s271, %s272
      %p283 = scmp.eq.s32.totalorder %s28, 0
      %p284 = por %p282, %p283
      %p285 = scmp.ne.s32.totalorder %s271, %s272
      %p286 = scmp.eq.s32.totalorder %s29, 7
      %p287 = por %p285, %p286
      %p289 = scmp.ne.s32.totalorder %s272, %s288
      %p290 = scmp.eq.s32.totalorder %s29, 0
      %p291 = por %p289, %p290
      %p292 = scmp.le.s32.totalorder 1, %s23
      %p293 = scmp.lt.s32.totalorder %s23, 9
      %p294 = pnand %p292, %p293
      %p295 = pneg %p294
      // Predicated region
      $region9: #{forward.6} parent=5 // pred_check
        _
      $region10: #{forward.6} parent=5 // pred_check_branch
        %297 = sbr.rel (%p294) target = $region12
      $region11: #{forward.6} parent=5 // pred_region
        %s298 = ssub.s32 %s23, 1
        // Predicated region
        $region13: #{forward.6} parent=11 // pred_check
          %p299 = pneg %p70
        $region14: #{forward.6} parent=11 // pred_check_branch
          %301 = sbr.rel (%p299) target = $region16
        $region15: #{forward.6} parent=11 // pred_region
          _
        $region16: #{forward.6} parent=11 // pred_fallthru
          _
        // Predicated region
        $region17: #{forward.6} parent=11 // pred_check
          %p302 = pneg %p91
        $region18: #{forward.6} parent=11 // pred_check_branch
          %304 = sbr.rel (%p302) target = $region20
        $region19: #{forward.6} parent=11 // pred_region
          _
        $region20: #{forward.6} parent=11 // pred_fallthru
          _
        // Predicated region
        $region21: #{forward.6} parent=11 // pred_check
          %p305 = pneg %p112
        $region22: #{forward.6} parent=11 // pred_check_branch
          %307 = sbr.rel (%p305) target = $region24
        $region23: #{forward.6} parent=11 // pred_region
          _
        $region24: #{forward.6} parent=11 // pred_fallthru
          _
        // Predicated region
        $region25: #{forward.6} parent=11 // pred_check
          %p308 = pneg %p133
        $region26: #{forward.6} parent=11 // pred_check_branch
          %310 = sbr.rel (%p308) target = $region28
        $region27: #{forward.6} parent=11 // pred_region
          _
        $region28: #{forward.6} parent=11 // pred_fallthru
          _
        // Predicated region
        $region29: #{forward.6} parent=11 // pred_check
          %p311 = pneg %p154
        $region30: #{forward.6} parent=11 // pred_check_branch
          %313 = sbr.rel (%p311) target = $region32
        $region31: #{forward.6} parent=11 // pred_region
          _
        $region32: #{forward.6} parent=11 // pred_fallthru
          _
      $region12: #{forward.6} parent=5 // pred_fallthru
        _
      %p314 = scmp.lt.s32.totalorder %s23, 8
      // Predicated region
      $region33: #{forward.6} parent=5 // pred_check
        %p315 = pneg %p314
      $region34: #{forward.6} parent=5 // pred_check_branch
        %317 = sbr.rel (%p315) target = $region36
      $region35: #{forward.6} parent=5 // pred_region
        // Predicated region
        $region37: #{forward.6} parent=35 // pred_check
          %p318 = pneg %p43
        $region38: #{forward.6} parent=35 // pred_check_branch
          %320 = sbr.rel (%p318) target = $region40
        $region39: #{forward.6} parent=35 // pred_region
          %p321 = scmp.lt.s32.totalorder %s23, 7
          %s322 = scalar_select %p321, %s23, 7
          %s323 = smul.addr %s322, 2
          %s324 = scalar_lea.vmem %s0, %s323
        $region40: #{forward.6} parent=35 // pred_fallthru
          _
        // Predicated region
        $region41: #{forward.6} parent=35 // pred_check
          %p325 = pneg %p174
        $region42: #{forward.6} parent=35 // pred_check_branch
          %327 = sbr.rel (%p325) target = $region44
        $region43: #{forward.6} parent=35 // pred_region
          %p328 = scmp.lt.s32.totalorder %s23, 7
          %s329 = scalar_select %p328, %s23, 7
          %s330 = smul.addr %s329, 4
          %s331 = smul.addr %s330, 8
          %s332 = scalar_lea.vmem %s6, %s331
        $region44: #{forward.6} parent=35 // pred_fallthru
          _
        // Predicated region
        $region45: #{forward.6} parent=35 // pred_check
          %p333 = pneg %p200
        $region46: #{forward.6} parent=35 // pred_check_branch
          %335 = sbr.rel (%p333) target = $region48
        $region47: #{forward.6} parent=35 // pred_region
          %p336 = scmp.lt.s32.totalorder %s23, 7
          %s337 = scalar_select %p336, %s23, 7
          %s338 = smul.addr %s337, 2
          %s339 = scalar_lea.vmem %s7, %s338
        $region48: #{forward.6} parent=35 // pred_fallthru
          _
      $region36: #{forward.6} parent=5 // pred_fallthru
        _
      %p340 = scmp.le.s32.totalorder 1, %s23
      %p341 = scmp.lt.s32.totalorder %s23, 9
      %p342 = pnand %p340, %p341
      %p343 = pneg %p342
      // Predicated region
      $region49: #{forward.6} parent=5 // pred_check
        _
      $region50: #{forward.6} parent=5 // pred_check_branch
        %345 = sbr.rel (%p342) target = $region52
      $region51: #{forward.6} parent=5 // pred_region
        %s346 = ssub.s32 %s23, 1
        %p347 = scmp.lt.s32.totalorder %s28, 7
        %s348 = scalar_select %p347, %s28, 7
        %s349 = smul.addr %s348, 2
        %s350 = scalar_lea.vmem %s0, %s349
        %p351 = pneg %p49
        %p352 = pneg %p46
        %p353 = pneg %p70
        %p354 = pneg %p67
        %p355 = pneg %p91
        %p356 = pneg %p88
        %p357 = pneg %p112
        %p358 = pneg %p109
        %p359 = pneg %p133
        %p360 = pneg %p130
        %p361 = pneg %p154
        %p362 = pneg %p151
        %p363 = scmp.lt.s32.totalorder %s28, 7
        %s364 = scalar_select %p363, %s28, 7
        %s365 = smul.addr %s364, 4
        %s366 = smul.addr %s365, 8
        %s367 = scalar_lea.vmem %s6, %s366
        %p368 = pneg %p180
        %p369 = pneg %p177
        %p370 = scmp.lt.s32.totalorder %s28, 7
        %s371 = scalar_select %p370, %s28, 7
        %s372 = smul.addr %s371, 2
        %s373 = scalar_lea.vmem %s7, %s372
        %p374 = pneg %p206
        %p375 = pneg %p203
        %p376 = pneg %p232
        %p377 = pneg %p229
        %p378 = scmp.lt.s32.totalorder %s28, 7
        %s379 = scalar_select %p378, %s28, 7
        %s380 = smul.addr %s379, 2
        %s381 = scalar_lea.vmem %s8, %s380
        %p382 = pneg %p258
        %p383 = pneg %p255
        %s384 = sand.u32 %s245, 1
        %s385 = scalar_lea.sflag [#allocation3], %s384
        %s386 = sand.u32 %s245, 1
        %s387 = smul.addr %s386, 32
        %s388 = scalar_lea.vmem [#allocation2], %s387
        %p389 = pneg %p284
        %p390 = pneg %p281
        %s391 = sand.u32 %s271, 1
        %s392 = scalar_lea.sflag [#allocation5], %s391
        %s393 = sand.u32 %s271, 1
        %s394 = smul.addr %s393, 2
        %s395 = scalar_lea.vmem [#allocation4], %s394
        %p396 = scmp.lt.s32.totalorder %s28, 7
        %s397 = scalar_select %p396, %s28, 7
        %s398 = smul.addr %s397, 2
        %s399 = scalar_lea.vmem %s0, %s398
        %p400 = scmp.lt.s32.totalorder %s28, 7
        %s401 = scalar_select %p400, %s28, 7
        %s402 = smul.addr %s401, 4
        %s403 = smul.addr %s402, 8
        %s404 = scalar_lea.vmem %s6, %s403
        %p405 = scmp.lt.s32.totalorder %s28, 7
        %s406 = scalar_select %p405, %s28, 7
        %s407 = smul.addr %s406, 2
        %s408 = scalar_lea.vmem %s7, %s407
        %p409 = scmp.lt.s32.totalorder %s28, 7
        %s410 = scalar_select %p409, %s28, 7
        %s411 = smul.addr %s410, 2
        %s412 = scalar_lea.vmem %s8, %s411
        %v414 = vld [vmem:[%s399] sm:$0x3]
        %v415 = vld [vmem:[%s1] sm:$0xf]
        %v416 = vld [vmem:[%s1 + $0x4] sm:$0xf]
        %v417 = vld [vmem:[%s1 + $0x8] sm:$0xf]
        %v418 = vld [vmem:[%s1 + $0xc] sm:$0xf]
        %v419 = vld [vmem:[%s1 + $0x10] sm:$0xf]
        %v420 = vld [vmem:[%s1 + $0x14] sm:$0xf]
        %v421 = vld [vmem:[%s1 + $0x18] sm:$0xf]
        %v422 = vld [vmem:[%s1 + $0x1c] sm:$0xf]
        %v427 = vunpack.c.l.b16 %v415
        %v428 = vunpack.c.l.b16 %v416
        %v429 = vunpack.c.l.b16 %v417
        %v430 = vunpack.c.l.b16 %v418
        %v431 = vpack.c.b16 %v428, %v427
        %v432 = vpack.c.b16 %v430, %v429
        %vm435 = vcmask 261120
        %v437 = vsel %vm435, %v414, 0
        %439 = vmatprep.subr.bf16.mxu0 0
        %440 = vmatpush1.bf16.msra.mxu0 %v431
        %441 = vmatprep.subr.bf16.mxu0 0
        %442 = vmatpush1.bf16.msra.mxu0 %v432
        %443 = vmatprep.subr.bf16.mxu0 0
        %444 = vmatpush1.bf16.msra.mxu0 0
        %445 = vmatprep.subr.bf16.mxu0 0
        %446 = vmatpush1.bf16.msra.mxu0 0
        %447 = vmatprep.subr.bf16.mxu0 0
        %448 = vmatpush1.bf16.msra.mxu0 0
        %449 = vmatprep.subr.bf16.mxu0 0
        %450 = vmatpush1.bf16.msra.mxu0 0
        %451 = vmatprep.subr.bf16.mxu0 0
        %452 = vmatpush1.bf16.msra.mxu0 0
        %453 = vmatprep.subr.bf16.mxu0 0
        %454 = vmatpush1.bf16.msra.mxu0 0
        %455 = vmatprep.subr.bf16.mxu0 0
        %456 = vmatpush1.bf16.msra.mxu0 0
        %457 = vmatprep.subr.bf16.mxu0 0
        %458 = vmatpush1.bf16.msra.mxu0 0
        %459 = vmatprep.subr.bf16.mxu0 0
        %460 = vmatpush1.bf16.msra.mxu0 0
        %461 = vmatprep.subr.bf16.mxu0 0
        %462 = vmatpush1.bf16.msra.mxu0 0
        %463 = vmatprep.subr.bf16.mxu0 0
        %464 = vmatpush1.bf16.msra.mxu0 0
        %465 = vmatprep.subr.bf16.mxu0 0
        %466 = vmatpush1.bf16.msra.mxu0 0
        %467 = vmatprep.subr.bf16.mxu0 0
        %468 = vmatpush1.bf16.msra.mxu0 0
        %469 = vmatprep.subr.bf16.mxu0 0
        %470 = vmatpush1.bf16.msra.mxu0 0
        %471 = vmatprep.mubr.bf16.mxu0 0
        %472 = vmatmul.mubr.bf16.gmra.mrb[0].mxu0 %v437
        %v473 = vpop.f32.mrb[0].mxu0
        %v474 = vadd.f32 0.0, %v473
        %v475 = vpop.f32.mrb[0].mxu0
        %v476 = vpop.f32.mrb[0].mxu0
        %v477 = vpop.f32.mrb[0].mxu0
        %478 = vdwg.mxu0
        %v483 = vunpack.c.l.b16 %v419
        %v484 = vunpack.c.l.b16 %v420
        %v485 = vunpack.c.l.b16 %v421
        %v486 = vunpack.c.l.b16 %v422
        %v487 = vpack.c.b16 %v484, %v483
        %v488 = vpack.c.b16 %v486, %v485
        %491 = vmatprep.subr.bf16.mxu0 0
        %492 = vmatpush1.bf16.msra.mxu0 %v487
        %493 = vmatprep.subr.bf16.mxu0 0
        %494 = vmatpush1.bf16.msra.mxu0 %v488
        %495 = vmatprep.subr.bf16.mxu0 0
        %496 = vmatpush1.bf16.msra.mxu0 0
        %497 = vmatprep.subr.bf16.mxu0 0
        %498 = vmatpush1.bf16.msra.mxu0 0
        %499 = vmatprep.subr.bf16.mxu0 0
        %500 = vmatpush1.bf16.msra.mxu0 0
        %501 = vmatprep.subr.bf16.mxu0 0
        %502 = vmatpush1.bf16.msra.mxu0 0
        %503 = vmatprep.subr.bf16.mxu0 0
        %504 = vmatpush1.bf16.msra.mxu0 0
        %505 = vmatprep.subr.bf16.mxu0 0
        %506 = vmatpush1.bf16.msra.mxu0 0
        %507 = vmatprep.subr.bf16.mxu0 0
        %508 = vmatpush1.bf16.msra.mxu0 0
        %509 = vmatprep.subr.bf16.mxu0 0
        %510 = vmatpush1.bf16.msra.mxu0 0
        %511 = vmatprep.subr.bf16.mxu0 0
        %512 = vmatpush1.bf16.msra.mxu0 0
        %513 = vmatprep.subr.bf16.mxu0 0
        %514 = vmatpush1.bf16.msra.mxu0 0
        %515 = vmatprep.subr.bf16.mxu0 0
        %516 = vmatpush1.bf16.msra.mxu0 0
        %517 = vmatprep.subr.bf16.mxu0 0
        %518 = vmatpush1.bf16.msra.mxu0 0
        %519 = vmatprep.subr.bf16.mxu0 0
        %520 = vmatpush1.bf16.msra.mxu0 0
        %521 = vmatprep.subr.bf16.mxu0 0
        %522 = vmatpush1.bf16.msra.mxu0 0
        %523 = vmatprep.mubr.bf16.mxu0 0
        %524 = vmatmul.mubr.bf16.gmra.mrb[0].mxu0 %v437
        %v525 = vpop.f32.mrb[0].mxu0
        %v526 = vadd.f32 0.0, %v525
        %v527 = vpop.f32.mrb[0].mxu0
        %v528 = vpop.f32.mrb[0].mxu0
        %v529 = vpop.f32.mrb[0].mxu0
        %530 = vdwg.mxu0
        %v531 = vld [vmem:[%s2] sm:$0xf]
        %v532 = vld [vmem:[%s2 + $0x4] sm:$0xf]
        %v533 = vld [vmem:[%s2 + $0x8] sm:$0xf]
        %v534 = vld [vmem:[%s2 + $0xc] sm:$0xf]
        %v535 = vld [vmem:[%s2 + $0x10] sm:$0xf]
        %v536 = vld [vmem:[%s2 + $0x14] sm:$0xf]
        %v537 = vld [vmem:[%s2 + $0x18] sm:$0xf]
        %v538 = vld [vmem:[%s2 + $0x1c] sm:$0xf]
        %v543 = vunpack.c.l.b16 %v531
        %v544 = vunpack.c.l.b16 %v532
        %v545 = vunpack.c.l.b16 %v533
        %v546 = vunpack.c.l.b16 %v534
        %v547 = vpack.c.b16 %v544, %v543
        %v548 = vpack.c.b16 %v546, %v545
        %551 = vmatprep.subr.bf16.mxu0 0
        %552 = vmatpush1.bf16.msra.mxu0 %v547
        %553 = vmatprep.subr.bf16.mxu0 0
        %554 = vmatpush1.bf16.msra.mxu0 %v548
        %555 = vmatprep.subr.bf16.mxu0 0
        %556 = vmatpush1.bf16.msra.mxu0 0
        %557 = vmatprep.subr.bf16.mxu0 0
        %558 = vmatpush1.bf16.msra.mxu0 0
        %559 = vmatprep.subr.bf16.mxu0 0
        %560 = vmatpush1.bf16.msra.mxu0 0
        %561 = vmatprep.subr.bf16.mxu0 0
        %562 = vmatpush1.bf16.msra.mxu0 0
        %563 = vmatprep.subr.bf16.mxu0 0
        %564 = vmatpush1.bf16.msra.mxu0 0
        %565 = vmatprep.subr.bf16.mxu0 0
        %566 = vmatpush1.bf16.msra.mxu0 0
        %567 = vmatprep.subr.bf16.mxu0 0
        %568 = vmatpush1.bf16.msra.mxu0 0
        %569 = vmatprep.subr.bf16.mxu0 0
        %570 = vmatpush1.bf16.msra.mxu0 0
        %571 = vmatprep.subr.bf16.mxu0 0
        %572 = vmatpush1.bf16.msra.mxu0 0
        %573 = vmatprep.subr.bf16.mxu0 0
        %574 = vmatpush1.bf16.msra.mxu0 0
        %575 = vmatprep.subr.bf16.mxu0 0
        %576 = vmatpush1.bf16.msra.mxu0 0
        %577 = vmatprep.subr.bf16.mxu0 0
        %578 = vmatpush1.bf16.msra.mxu0 0
        %579 = vmatprep.subr.bf16.mxu0 0
        %580 = vmatpush1.bf16.msra.mxu0 0
        %581 = vmatprep.subr.bf16.mxu0 0
        %582 = vmatpush1.bf16.msra.mxu0 0
        %583 = vmatprep.mubr.bf16.mxu0 0
        %584 = vmatmul.mubr.bf16.gmra.mrb[0].mxu0 %v437
        %v585 = vpop.f32.mrb[0].mxu0
        %v586 = vadd.f32 0.0, %v585
        %v587 = vpop.f32.mrb[0].mxu0
        %v588 = vpop.f32.mrb[0].mxu0
        %v589 = vpop.f32.mrb[0].mxu0
        %590 = vdwg.mxu0
        %v595 = vunpack.c.l.b16 %v535
        %v596 = vunpack.c.l.b16 %v536
        %v597 = vunpack.c.l.b16 %v537
        %v598 = vunpack.c.l.b16 %v538
        %v599 = vpack.c.b16 %v596, %v595
        %v600 = vpack.c.b16 %v598, %v597
        %603 = vmatprep.subr.bf16.mxu0 0
        %604 = vmatpush1.bf16.msra.mxu0 %v599
        %605 = vmatprep.subr.bf16.mxu0 0
        %606 = vmatpush1.bf16.msra.mxu0 %v600
        %607 = vmatprep.subr.bf16.mxu0 0
        %608 = vmatpush1.bf16.msra.mxu0 0
        %609 = vmatprep.subr.bf16.mxu0 0
        %610 = vmatpush1.bf16.msra.mxu0 0
        %611 = vmatprep.subr.bf16.mxu0 0
        %612 = vmatpush1.bf16.msra.mxu0 0
        %613 = vmatprep.subr.bf16.mxu0 0
        %614 = vmatpush1.bf16.msra.mxu0 0
        %615 = vmatprep.subr.bf16.mxu0 0
        %616 = vmatpush1.bf16.msra.mxu0 0
        %617 = vmatprep.subr.bf16.mxu0 0
        %618 = vmatpush1.bf16.msra.mxu0 0
        %619 = vmatprep.subr.bf16.mxu0 0
        %620 = vmatpush1.bf16.msra.mxu0 0
        %621 = vmatprep.subr.bf16.mxu0 0
        %622 = vmatpush1.bf16.msra.mxu0 0
        %623 = vmatprep.subr.bf16.mxu0 0
        %624 = vmatpush1.bf16.msra.mxu0 0
        %625 = vmatprep.subr.bf16.mxu0 0
        %626 = vmatpush1.bf16.msra.mxu0 0
        %627 = vmatprep.subr.bf16.mxu0 0
        %628 = vmatpush1.bf16.msra.mxu0 0
        %629 = vmatprep.subr.bf16.mxu0 0
        %630 = vmatpush1.bf16.msra.mxu0 0
        %631 = vmatprep.subr.bf16.mxu0 0
        %632 = vmatpush1.bf16.msra.mxu0 0
        %633 = vmatprep.subr.bf16.mxu0 0
        %634 = vmatpush1.bf16.msra.mxu0 0
        %635 = vmatprep.mubr.bf16.mxu0 0
        %636 = vmatmul.mubr.bf16.gmra.mrb[0].mxu0 %v437
        %v637 = vpop.f32.mrb[0].mxu0
        %v638 = vadd.f32 0.0, %v637
        %v639 = vpop.f32.mrb[0].mxu0
        %v640 = vpop.f32.mrb[0].mxu0
        %v641 = vpop.f32.mrb[0].mxu0
        %642 = vdwg.mxu0
        %v643 = vld [vmem:[%s3] sm:$0xf]
        %v644 = vld [vmem:[%s3 + $0x4] sm:$0xf]
        %v645 = vld [vmem:[%s3 + $0x8] sm:$0xf]
        %v646 = vld [vmem:[%s3 + $0xc] sm:$0xf]
        %v647 = vld [vmem:[%s3 + $0x10] sm:$0xf]
        %v648 = vld [vmem:[%s3 + $0x14] sm:$0xf]
        %v649 = vld [vmem:[%s3 + $0x18] sm:$0xf]
        %v650 = vld [vmem:[%s3 + $0x1c] sm:$0xf]
        %v655 = vunpack.c.l.b16 %v643
        %v656 = vunpack.c.l.b16 %v644
        %v657 = vunpack.c.l.b16 %v645
        %v658 = vunpack.c.l.b16 %v646
        %v659 = vpack.c.b16 %v656, %v655
        %v660 = vpack.c.b16 %v658, %v657
        %663 = vmatprep.subr.bf16.mxu0 0
        %664 = vmatpush1.bf16.msra.mxu0 %v659
        %665 = vmatprep.subr.bf16.mxu0 0
        %666 = vmatpush1.bf16.msra.mxu0 %v660
        %667 = vmatprep.subr.bf16.mxu0 0
        %668 = vmatpush1.bf16.msra.mxu0 0
        %669 = vmatprep.subr.bf16.mxu0 0
        %670 = vmatpush1.bf16.msra.mxu0 0
        %671 = vmatprep.subr.bf16.mxu0 0
        %672 = vmatpush1.bf16.msra.mxu0 0
        %673 = vmatprep.subr.bf16.mxu0 0
        %674 = vmatpush1.bf16.msra.mxu0 0
        %675 = vmatprep.subr.bf16.mxu0 0
        %676 = vmatpush1.bf16.msra.mxu0 0
        %677 = vmatprep.subr.bf16.mxu0 0
        %678 = vmatpush1.bf16.msra.mxu0 0
        %679 = vmatprep.subr.bf16.mxu0 0
        %680 = vmatpush1.bf16.msra.mxu0 0
        %681 = vmatprep.subr.bf16.mxu0 0
        %682 = vmatpush1.bf16.msra.mxu0 0
        %683 = vmatprep.subr.bf16.mxu0 0
        %684 = vmatpush1.bf16.msra.mxu0 0
        %685 = vmatprep.subr.bf16.mxu0 0
        %686 = vmatpush1.bf16.msra.mxu0 0
        %687 = vmatprep.subr.bf16.mxu0 0
        %688 = vmatpush1.bf16.msra.mxu0 0
        %689 = vmatprep.subr.bf16.mxu0 0
        %690 = vmatpush1.bf16.msra.mxu0 0
        %691 = vmatprep.subr.bf16.mxu0 0
        %692 = vmatpush1.bf16.msra.mxu0 0
        %693 = vmatprep.subr.bf16.mxu0 0
        %694 = vmatpush1.bf16.msra.mxu0 0
        %695 = vmatprep.mubr.bf16.mxu0 0
        %696 = vmatmul.mubr.bf16.gmra.mrb[0].mxu0 %v437
        %v697 = vpop.f32.mrb[0].mxu0
        %v698 = vadd.f32 0.0, %v697
        %v699 = vpop.f32.mrb[0].mxu0
        %v700 = vpop.f32.mrb[0].mxu0
        %v701 = vpop.f32.mrb[0].mxu0
        %702 = vdwg.mxu0
        %v707 = vunpack.c.l.b16 %v647
        %v708 = vunpack.c.l.b16 %v648
        %v709 = vunpack.c.l.b16 %v649
        %v710 = vunpack.c.l.b16 %v650
        %v711 = vpack.c.b16 %v708, %v707
        %v712 = vpack.c.b16 %v710, %v709
        %715 = vmatprep.subr.bf16.mxu0 0
        %716 = vmatpush1.bf16.msra.mxu0 %v711
        %717 = vmatprep.subr.bf16.mxu0 0
        %718 = vmatpush1.bf16.msra.mxu0 %v712
        %719 = vmatprep.subr.bf16.mxu0 0
        %720 = vmatpush1.bf16.msra.mxu0 0
        %721 = vmatprep.subr.bf16.mxu0 0
        %722 = vmatpush1.bf16.msra.mxu0 0
        %723 = vmatprep.subr.bf16.mxu0 0
        %724 = vmatpush1.bf16.msra.mxu0 0
        %725 = vmatprep.subr.bf16.mxu0 0
        %726 = vmatpush1.bf16.msra.mxu0 0
        %727 = vmatprep.subr.bf16.mxu0 0
        %728 = vmatpush1.bf16.msra.mxu0 0
        %729 = vmatprep.subr.bf16.mxu0 0
        %730 = vmatpush1.bf16.msra.mxu0 0
        %731 = vmatprep.subr.bf16.mxu0 0
        %732 = vmatpush1.bf16.msra.mxu0 0
        %733 = vmatprep.subr.bf16.mxu0 0
        %734 = vmatpush1.bf16.msra.mxu0 0
        %735 = vmatprep.subr.bf16.mxu0 0
        %736 = vmatpush1.bf16.msra.mxu0 0
        %737 = vmatprep.subr.bf16.mxu0 0
        %738 = vmatpush1.bf16.msra.mxu0 0
        %739 = vmatprep.subr.bf16.mxu0 0
        %740 = vmatpush1.bf16.msra.mxu0 0
        %741 = vmatprep.subr.bf16.mxu0 0
        %742 = vmatpush1.bf16.msra.mxu0 0
        %743 = vmatprep.subr.bf16.mxu0 0
        %744 = vmatpush1.bf16.msra.mxu0 0
        %745 = vmatprep.subr.bf16.mxu0 0
        %746 = vmatpush1.bf16.msra.mxu0 0
        %747 = vmatprep.mubr.bf16.mxu0 0
        %748 = vmatmul.mubr.bf16.gmra.mrb[0].mxu0 %v437
        %v749 = vpop.f32.mrb[0].mxu0
        %v750 = vadd.f32 0.0, %v749
        %v751 = vpop.f32.mrb[0].mxu0
        %v752 = vpop.f32.mrb[0].mxu0
        %v753 = vpop.f32.mrb[0].mxu0
        %754 = vdwg.mxu0
        %v755 = vmul.f32 %v474, 0.25
        %v756 = vmul.f32 %v526, 0.25
        %v757 = vpack.c.bf16 %v755, %v755
        %v758 = vpack.c.bf16 %v756, %v756
        %v759 = vpack.c.bf16 %v586, %v586
        %v760 = vpack.c.bf16 %v638, %v638
        %vm761 = vcmask 130048
        %v763 = vsel %vm761, %v757, 0
        %v766 = vsel %vm761, %v759, 0
        %768 = vmatprep.subr.bf16.mxu0 0
        %769 = vmatpush1.bf16.xpose.msra.mxu0 %v766
        %770 = vmatprep.subr.bf16.mxu0 0
        %771 = vmatpush1.bf16.xpose.msra.mxu0 0
        %772 = vmatprep.subr.bf16.mxu0 0
        %773 = vmatpush1.bf16.xpose.msra.mxu0 0
        %774 = vmatprep.subr.bf16.mxu0 0
        %775 = vmatpush1.bf16.xpose.msra.mxu0 0
        %776 = vmatprep.subr.bf16.mxu0 0
        %777 = vmatpush1.bf16.xpose.msra.mxu0 0
        %778 = vmatprep.subr.bf16.mxu0 0
        %779 = vmatpush1.bf16.xpose.msra.mxu0 0
        %780 = vmatprep.subr.bf16.mxu0 0
        %781 = vmatpush1.bf16.xpose.msra.mxu0 0
        %782 = vmatprep.subr.bf16.mxu0 0
        %783 = vmatpush1.bf16.xpose.msra.mxu0 0
        %784 = vmatprep.subr.bf16.mxu0 0
        %785 = vmatpush1.bf16.xpose.msra.mxu0 0
        %786 = vmatprep.subr.bf16.mxu0 0
        %787 = vmatpush1.bf16.xpose.msra.mxu0 0
        %788 = vmatprep.subr.bf16.mxu0 0
        %789 = vmatpush1.bf16.xpose.msra.mxu0 0
        %790 = vmatprep.subr.bf16.mxu0 0
        %791 = vmatpush1.bf16.xpose.msra.mxu0 0
        %792 = vmatprep.subr.bf16.mxu0 0
        %793 = vmatpush1.bf16.xpose.msra.mxu0 0
        %794 = vmatprep.subr.bf16.mxu0 0
        %795 = vmatpush1.bf16.xpose.msra.mxu0 0
        %796 = vmatprep.subr.bf16.mxu0 0
        %797 = vmatpush1.bf16.xpose.msra.mxu0 0
        %798 = vmatprep.subr.bf16.mxu0 0
        %799 = vmatpush1.bf16.xpose.msra.mxu0 0
        %800 = vmatprep.mubr.bf16.mxu0 0
        %801 = vmatmul.mubr.bf16.gmra.mrb[0].mxu0 %v763
        %v802 = vpop.f32.mrb[0].mxu0
        %v803 = vadd.f32 0.0, %v802
        %v804 = vpop.f32.mrb[0].mxu0
        %v805 = vpop.f32.mrb[0].mxu0
        %v806 = vpop.f32.mrb[0].mxu0
        %807 = vdwg.mxu0
        %v809 = vsel %vm761, %v758, 0
        %v812 = vsel %vm761, %v760, 0
        %814 = vmatprep.subr.bf16.mxu0 0
        %815 = vmatpush1.bf16.xpose.msra.mxu0 %v812
        %816 = vmatprep.subr.bf16.mxu0 0
        %817 = vmatpush1.bf16.xpose.msra.mxu0 0
        %818 = vmatprep.subr.bf16.mxu0 0
        %819 = vmatpush1.bf16.xpose.msra.mxu0 0
        %820 = vmatprep.subr.bf16.mxu0 0
        %821 = vmatpush1.bf16.xpose.msra.mxu0 0
        %822 = vmatprep.subr.bf16.mxu0 0
        %823 = vmatpush1.bf16.xpose.msra.mxu0 0
        %824 = vmatprep.subr.bf16.mxu0 0
        %825 = vmatpush1.bf16.xpose.msra.mxu0 0
        %826 = vmatprep.subr.bf16.mxu0 0
        %827 = vmatpush1.bf16.xpose.msra.mxu0 0
        %828 = vmatprep.subr.bf16.mxu0 0
        %829 = vmatpush1.bf16.xpose.msra.mxu0 0
        %830 = vmatprep.subr.bf16.mxu0 0
        %831 = vmatpush1.bf16.xpose.msra.mxu0 0
        %832 = vmatprep.subr.bf16.mxu0 0
        %833 = vmatpush1.bf16.xpose.msra.mxu0 0
        %834 = vmatprep.subr.bf16.mxu0 0
        %835 = vmatpush1.bf16.xpose.msra.mxu0 0
        %836 = vmatprep.subr.bf16.mxu0 0
        %837 = vmatpush1.bf16.xpose.msra.mxu0 0
        %838 = vmatprep.subr.bf16.mxu0 0
        %839 = vmatpush1.bf16.xpose.msra.mxu0 0
        %840 = vmatprep.subr.bf16.mxu0 0
        %841 = vmatpush1.bf16.xpose.msra.mxu0 0
        %842 = vmatprep.subr.bf16.mxu0 0
        %843 = vmatpush1.bf16.xpose.msra.mxu0 0
        %844 = vmatprep.subr.bf16.mxu0 0
        %845 = vmatpush1.bf16.xpose.msra.mxu0 0
        %846 = vmatprep.mubr.bf16.mxu0 0
        %847 = vmatmul.mubr.bf16.gmra.mrb[0].mxu0 %v809
        %v848 = vpop.f32.mrb[0].mxu0
        %v849 = vadd.f32 0.0, %v848
        %v850 = vpop.f32.mrb[0].mxu0
        %v851 = vpop.f32.mrb[0].mxu0
        %v852 = vpop.f32.mrb[0].mxu0
        %853 = vdwg.mxu0
        %v854 = vlaneseq
        %v855 = vshrl.u32 %v854, 7
        %v856 = vlaneseq
        %v857 = vand.u32 %v856, 127
        %vm858 = vcmp.le.s32.totalorder %v857, %v855
        %v859 = vsel %vm858, %v803, -1e+30
        %v860 = vsel %vm858, %v849, -1e+30
        %vm861 = vcmask 27648
        %v862 = vsel %vm861, %v859, -inf
        %863 = vmax.xlane.f32.xlu0 %v862
        %v864 = vpop.xlane.xlu0 %863
        %v865 = vsel %vm861, %v860, -inf
        %866 = vmax.xlane.f32.xlu0 %v865
        %v867 = vpop.xlane.xlu0 %866
        %v868 = vsub.f32 %v859, %v864
        %v869 = vsub.f32 %v860, %v867
        %v870 = vmul.f32 %v868, 1.442695
        %v871 = vpow.pop %v870
        %v872 = vmul.f32 %v869, 1.442695
        %v873 = vpow.pop %v872
        %v874 = vsel %vm861, %v871, 0.0
        %875 = vadd.xlane.f32.xlu0 %v874
        %v876 = vpop.xlane.xlu0 %875
        %v877 = vsel %vm861, %v873, 0.0
        %878 = vadd.xlane.f32.xlu0 %v877
        %v879 = vpop.xlane.xlu0 %878
        %v880 = vrcp.pop %v876
        %v881 = vrcp.pop %v879
        %v882 = vmul.f32 %v871, %v880
        %v883 = vmul.f32 %v873, %v881
        %v884 = vpack.c.bf16 %v882, %v882
        %v885 = vpack.c.bf16 %v883, %v883
        %v886 = vpack.c.bf16 %v698, %v698
        %v887 = vpack.c.bf16 %v750, %v750
        %vm888 = vcmask 31744
        %v890 = vsel %vm888, %v884, 0
        %vm892 = vcmask 1041408
        %v894 = vsel %vm892, %v886, 0
        %896 = vmatprep.subr.bf16.mxu0 0
        %897 = vmatpush1.bf16.msra.mxu0 %v894
        %898 = vmatprep.subr.bf16.mxu0 0
        %899 = vmatpush1.bf16.msra.mxu0 0
        %900 = vmatprep.subr.bf16.mxu0 0
        %901 = vmatpush1.bf16.msra.mxu0 0
        %902 = vmatprep.subr.bf16.mxu0 0
        %903 = vmatpush1.bf16.msra.mxu0 0
        %904 = vmatprep.subr.bf16.mxu0 0
        %905 = vmatpush1.bf16.msra.mxu0 0
        %906 = vmatprep.subr.bf16.mxu0 0
        %907 = vmatpush1.bf16.msra.mxu0 0
        %908 = vmatprep.subr.bf16.mxu0 0
        %909 = vmatpush1.bf16.msra.mxu0 0
        %910 = vmatprep.subr.bf16.mxu0 0
        %911 = vmatpush1.bf16.msra.mxu0 0
        %912 = vmatprep.subr.bf16.mxu0 0
        %913 = vmatpush1.bf16.msra.mxu0 0
        %914 = vmatprep.subr.bf16.mxu0 0
        %915 = vmatpush1.bf16.msra.mxu0 0
        %916 = vmatprep.subr.bf16.mxu0 0
        %917 = vmatpush1.bf16.msra.mxu0 0
        %918 = vmatprep.subr.bf16.mxu0 0
        %919 = vmatpush1.bf16.msra.mxu0 0
        %920 = vmatprep.subr.bf16.mxu0 0
        %921 = vmatpush1.bf16.msra.mxu0 0
        %922 = vmatprep.subr.bf16.mxu0 0
        %923 = vmatpush1.bf16.msra.mxu0 0
        %924 = vmatprep.subr.bf16.mxu0 0
        %925 = vmatpush1.bf16.msra.mxu0 0
        %926 = vmatprep.subr.bf16.mxu0 0
        %927 = vmatpush1.bf16.msra.mxu0 0
        %928 = vmatprep.mubr.bf16.mxu0 0
        %929 = vmatmul.mubr.bf16.gmra.mrb[0].mxu0 %v890
        %v930 = vpop.f32.mrb[0].mxu0
        %v931 = vadd.f32 0.0, %v930
        %v932 = vpop.f32.mrb[0].mxu0
        %v933 = vpop.f32.mrb[0].mxu0
        %v934 = vpop.f32.mrb[0].mxu0
        %935 = vdwg.mxu0
        %v937 = vsel %vm888, %v885, 0
        %v940 = vsel %vm892, %v887, 0
        %942 = vmatprep.subr.bf16.mxu0 0
        %943 = vmatpush1.bf16.msra.mxu0 %v940
        %944 = vmatprep.subr.bf16.mxu0 0
        %945 = vmatpush1.bf16.msra.mxu0 0
        %946 = vmatprep.subr.bf16.mxu0 0
        %947 = vmatpush1.bf16.msra.mxu0 0
        %948 = vmatprep.subr.bf16.mxu0 0
        %949 = vmatpush1.bf16.msra.mxu0 0
        %950 = vmatprep.subr.bf16.mxu0 0
        %951 = vmatpush1.bf16.msra.mxu0 0
        %952 = vmatprep.subr.bf16.mxu0 0
        %953 = vmatpush1.bf16.msra.mxu0 0
        %954 = vmatprep.subr.bf16.mxu0 0
        %955 = vmatpush1.bf16.msra.mxu0 0
        %956 = vmatprep.subr.bf16.mxu0 0
        %957 = vmatpush1.bf16.msra.mxu0 0
        %958 = vmatprep.subr.bf16.mxu0 0
        %959 = vmatpush1.bf16.msra.mxu0 0
        %960 = vmatprep.subr.bf16.mxu0 0
        %961 = vmatpush1.bf16.msra.mxu0 0
        %962 = vmatprep.subr.bf16.mxu0 0
        %963 = vmatpush1.bf16.msra.mxu0 0
        %964 = vmatprep.subr.bf16.mxu0 0
        %965 = vmatpush1.bf16.msra.mxu0 0
        %966 = vmatprep.subr.bf16.mxu0 0
        %967 = vmatpush1.bf16.msra.mxu0 0
        %968 = vmatprep.subr.bf16.mxu0 0
        %969 = vmatpush1.bf16.msra.mxu0 0
        %970 = vmatprep.subr.bf16.mxu0 0
        %971 = vmatpush1.bf16.msra.mxu0 0
        %972 = vmatprep.subr.bf16.mxu0 0
        %973 = vmatpush1.bf16.msra.mxu0 0
        %974 = vmatprep.mubr.bf16.mxu0 0
        %975 = vmatmul.mubr.bf16.gmra.mrb[0].mxu0 %v937
        %v976 = vpop.f32.mrb[0].mxu0
        %v977 = vadd.f32 0.0, %v976
        %v978 = vpop.f32.mrb[0].mxu0
        %v979 = vpop.f32.mrb[0].mxu0
        %v980 = vpop.f32.mrb[0].mxu0
        %981 = vdwg.mxu0
        %vm982 = vcmp.gt.f32.partialorder %v474, 0.0
        %vm983 = vcmp.gt.f32.partialorder %v526, 0.0
        %v984 = vadd.f32 %v474, 1.0
        %v985 = vadd.f32 %v526, 1.0
        %v986 = vmul.f32 %v474, 1.442695
        %v987 = vpow.pop %v986
        %v988 = vmul.f32 %v526, 1.442695
        %v989 = vpow.pop %v988
        %v990 = vsel %vm982, %v984, %v987
        %v991 = vsel %vm983, %v985, %v989
        %v992 = vld [vmem:[%s404] sm:$0xff]
        %v993 = vld [vmem:[%s404 + $0x8] sm:$0xff]
        %v994 = vld [vmem:[%s404 + $0x10] sm:$0xff]
        %v995 = vld [vmem:[%s404 + $0x18] sm:$0xff]
        %v996 = vld [vmem:[%s408] sm:$0x3]
        %v998 = vsel %vm761, %v990, 0
        %1000 = vmatprep.subr.mxu0 0.0
        %1001 = vmatpush1.msra.mxu0 %v992
        %1002 = vmatprep.subr.mxu0 0.0
        %1003 = vmatpush1.msra.mxu0 %v993
        %1004 = vmatprep.subr.mxu0 0.0
        %1005 = vmatpush1.msra.mxu0 0.0
        %1006 = vmatprep.subr.mxu0 0.0
        %1007 = vmatpush1.msra.mxu0 0.0
        %1008 = vmatprep.subr.mxu0 0.0
        %1009 = vmatpush1.msra.mxu0 0.0
        %1010 = vmatprep.subr.mxu0 0.0
        %1011 = vmatpush1.msra.mxu0 0.0
        %1012 = vmatprep.subr.mxu0 0.0
        %1013 = vmatpush1.msra.mxu0 0.0
        %1014 = vmatprep.subr.mxu0 0.0
        %1015 = vmatpush1.msra.mxu0 0.0
        %1016 = vmatprep.subr.mxu0 0.0
        %1017 = vmatpush1.msra.mxu0 0.0
        %1018 = vmatprep.subr.mxu0 0.0
        %1019 = vmatpush1.msra.mxu0 0.0
        %1020 = vmatprep.subr.mxu0 0.0
        %1021 = vmatpush1.msra.mxu0 0.0
        %1022 = vmatprep.subr.mxu0 0.0
        %1023 = vmatpush1.msra.mxu0 0.0
        %1024 = vmatprep.subr.mxu0 0.0
        %1025 = vmatpush1.msra.mxu0 0.0
        %1026 = vmatprep.subr.mxu0 0.0
        %1027 = vmatpush1.msra.mxu0 0.0
        %1028 = vmatprep.subr.mxu0 0.0
        %1029 = vmatpush1.msra.mxu0 0.0
        %1030 = vmatprep.subr.mxu0 0.0
        %1031 = vmatpush1.msra.mxu0 0.0
        %1032 = vmatprep.subr.mxu0 0.0
        %1033 = vmatpush1.msra.mxu0 0.0
        %1034 = vmatprep.subr.mxu0 0.0
        %1035 = vmatpush1.msra.mxu0 0.0
        %1036 = vmatprep.subr.mxu0 0.0
        %1037 = vmatpush1.msra.mxu0 0.0
        %1038 = vmatprep.subr.mxu0 0.0
        %1039 = vmatpush1.msra.mxu0 0.0
        %1040 = vmatprep.subr.mxu0 0.0
        %1041 = vmatpush1.msra.mxu0 0.0
        %1042 = vmatprep.subr.mxu0 0.0
        %1043 = vmatpush1.msra.mxu0 0.0
        %1044 = vmatprep.subr.mxu0 0.0
        %1045 = vmatpush1.msra.mxu0 0.0
        %1046 = vmatprep.subr.mxu0 0.0
        %1047 = vmatpush1.msra.mxu0 0.0
        %1048 = vmatprep.subr.mxu0 0.0
        %1049 = vmatpush1.msra.mxu0 0.0
        %1050 = vmatprep.subr.mxu0 0.0
        %1051 = vmatpush1.msra.mxu0 0.0
        %1052 = vmatprep.subr.mxu0 0.0
        %1053 = vmatpush1.msra.mxu0 0.0
        %1054 = vmatprep.subr.mxu0 0.0
        %1055 = vmatpush1.msra.mxu0 0.0
        %1056 = vmatprep.subr.mxu0 0.0
        %1057 = vmatpush1.msra.mxu0 0.0
        %1058 = vmatprep.subr.mxu0 0.0
        %1059 = vmatpush1.msra.mxu0 0.0
        %1060 = vmatprep.subr.mxu0 0.0
        %1061 = vmatpush1.msra.mxu0 0.0
        %1062 = vmatprep.subr.mxu0 0.0
        %1063 = vmatpush1.msra.mxu0 0.0
        %1064 = vmatprep.mubr.f32.mxu0 0.0
        %1065 = vmatmul.mubr.f32.gmra.mrb[0].mxu0 %v998
        %v1066 = vpop.f32.mrb[0].mxu0
        %v1067 = vadd.f32 0.0, %v1066
        %v1068 = vpop.f32.mrb[0].mxu0
        %1069 = vdwg.mxu0
        %v1071 = vsel %vm761, %v991, 0
        %1073 = vmatprep.subr.mxu0 0.0
        %1074 = vmatpush1.msra.mxu0 %v994
        %1075 = vmatprep.subr.mxu0 0.0
        %1076 = vmatpush1.msra.mxu0 %v995
        %1077 = vmatprep.subr.mxu0 0.0
        %1078 = vmatpush1.msra.mxu0 0.0
        %1079 = vmatprep.subr.mxu0 0.0
        %1080 = vmatpush1.msra.mxu0 0.0
        %1081 = vmatprep.subr.mxu0 0.0
        %1082 = vmatpush1.msra.mxu0 0.0
        %1083 = vmatprep.subr.mxu0 0.0
        %1084 = vmatpush1.msra.mxu0 0.0
        %1085 = vmatprep.subr.mxu0 0.0
        %1086 = vmatpush1.msra.mxu0 0.0
        %1087 = vmatprep.subr.mxu0 0.0
        %1088 = vmatpush1.msra.mxu0 0.0
        %1089 = vmatprep.subr.mxu0 0.0
        %1090 = vmatpush1.msra.mxu0 0.0
        %1091 = vmatprep.subr.mxu0 0.0
        %1092 = vmatpush1.msra.mxu0 0.0
        %1093 = vmatprep.subr.mxu0 0.0
        %1094 = vmatpush1.msra.mxu0 0.0
        %1095 = vmatprep.subr.mxu0 0.0
        %1096 = vmatpush1.msra.mxu0 0.0
        %1097 = vmatprep.subr.mxu0 0.0
        %1098 = vmatpush1.msra.mxu0 0.0
        %1099 = vmatprep.subr.mxu0 0.0
        %1100 = vmatpush1.msra.mxu0 0.0
        %1101 = vmatprep.subr.mxu0 0.0
        %1102 = vmatpush1.msra.mxu0 0.0
        %1103 = vmatprep.subr.mxu0 0.0
        %1104 = vmatpush1.msra.mxu0 0.0
        %1105 = vmatprep.subr.mxu0 0.0
        %1106 = vmatpush1.msra.mxu0 0.0
        %1107 = vmatprep.subr.mxu0 0.0
        %1108 = vmatpush1.msra.mxu0 0.0
        %1109 = vmatprep.subr.mxu0 0.0
        %1110 = vmatpush1.msra.mxu0 0.0
        %1111 = vmatprep.subr.mxu0 0.0
        %1112 = vmatpush1.msra.mxu0 0.0
        %1113 = vmatprep.subr.mxu0 0.0
        %1114 = vmatpush1.msra.mxu0 0.0
        %1115 = vmatprep.subr.mxu0 0.0
        %1116 = vmatpush1.msra.mxu0 0.0
        %1117 = vmatprep.subr.mxu0 0.0
        %1118 = vmatpush1.msra.mxu0 0.0
        %1119 = vmatprep.subr.mxu0 0.0
        %1120 = vmatpush1.msra.mxu0 0.0
        %1121 = vmatprep.subr.mxu0 0.0
        %1122 = vmatpush1.msra.mxu0 0.0
        %1123 = vmatprep.subr.mxu0 0.0
        %1124 = vmatpush1.msra.mxu0 0.0
        %1125 = vmatprep.subr.mxu0 0.0
        %1126 = vmatpush1.msra.mxu0 0.0
        %1127 = vmatprep.subr.mxu0 0.0
        %1128 = vmatpush1.msra.mxu0 0.0
        %1129 = vmatprep.subr.mxu0 0.0
        %1130 = vmatpush1.msra.mxu0 0.0
        %1131 = vmatprep.subr.mxu0 0.0
        %1132 = vmatpush1.msra.mxu0 0.0
        %1133 = vmatprep.subr.mxu0 0.0
        %1134 = vmatpush1.msra.mxu0 0.0
        %1135 = vmatprep.subr.mxu0 0.0
        %1136 = vmatpush1.msra.mxu0 0.0
        %1137 = vmatprep.mubr.f32.mxu0 0.0
        %1138 = vmatmul.mubr.f32.gmra.mrb[0].mxu0 %v1071
        %v1139 = vpop.f32.mrb[0].mxu0
        %v1140 = vadd.f32 0.0, %v1139
        %v1141 = vpop.f32.mrb[0].mxu0
        %1142 = vdwg.mxu0
        %v1145 = vunpack.c.l.s4 1966171168
        %v1146 = vunpack.c.0.s8 %v1145
        %v1147 = vlaneseq
        %v1148 = vshrl.u32 %v1147, 7
        %v1149 = vsub.s32 %v1146, %v1148
        %v1150 = vrot.slane %v996, %v1149
        %v1151 = vcombine.high %v1150, %v1150
        %v1153 = vunpack.c.l.s4 1966171168
        %v1154 = vunpack.c.0.s8 %v1153
        %v1155 = vlaneseq
        %v1156 = vshrl.u32 %v1155, 7
        %v1157 = vsub.s32 %v1154, %v1156
        %v1158 = vrot.slane %v1150, %v1157
        %v1160 = vunpack.c.l.s4 1966171168
        %v1161 = vunpack.c.0.s8 %v1160
        %v1162 = vlaneseq
        %v1163 = vshrl.u32 %v1162, 7
        %v1164 = vsub.s32 %v1161, %v1163
        %v1165 = vrot.slane %v1151, %v1164
        %v1166 = vlaneseq
        %v1167 = vshrl.u32 %v1166, 7
        %v1168 = vsub.s32 0, %v1167
        %v1169 = vrot.slane %v1158, %v1168
        %v1170 = vlaneseq
        %v1171 = vshrl.u32 %v1170, 7
        %v1172 = vsub.s32 0, %v1171
        %v1173 = vrot.slane %v1165, %v1172
        %v1176 = vmul.f32 %v990, %v1169
        %v1177 = vmul.f32 %v991, %v1173
        %vm1178 = vcmask 125952
        %v1179 = vsel %vm1178, %v1176, 0.0
        %1180 = vadd.xlane.f32.xlu0 %v1179
        %v1181 = vpop.xlane.xlu0 %1180
        %v1182 = vsel %vm1178, %v1177, 0.0
        %1183 = vadd.xlane.f32.xlu0 %v1182
        %v1184 = vpop.xlane.xlu0 %1183
        %v1185 = vadd.f32 %v1181, 1e-06
        %v1186 = vadd.f32 %v1184, 1e-06
        %v1187 = vrcp.pop %v1185
        %v1188 = vrcp.pop %v1186
        %v1189 = vmul.f32 %v1067, %v1187
        %v1190 = vmul.f32 %v1140, %v1188
        %v1191 = vld [vmem:[%s5] sm:$0x1]
        %v1192 = vld [vmem:[%s5 + $0x1] sm:$0x1]
        %v1193 = vxor.u32 %v1191, 2147483648
        %v1194 = vxor.u32 %v1192, 2147483648
        %v1195 = vmul.f32 %v1193, 1.442695
        %v1196 = vpow.pop %v1195
        %v1197 = vmul.f32 %v1194, 1.442695
        %v1198 = vpow.pop %v1197
        %v1199 = vadd.f32 %v1196, 1.0
        %v1200 = vadd.f32 %v1198, 1.0
        %v1201 = vrcp.pop %v1199
        %v1202 = vmul.f32 1.0, %v1201
        %v1203 = vrcp.pop %v1200
        %v1204 = vmul.f32 1.0, %v1203
        %v1207 = vlaneseq
        %v1208 = vshrl.u32 %v1207, 7
        %v1209 = vsub.s32 0, %v1208
        %v1210 = vrot.slane %v1202, %v1209
        %v1211 = vlaneseq
        %v1212 = vshrl.u32 %v1211, 7
        %v1213 = vsub.s32 0, %v1212
        %v1214 = vrot.slane %v1204, %v1213
        %1215 = vset.pattern.permute.xlu0 0
        %1216 = vperm.xlu0 %1215, %v1210
        %v1217 = vpop.permute.xlu0 %1216
        %1219 = vset.pattern.permute.xlu0 0
        %1220 = vperm.xlu0 %1219, %v1214
        %v1221 = vpop.permute.xlu0 %1220
        %v1223 = vmul.f32 %v1217, %v1189
        %v1224 = vmul.f32 %v1221, %v1190
        %v1225 = vsub.f32 1.0, %v1202
        %v1226 = vsub.f32 1.0, %v1204
        %v1229 = vlaneseq
        %v1230 = vshrl.u32 %v1229, 7
        %v1231 = vsub.s32 0, %v1230
        %v1232 = vrot.slane %v1225, %v1231
        %v1233 = vlaneseq
        %v1234 = vshrl.u32 %v1233, 7
        %v1235 = vsub.s32 0, %v1234
        %v1236 = vrot.slane %v1226, %v1235
        %1237 = vset.pattern.permute.xlu0 0
        %1238 = vperm.xlu0 %1237, %v1232
        %v1239 = vpop.permute.xlu0 %1238
        %1241 = vset.pattern.permute.xlu0 0
        %1242 = vperm.xlu0 %1241, %v1236
        %v1243 = vpop.permute.xlu0 %1242
        %v1245 = vmul.f32 %v1239, %v931
        %v1246 = vmul.f32 %v1243, %v977
        %v1247 = vadd.f32 %v1223, %v1245
        %v1248 = vadd.f32 %v1224, %v1246
        %v1249 = vpack.c.bf16 %v1247, %v1247
        %v1250 = vpack.c.bf16 %v1248, %v1248
        %v1251 = vld [vmem:[%s4] sm:$0xf]
        %v1252 = vld [vmem:[%s4 + $0x4] sm:$0xf]
        %v1253 = vld [vmem:[%s4 + $0x8] sm:$0xf]
        %v1254 = vld [vmem:[%s4 + $0xc] sm:$0xf]
        %v1257 = vunpack.c.l.b16 %v1251
        %v1258 = vunpack.c.l.b16 %v1252
        %v1259 = vpack.c.b16 %v1258, %v1257
        %v1262 = vsel %vm761, %v1249, 0
        %1264 = vmatprep.subr.bf16.mxu0 0
        %1265 = vmatpush1.bf16.msra.mxu0 %v1259
        %1266 = vmatprep.subr.bf16.mxu0 0
        %1267 = vmatpush1.bf16.msra.mxu0 0
        %1268 = vmatprep.subr.bf16.mxu0 0
        %1269 = vmatpush1.bf16.msra.mxu0 0
        %1270 = vmatprep.subr.bf16.mxu0 0
        %1271 = vmatpush1.bf16.msra.mxu0 0
        %1272 = vmatprep.subr.bf16.mxu0 0
        %1273 = vmatpush1.bf16.msra.mxu0 0
        %1274 = vmatprep.subr.bf16.mxu0 0
        %1275 = vmatpush1.bf16.msra.mxu0 0
        %1276 = vmatprep.subr.bf16.mxu0 0
        %1277 = vmatpush1.bf16.msra.mxu0 0
        %1278 = vmatprep.subr.bf16.mxu0 0
        %1279 = vmatpush1.bf16.msra.mxu0 0
        %1280 = vmatprep.subr.bf16.mxu0 0
        %1281 = vmatpush1.bf16.msra.mxu0 0
        %1282 = vmatprep.subr.bf16.mxu0 0
        %1283 = vmatpush1.bf16.msra.mxu0 0
        %1284 = vmatprep.subr.bf16.mxu0 0
        %1285 = vmatpush1.bf16.msra.mxu0 0
        %1286 = vmatprep.subr.bf16.mxu0 0
        %1287 = vmatpush1.bf16.msra.mxu0 0
        %1288 = vmatprep.subr.bf16.mxu0 0
        %1289 = vmatpush1.bf16.msra.mxu0 0
        %1290 = vmatprep.subr.bf16.mxu0 0
        %1291 = vmatpush1.bf16.msra.mxu0 0
        %1292 = vmatprep.subr.bf16.mxu0 0
        %1293 = vmatpush1.bf16.msra.mxu0 0
        %1294 = vmatprep.subr.bf16.mxu0 0
        %1295 = vmatpush1.bf16.msra.mxu0 0
        %1296 = vmatprep.mubr.bf16.mxu0 0
        %1297 = vmatmul.mubr.bf16.gmra.mrb[0].mxu0 %v1262
        %v1298 = vpop.f32.mrb[0].mxu0
        %v1299 = vadd.f32 0.0, %v1298
        %v1300 = vpop.f32.mrb[0].mxu0
        %v1301 = vpop.f32.mrb[0].mxu0
        %v1302 = vpop.f32.mrb[0].mxu0
        %1303 = vdwg.mxu0
        %v1306 = vunpack.c.l.b16 %v1253
        %v1307 = vunpack.c.l.b16 %v1254
        %v1308 = vpack.c.b16 %v1307, %v1306
        %v1311 = vsel %vm761, %v1250, 0
        %1313 = vmatprep.subr.bf16.mxu0 0
        %1314 = vmatpush1.bf16.msra.mxu0 %v1308
        %1315 = vmatprep.subr.bf16.mxu0 0
        %1316 = vmatpush1.bf16.msra.mxu0 0
        %1317 = vmatprep.subr.bf16.mxu0 0
        %1318 = vmatpush1.bf16.msra.mxu0 0
        %1319 = vmatprep.subr.bf16.mxu0 0
        %1320 = vmatpush1.bf16.msra.mxu0 0
        %1321 = vmatprep.subr.bf16.mxu0 0
        %1322 = vmatpush1.bf16.msra.mxu0 0
        %1323 = vmatprep.subr.bf16.mxu0 0
        %1324 = vmatpush1.bf16.msra.mxu0 0
        %1325 = vmatprep.subr.bf16.mxu0 0
        %1326 = vmatpush1.bf16.msra.mxu0 0
        %1327 = vmatprep.subr.bf16.mxu0 0
        %1328 = vmatpush1.bf16.msra.mxu0 0
        %1329 = vmatprep.subr.bf16.mxu0 0
        %1330 = vmatpush1.bf16.msra.mxu0 0
        %1331 = vmatprep.subr.bf16.mxu0 0
        %1332 = vmatpush1.bf16.msra.mxu0 0
        %1333 = vmatprep.subr.bf16.mxu0 0
        %1334 = vmatpush1.bf16.msra.mxu0 0
        %1335 = vmatprep.subr.bf16.mxu0 0
        %1336 = vmatpush1.bf16.msra.mxu0 0
        %1337 = vmatprep.subr.bf16.mxu0 0
        %1338 = vmatpush1.bf16.msra.mxu0 0
        %1339 = vmatprep.subr.bf16.mxu0 0
        %1340 = vmatpush1.bf16.msra.mxu0 0
        %1341 = vmatprep.subr.bf16.mxu0 0
        %1342 = vmatpush1.bf16.msra.mxu0 0
        %1343 = vmatprep.subr.bf16.mxu0 0
        %1344 = vmatpush1.bf16.msra.mxu0 0
        %1345 = vmatprep.mubr.bf16.mxu0 0
        %1346 = vmatmul.mubr.bf16.gmra.mrb[0].mxu0 %v1311
        %v1347 = vpop.f32.mrb[0].mxu0
        %v1348 = vadd.f32 0.0, %v1347
        %v1349 = vpop.f32.mrb[0].mxu0
        %v1350 = vpop.f32.mrb[0].mxu0
        %v1351 = vpop.f32.mrb[0].mxu0
        %1352 = vdwg.mxu0
        %v1353 = vunpack.c.l.bf16 %v414
        %vm1354 = vcmask 257024
        %v1355 = vsel %vm1354, %v1299, 0.0
        %v1356 = vsel %vm1354, %v1348, 0.0
        %v1357 = vadd.f32 %v1355, %v1356
        %v1358 = vadd.f32 %v1353, %v1357
        %v1359 = vpack.c.bf16 %v1358, %v1358
        %vm1360 = vcmask 254976
        %1361 = vst.msk [vmem:[%s412] sm:$0x3] %vm1360, %v1359
        %vm1362 = vcmp.gt.f32.partialorder %v586, 0.0
        %vm1363 = vcmp.gt.f32.partialorder %v638, 0.0
        %v1364 = vadd.f32 %v586, 1.0
        %v1365 = vadd.f32 %v638, 1.0
        %v1366 = vmul.f32 %v586, 1.442695
        %v1367 = vpow.pop %v1366
        %v1368 = vmul.f32 %v638, 1.442695
        %v1369 = vpow.pop %v1368
        %v1370 = vsel %vm1362, %v1364, %v1367
        %v1371 = vsel %vm1363, %v1365, %v1369
        %1372 = vxpose.xlu0.b32.start [1/16] %v1370, 128
        %1373 = vxpose.xlu0.b32.cont [2/16] 0.0, 128
        %1374 = vxpose.xlu0.b32.cont [3/16] 0.0, 128
        %1375 = vxpose.xlu0.b32.cont [4/16] 0.0, 128
        %1376 = vxpose.xlu0.b32.cont [5/16] 0.0, 128
        %1377 = vxpose.xlu0.b32.cont [6/16] 0.0, 128
        %1378 = vxpose.xlu0.b32.cont [7/16] 0.0, 128
        %1379 = vxpose.xlu0.b32.cont [8/16] 0.0, 128
        %1380 = vxpose.xlu0.b32.cont [9/16] 0.0, 128
        %1381 = vxpose.xlu0.b32.cont [10/16] 0.0, 128
        %1382 = vxpose.xlu0.b32.cont [11/16] 0.0, 128
        %1383 = vxpose.xlu0.b32.cont [12/16] 0.0, 128
        %1384 = vxpose.xlu0.b32.cont [13/16] 0.0, 128
        %1385 = vxpose.xlu0.b32.cont [14/16] 0.0, 128
        %1386 = vxpose.xlu0.b32.cont [15/16] 0.0, 128
        %1387 = vxpose.xlu0.b32.end [16/16] 0.0, 128
        %v1388 = vpop.trf.xlu0
        %v1389 = vpop.trf.xlu0
        %v1390 = vpop.trf.xlu0
        %v1391 = vpop.trf.xlu0
        %v1392 = vpop.trf.xlu0
        %v1393 = vpop.trf.xlu0
        %v1394 = vpop.trf.xlu0
        %v1395 = vpop.trf.xlu0
        %v1396 = vpop.trf.xlu0
        %v1397 = vpop.trf.xlu0
        %v1398 = vpop.trf.xlu0
        %v1399 = vpop.trf.xlu0
        %v1400 = vpop.trf.xlu0
        %v1401 = vpop.trf.xlu0
        %v1402 = vpop.trf.xlu0
        %v1403 = vpop.trf.xlu0
        %v1405 = vsel %vm888, %v1388, 0
        %v1408 = vsel %vm888, %v1389, 0
        %vm1410 = vcmask 1043456
        %v1412 = vsel %vm1410, %v698, 0
        %1414 = vmatprep.subr.mxu0 0.0
        %1415 = vmatpush1.msra.mxu0 %v1412
        %1416 = vmatprep.subr.mxu0 0.0
        %1417 = vmatpush1.msra.mxu0 0.0
        %1418 = vmatprep.subr.mxu0 0.0
        %1419 = vmatpush1.msra.mxu0 0.0
        %1420 = vmatprep.subr.mxu0 0.0
        %1421 = vmatpush1.msra.mxu0 0.0
        %1422 = vmatprep.subr.mxu0 0.0
        %1423 = vmatpush1.msra.mxu0 0.0
        %1424 = vmatprep.subr.mxu0 0.0
        %1425 = vmatpush1.msra.mxu0 0.0
        %1426 = vmatprep.subr.mxu0 0.0
        %1427 = vmatpush1.msra.mxu0 0.0
        %1428 = vmatprep.subr.mxu0 0.0
        %1429 = vmatpush1.msra.mxu0 0.0
        %1430 = vmatprep.subr.mxu0 0.0
        %1431 = vmatpush1.msra.mxu0 0.0
        %1432 = vmatprep.subr.mxu0 0.0
        %1433 = vmatpush1.msra.mxu0 0.0
        %1434 = vmatprep.subr.mxu0 0.0
        %1435 = vmatpush1.msra.mxu0 0.0
        %1436 = vmatprep.subr.mxu0 0.0
        %1437 = vmatpush1.msra.mxu0 0.0
        %1438 = vmatprep.subr.mxu0 0.0
        %1439 = vmatpush1.msra.mxu0 0.0
        %1440 = vmatprep.subr.mxu0 0.0
        %1441 = vmatpush1.msra.mxu0 0.0
        %1442 = vmatprep.subr.mxu0 0.0
        %1443 = vmatpush1.msra.mxu0 0.0
        %1444 = vmatprep.subr.mxu0 0.0
        %1445 = vmatpush1.msra.mxu0 0.0
        %1446 = vmatprep.subr.mxu0 0.0
        %1447 = vmatpush1.msra.mxu0 0.0
        %1448 = vmatprep.subr.mxu0 0.0
        %1449 = vmatpush1.msra.mxu0 0.0
        %1450 = vmatprep.subr.mxu0 0.0
        %1451 = vmatpush1.msra.mxu0 0.0
        %1452 = vmatprep.subr.mxu0 0.0
        %1453 = vmatpush1.msra.mxu0 0.0
        %1454 = vmatprep.subr.mxu0 0.0
        %1455 = vmatpush1.msra.mxu0 0.0
        %1456 = vmatprep.subr.mxu0 0.0
        %1457 = vmatpush1.msra.mxu0 0.0
        %1458 = vmatprep.subr.mxu0 0.0
        %1459 = vmatpush1.msra.mxu0 0.0
        %1460 = vmatprep.subr.mxu0 0.0
        %1461 = vmatpush1.msra.mxu0 0.0
        %1462 = vmatprep.subr.mxu0 0.0
        %1463 = vmatpush1.msra.mxu0 0.0
        %1464 = vmatprep.subr.mxu0 0.0
        %1465 = vmatpush1.msra.mxu0 0.0
        %1466 = vmatprep.subr.mxu0 0.0
        %1467 = vmatpush1.msra.mxu0 0.0
        %1468 = vmatprep.subr.mxu0 0.0
        %1469 = vmatpush1.msra.mxu0 0.0
        %1470 = vmatprep.subr.mxu0 0.0
        %1471 = vmatpush1.msra.mxu0 0.0
        %1472 = vmatprep.subr.mxu0 0.0
        %1473 = vmatpush1.msra.mxu0 0.0
        %1474 = vmatprep.subr.mxu0 0.0
        %1475 = vmatpush1.msra.mxu0 0.0
        %1476 = vmatprep.subr.mxu0 0.0
        %1477 = vmatpush1.msra.mxu0 0.0
        %1478 = vmatprep.mubr.f32.mxu0 0.0
        %1479 = vmatmul.mubr.f32.gmra.mrb[0].mxu0 %v1405
        %v1480 = vpop.f32.mrb[0].mxu0
        %v1481 = vadd.f32 0.0, %v1480
        %v1482 = vpop.f32.mrb[0].mxu0
        %1483 = vmatprep.mubr.f32.mxu0 0.0
        %1484 = vmatmul.mubr.f32.gmra.mrb[0].mxu0 %v1408
        %v1485 = vpop.f32.mrb[0].mxu0
        %v1486 = vadd.f32 0.0, %v1485
        %v1487 = vpop.f32.mrb[0].mxu0
        %1488 = vdwg.mxu0
        %1489 = vxpose.xlu0.b32.start [1/16] %v1371, 128
        %1490 = vxpose.xlu0.b32.cont [2/16] 0.0, 128
        %1491 = vxpose.xlu0.b32.cont [3/16] 0.0, 128
        %1492 = vxpose.xlu0.b32.cont [4/16] 0.0, 128
        %1493 = vxpose.xlu0.b32.cont [5/16] 0.0, 128
        %1494 = vxpose.xlu0.b32.cont [6/16] 0.0, 128
        %1495 = vxpose.xlu0.b32.cont [7/16] 0.0, 128
        %1496 = vxpose.xlu0.b32.cont [8/16] 0.0, 128
        %1497 = vxpose.xlu0.b32.cont [9/16] 0.0, 128
        %1498 = vxpose.xlu0.b32.cont [10/16] 0.0, 128
        %1499 = vxpose.xlu0.b32.cont [11/16] 0.0, 128
        %1500 = vxpose.xlu0.b32.cont [12/16] 0.0, 128
        %1501 = vxpose.xlu0.b32.cont [13/16] 0.0, 128
        %1502 = vxpose.xlu0.b32.cont [14/16] 0.0, 128
        %1503 = vxpose.xlu0.b32.cont [15/16] 0.0, 128
        %1504 = vxpose.xlu0.b32.end [16/16] 0.0, 128
        %v1505 = vpop.trf.xlu0
        %v1506 = vpop.trf.xlu0
        %v1507 = vpop.trf.xlu0
        %v1508 = vpop.trf.xlu0
        %v1509 = vpop.trf.xlu0
        %v1510 = vpop.trf.xlu0
        %v1511 = vpop.trf.xlu0
        %v1512 = vpop.trf.xlu0
        %v1513 = vpop.trf.xlu0
        %v1514 = vpop.trf.xlu0
        %v1515 = vpop.trf.xlu0
        %v1516 = vpop.trf.xlu0
        %v1517 = vpop.trf.xlu0
        %v1518 = vpop.trf.xlu0
        %v1519 = vpop.trf.xlu0
        %v1520 = vpop.trf.xlu0
        %v1522 = vsel %vm888, %v1505, 0
        %v1525 = vsel %vm888, %v1506, 0
        %v1528 = vsel %vm1410, %v750, 0
        %1530 = vmatprep.subr.mxu0 0.0
        %1531 = vmatpush1.msra.mxu0 %v1528
        %1532 = vmatprep.subr.mxu0 0.0
        %1533 = vmatpush1.msra.mxu0 0.0
        %1534 = vmatprep.subr.mxu0 0.0
        %1535 = vmatpush1.msra.mxu0 0.0
        %1536 = vmatprep.subr.mxu0 0.0
        %1537 = vmatpush1.msra.mxu0 0.0
        %1538 = vmatprep.subr.mxu0 0.0
        %1539 = vmatpush1.msra.mxu0 0.0
        %1540 = vmatprep.subr.mxu0 0.0
        %1541 = vmatpush1.msra.mxu0 0.0
        %1542 = vmatprep.subr.mxu0 0.0
        %1543 = vmatpush1.msra.mxu0 0.0
        %1544 = vmatprep.subr.mxu0 0.0
        %1545 = vmatpush1.msra.mxu0 0.0
        %1546 = vmatprep.subr.mxu0 0.0
        %1547 = vmatpush1.msra.mxu0 0.0
        %1548 = vmatprep.subr.mxu0 0.0
        %1549 = vmatpush1.msra.mxu0 0.0
        %1550 = vmatprep.subr.mxu0 0.0
        %1551 = vmatpush1.msra.mxu0 0.0
        %1552 = vmatprep.subr.mxu0 0.0
        %1553 = vmatpush1.msra.mxu0 0.0
        %1554 = vmatprep.subr.mxu0 0.0
        %1555 = vmatpush1.msra.mxu0 0.0
        %1556 = vmatprep.subr.mxu0 0.0
        %1557 = vmatpush1.msra.mxu0 0.0
        %1558 = vmatprep.subr.mxu0 0.0
        %1559 = vmatpush1.msra.mxu0 0.0
        %1560 = vmatprep.subr.mxu0 0.0
        %1561 = vmatpush1.msra.mxu0 0.0
        %1562 = vmatprep.subr.mxu0 0.0
        %1563 = vmatpush1.msra.mxu0 0.0
        %1564 = vmatprep.subr.mxu0 0.0
        %1565 = vmatpush1.msra.mxu0 0.0
        %1566 = vmatprep.subr.mxu0 0.0
        %1567 = vmatpush1.msra.mxu0 0.0
        %1568 = vmatprep.subr.mxu0 0.0
        %1569 = vmatpush1.msra.mxu0 0.0
        %1570 = vmatprep.subr.mxu0 0.0
        %1571 = vmatpush1.msra.mxu0 0.0
        %1572 = vmatprep.subr.mxu0 0.0
        %1573 = vmatpush1.msra.mxu0 0.0
        %1574 = vmatprep.subr.mxu0 0.0
        %1575 = vmatpush1.msra.mxu0 0.0
        %1576 = vmatprep.subr.mxu0 0.0
        %1577 = vmatpush1.msra.mxu0 0.0
        %1578 = vmatprep.subr.mxu0 0.0
        %1579 = vmatpush1.msra.mxu0 0.0
        %1580 = vmatprep.subr.mxu0 0.0
        %1581 = vmatpush1.msra.mxu0 0.0
        %1582 = vmatprep.subr.mxu0 0.0
        %1583 = vmatpush1.msra.mxu0 0.0
        %1584 = vmatprep.subr.mxu0 0.0
        %1585 = vmatpush1.msra.mxu0 0.0
        %1586 = vmatprep.subr.mxu0 0.0
        %1587 = vmatpush1.msra.mxu0 0.0
        %1588 = vmatprep.subr.mxu0 0.0
        %1589 = vmatpush1.msra.mxu0 0.0
        %1590 = vmatprep.subr.mxu0 0.0
        %1591 = vmatpush1.msra.mxu0 0.0
        %1592 = vmatprep.subr.mxu0 0.0
        %1593 = vmatpush1.msra.mxu0 0.0
        %1594 = vmatprep.mubr.f32.mxu0 0.0
        %1595 = vmatmul.mubr.f32.gmra.mrb[0].mxu0 %v1522
        %v1596 = vpop.f32.mrb[0].mxu0
        %v1597 = vadd.f32 0.0, %v1596
        %v1598 = vpop.f32.mrb[0].mxu0
        %1599 = vmatprep.mubr.f32.mxu0 0.0
        %1600 = vmatmul.mubr.f32.gmra.mrb[0].mxu0 %v1525
        %v1601 = vpop.f32.mrb[0].mxu0
        %v1602 = vadd.f32 0.0, %v1601
        %v1603 = vpop.f32.mrb[0].mxu0
        %1604 = vdwg.mxu0
        %v1605 = vadd.f32 %v992, %v1481
        %v1606 = vadd.f32 %v993, %v1486
        %v1607 = vadd.f32 %v994, %v1597
        %v1608 = vadd.f32 %v995, %v1602
        %1609 = vst.msk [vmem:[%s388] sm:$0xff] %vm761, %v1605
        %1610 = vst.msk [vmem:[%s388 + $0x8] sm:$0xff] %vm761, %v1606
        %1611 = vst.msk [vmem:[%s388 + $0x10] sm:$0xff] %vm761, %v1607
        %1612 = vst.msk [vmem:[%s388 + $0x18] sm:$0xff] %vm761, %v1608
        %v1613 = vsel %vm1178, %v1370, 0.0
        %v1614 = vrot.slane %v1613, 4
        %v1615 = vadd.f32 %v1613, %v1614
        %v1616 = vrot.slane %v1615, 2
        %v1617 = vadd.f32 %v1615, %v1616
        %v1618 = vrot.slane %v1617, 1
        %v1619 = vadd.f32 %v1617, %v1618
        %v1620 = vsel %vm1178, %v1371, 0.0
        %v1621 = vrot.slane %v1620, 4
        %v1622 = vadd.f32 %v1620, %v1621
        %v1623 = vrot.slane %v1622, 2
        %v1624 = vadd.f32 %v1622, %v1623
        %v1625 = vrot.slane %v1624, 1
        %v1626 = vadd.f32 %v1624, %v1625
        %vm1629 = vcmask 1041409
        %v1630 = vsel %vm1629, %v1626, %v1619
        %v1632 = vadd.f32 %v996, %v1630
        %vm1633 = vcmask 123904
        %1634 = vst.msk [vmem:[%s395] sm:$0x3] %vm1633, %v1632
        %p1635 = scmp.lt.s32.totalorder %s28, 7
        %s1636 = scalar_select %p1635, %s28, 7
        %s1637 = smul.addr %s1636, 2
        %s1638 = scalar_lea.vmem %s8, %s1637
        %s1639 = sand.u32 %s245, 1
        %s1640 = scalar_lea.sflag [#allocation3], %s1639
        %s1641 = sand.u32 %s245, 1
        %s1642 = smul.addr %s1641, 32
        %s1643 = scalar_lea.vmem [#allocation2], %s1642
        %s1644 = sand.u32 %s271, 1
        %s1645 = scalar_lea.sflag [#allocation5], %s1644
        %s1646 = sand.u32 %s271, 1
        %s1647 = smul.addr %s1646, 2
        %s1648 = scalar_lea.vmem [#allocation4], %s1647
        // Predicated region
        $region53: #{forward.6} parent=51 // pred_check
          %p1649 = pneg %p229
        $region54: #{forward.6} parent=51 // pred_check_branch
          %1651 = sbr.rel (%p1649) target = $region56
        $region55: #{forward.6} parent=51 // pred_region
          _
        $region56: #{forward.6} parent=51 // pred_fallthru
          _
        // Predicated region
        $region57: #{forward.6} parent=51 // pred_check
          %p1652 = pneg %p255
        $region58: #{forward.6} parent=51 // pred_check_branch
          %1654 = sbr.rel (%p1652) target = $region60
        $region59: #{forward.6} parent=51 // pred_region
          %s1656 = ssub.s32 512, 512
          %1657 = vsyncadd %s1640, %s1656
          %s1658 = smul.addr %s28, 4
          %s1659 = smul.addr %s1658, 128
          %s1660 = scalar_lea.hbm %s9, %s1659
          %s1661 = sshll.u32 %s1643, 4
          %s1662 = int_to_ptr.vmem [resolvable:$true] %s1661
          %1667 = dma.vmem_to_hbm [thread:$0]  %s1662, 512, %s1660, %s1640, 128, 128, 8
        $region60: #{forward.6} parent=51 // pred_fallthru
          _
        // Predicated region
        $region61: #{forward.6} parent=51 // pred_check
          %p1668 = pneg %p281
        $region62: #{forward.6} parent=51 // pred_check_branch
          %1670 = sbr.rel (%p1668) target = $region64
        $region63: #{forward.6} parent=51 // pred_region
          %s1672 = ssub.s32 32, 32
          %1673 = vsyncadd %s1645, %s1672
          %s1674 = smul.addr %s28, 32
          %s1675 = scalar_lea.hbm %s10, %s1674
          %s1677 = sshll.u32 %s1648, 4
          %s1678 = int_to_ptr.vmem [resolvable:$true] %s1677
          %1680 = dma.vmem_to_hbm [thread:$0]  %s1678, 32, %s1675, %s1645
        $region64: #{forward.6} parent=51 // pred_fallthru
          _
      $region52: #{forward.6} parent=5 // pred_fallthru
        _
      %p1681 = scmp.le.s32.totalorder 2, %s23
      // Predicated region
      $region65: #{forward.6} parent=5 // pred_check
        %p1682 = pneg %p1681
      $region66: #{forward.6} parent=5 // pred_check_branch
        %1684 = sbr.rel (%p1682) target = $region68
      $region67: #{forward.6} parent=5 // pred_region
        %s1685 = ssub.s32 %s23, 2
        // Predicated region
        $region69: #{forward.6} parent=67 // pred_check
          %p1686 = pneg %p235
        $region70: #{forward.6} parent=67 // pred_check_branch
          %1688 = sbr.rel (%p1686) target = $region72
        $region71: #{forward.6} parent=67 // pred_region
          %p1689 = scmp.lt.s32.totalorder %s29, 7
          %s1690 = scalar_select %p1689, %s29, 7
          %s1691 = smul.addr %s1690, 2
          %s1692 = scalar_lea.vmem %s8, %s1691
        $region72: #{forward.6} parent=67 // pred_fallthru
          _
        // Predicated region
        $region73: #{forward.6} parent=67 // pred_check
          %p1693 = pneg %p261
        $region74: #{forward.6} parent=67 // pred_check_branch
          %1695 = sbr.rel (%p1693) target = $region76
        $region75: #{forward.6} parent=67 // pred_region
          %s1696 = sand.u32 %s246, 1
          %s1697 = scalar_lea.sflag [#allocation3], %s1696
          %s1698 = sand.u32 %s246, 1
          %s1699 = smul.addr %s1698, 32
          %s1700 = scalar_lea.vmem [#allocation2], %s1699
          %1701 = dma.done %s1697, 512
        $region76: #{forward.6} parent=67 // pred_fallthru
          _
        // Predicated region
        $region77: #{forward.6} parent=67 // pred_check
          %p1702 = pneg %p287
        $region78: #{forward.6} parent=67 // pred_check_branch
          %1704 = sbr.rel (%p1702) target = $region80
        $region79: #{forward.6} parent=67 // pred_region
          %s1705 = sand.u32 %s272, 1
          %s1706 = scalar_lea.sflag [#allocation5], %s1705
          %s1707 = sand.u32 %s272, 1
          %s1708 = smul.addr %s1707, 2
          %s1709 = scalar_lea.vmem [#allocation4], %s1708
          %1710 = dma.done %s1706, 32
        $region80: #{forward.6} parent=67 // pred_fallthru
          _
      $region68: #{forward.6} parent=5 // pred_fallthru
        _
    $region6: #{forward.6} parent=1 // loop_footer
      %s27 = sadd.s32 1, %s23
    $region7: #{forward.6} parent=1 // loop_footer_branch
      %22 = sbr.rel target = $region3
    $region8: #{forward.6} parent=1 // loop_exit
      _
    %1711 = vsyncpa [#allocation3], 1
    %s1712 = scalar_lea.sflag [#allocation3], 1
    %1713 = vsyncpa %s1712, 1
    %1714 = vsyncpa [#allocation5], 1
    %s1715 = scalar_lea.sflag [#allocation5], 1
    %1716 = vsyncpa %s1715, 1

// kernel: forward.4
$region0: #{forward.4}
  #allocation0 [shape = 'u32[]', space=smem, size = 0x4, offset = 0x4, fixed_abs, tag = 'smem constant byte address 0x4 - core index']
  #allocation1 [shape = 'u32[144,128]{1,0:T(1,128)}', space=vmem, size = 0x12000, scoped, tag = 'internal scratch']
  %s0 = inlined_call_operand.vmem [shape: bf16[8,4,32], index: 0, kind: input, shape index: {}]
  %s1 = inlined_call_operand.vmem [shape: bf16[2,32,16], index: 1, kind: input, shape index: {}]
  %s2 = inlined_call_operand.vmem [shape: bf16[2,32,16], index: 2, kind: input, shape index: {}]
  %s3 = inlined_call_operand.vmem [shape: bf16[2,32,16], index: 3, kind: input, shape index: {}]
  %s4 = inlined_call_operand.vmem [shape: bf16[2,16,32], index: 4, kind: input, shape index: {}]
  %s5 = inlined_call_operand.vmem [shape: f32[2,1,1], index: 5, kind: input, shape index: {}]
  %s6 = inlined_call_operand.vmem [shape: f32[8,2,16,16], index: 6, kind: input, shape index: {}]
  %s7 = inlined_call_operand.vmem [shape: f32[8,2,16], index: 7, kind: input, shape index: {}]
  %s8 = inlined_call_operand.vmem [shape: bf16[8,4,32], index: 8, kind: output, shape index: {0}]
  %s9 = inlined_call_operand.vmem [shape: f32[8,2,16,16], index: 9, kind: output, shape index: {1}]
  %s10 = inlined_call_operand.vmem [shape: f32[8,2,16], index: 10, kind: output, shape index: {2}]
  %11 = xla_tuple %s8, %s9, %s10
  %s12 = sld [smem:[#allocation0]]
  $region81: #{forward.4} parent=0
    _
  %s14 = ssub.s32 1, %s12
  %s15 = scalar_select 0, %s14, %s12
  loop: start=0, step=1, limit=10
  $region2: #{forward.4} parent=0 // loop_pre_header
    _
  $region3: #{forward.4} parent=0 // loop_header
    %s17 = sphi 0, %s21
    %p18 = scmp.ge.s32.totalorder %s17, 10
    %s27 = sphi 0, %s29
    %s30 = sphi 0, %s27
    %s31 = sphi 0, %s30
    %s47 = sphi 0, %s31
    %s51 = sphi 0, %s51
    %s53 = sphi 0, %s51
    %s54 = sphi 0, %s53
    %s68 = sphi 0, %s54
    %s72 = sphi 0, %s72
    %s74 = sphi 0, %s72
    %s75 = sphi 0, %s74
    %s89 = sphi 0, %s75
    %s93 = sphi 0, %s93
    %s95 = sphi 0, %s93
    %s96 = sphi 0, %s95
    %s110 = sphi 0, %s96
    %s114 = sphi 0, %s114
    %s116 = sphi 0, %s114
    %s117 = sphi 0, %s116
    %s131 = sphi 0, %s117
    %s135 = sphi 0, %s135
    %s137 = sphi 0, %s135
    %s138 = sphi 0, %s137
    %s152 = sphi 0, %s138
    %s158 = sphi 0, %s160
    %s161 = sphi 0, %s158
    %s162 = sphi 0, %s161
    %s178 = sphi 0, %s162
    %s184 = sphi 0, %s186
    %s187 = sphi 0, %s184
    %s188 = sphi 0, %s187
    %s204 = sphi 0, %s188
    %s210 = sphi 0, %s212
    %s213 = sphi 0, %s210
    %s214 = sphi 0, %s213
    %s230 = sphi 0, %s214
    %s236 = sphi 0, %s238
    %s239 = sphi 0, %s236
    %s240 = sphi 0, %s239
    %s256 = sphi 0, %s240
    %s262 = sphi 0, %s264
    %s265 = sphi 0, %s262
    %s266 = sphi 0, %s265
    %s282 = sphi 0, %s266
  $region4: #{forward.4} parent=0 // loop_header_branch
    %20 = sbr.rel (%p18) target = $region8
  $region5: #{forward.4} parent=0 // loop_body
    %s22 = ssub.s32 %s17, 1
    %s23 = ssub.s32 %s17, 2
    %s24 = sadd.s32 %s17, 1
    %s25 = ssub.s32 %s17, %s24
    %p26 = scmp.eq.s32.totalorder %s25, 0
    %s28 = sadd.s32 %s27, 1
    %s29 = scalar_select %p26, %s27, %s28
    %p32 = pneg %p26
    %p33 = scmp.eq.s32.totalorder %s17, 7
    %p34 = por %p32, %p33
    %p35 = scmp.ne.s32.totalorder %s27, %s30
    %p36 = scmp.eq.s32.totalorder %s17, 0
    %p37 = por %p35, %p36
    %p38 = scmp.ne.s32.totalorder %s27, %s30
    %p39 = scmp.eq.s32.totalorder %s22, 7
    %p40 = por %p38, %p39
    %p41 = scmp.ne.s32.totalorder %s30, %s31
    %p42 = scmp.eq.s32.totalorder %s22, 0
    %p43 = por %p41, %p42
    %p44 = scmp.ne.s32.totalorder %s30, %s31
    %p45 = scmp.eq.s32.totalorder %s23, 7
    %p46 = por %p44, %p45
    %p48 = scmp.ne.s32.totalorder %s31, %s47
    %p49 = scmp.eq.s32.totalorder %s23, 0
    %p50 = por %p48, %p49
    %s52 = sadd.s32 %s51, 1
    %p55 = scmp.eq.s32.totalorder %s17, 7
    %p56 = scmp.ne.s32.totalorder %s51, %s53
    %p57 = scmp.eq.s32.totalorder %s17, 0
    %p58 = por %p56, %p57
    %p59 = scmp.ne.s32.totalorder %s51, %s53
    %p60 = scmp.eq.s32.totalorder %s22, 7
    %p61 = por %p59, %p60
    %p62 = scmp.ne.s32.totalorder %s53, %s54
    %p63 = scmp.eq.s32.totalorder %s22, 0
    %p64 = por %p62, %p63
    %p65 = scmp.ne.s32.totalorder %s53, %s54
    %p66 = scmp.eq.s32.totalorder %s23, 7
    %p67 = por %p65, %p66
    %p69 = scmp.ne.s32.totalorder %s54, %s68
    %p70 = scmp.eq.s32.totalorder %s23, 0
    %p71 = por %p69, %p70
    %s73 = sadd.s32 %s72, 1
    %p76 = scmp.eq.s32.totalorder %s17, 7
    %p77 = scmp.ne.s32.totalorder %s72, %s74
    %p78 = scmp.eq.s32.totalorder %s17, 0
    %p79 = por %p77, %p78
    %p80 = scmp.ne.s32.totalorder %s72, %s74
    %p81 = scmp.eq.s32.totalorder %s22, 7
    %p82 = por %p80, %p81
    %p83 = scmp.ne.s32.totalorder %s74, %s75
    %p84 = scmp.eq.s32.totalorder %s22, 0
    %p85 = por %p83, %p84
    %p86 = scmp.ne.s32.totalorder %s74, %s75
    %p87 = scmp.eq.s32.totalorder %s23, 7
    %p88 = por %p86, %p87
    %p90 = scmp.ne.s32.totalorder %s75, %s89
    %p91 = scmp.eq.s32.totalorder %s23, 0
    %p92 = por %p90, %p91
    %s94 = sadd.s32 %s93, 1
    %p97 = scmp.eq.s32.totalorder %s17, 7
    %p98 = scmp.ne.s32.totalorder %s93, %s95
    %p99 = scmp.eq.s32.totalorder %s17, 0
    %p100 = por %p98, %p99
    %p101 = scmp.ne.s32.totalorder %s93, %s95
    %p102 = scmp.eq.s32.totalorder %s22, 7
    %p103 = por %p101, %p102
    %p104 = scmp.ne.s32.totalorder %s95, %s96
    %p105 = scmp.eq.s32.totalorder %s22, 0
    %p106 = por %p104, %p105
    %p107 = scmp.ne.s32.totalorder %s95, %s96
    %p108 = scmp.eq.s32.totalorder %s23, 7
    %p109 = por %p107, %p108
    %p111 = scmp.ne.s32.totalorder %s96, %s110
    %p112 = scmp.eq.s32.totalorder %s23, 0
    %p113 = por %p111, %p112
    %s115 = sadd.s32 %s114, 1
    %p118 = scmp.eq.s32.totalorder %s17, 7
    %p119 = scmp.ne.s32.totalorder %s114, %s116
    %p120 = scmp.eq.s32.totalorder %s17, 0
    %p121 = por %p119, %p120
    %p122 = scmp.ne.s32.totalorder %s114, %s116
    %p123 = scmp.eq.s32.totalorder %s22, 7
    %p124 = por %p122, %p123
    %p125 = scmp.ne.s32.totalorder %s116, %s117
    %p126 = scmp.eq.s32.totalorder %s22, 0
    %p127 = por %p125, %p126
    %p128 = scmp.ne.s32.totalorder %s116, %s117
    %p129 = scmp.eq.s32.totalorder %s23, 7
    %p130 = por %p128, %p129
    %p132 = scmp.ne.s32.totalorder %s117, %s131
    %p133 = scmp.eq.s32.totalorder %s23, 0
    %p134 = por %p132, %p133
    %s136 = sadd.s32 %s135, 1
    %p139 = scmp.eq.s32.totalorder %s17, 7
    %p140 = scmp.ne.s32.totalorder %s135, %s137
    %p141 = scmp.eq.s32.totalorder %s17, 0
    %p142 = por %p140, %p141
    %p143 = scmp.ne.s32.totalorder %s135, %s137
    %p144 = scmp.eq.s32.totalorder %s22, 7
    %p145 = por %p143, %p144
    %p146 = scmp.ne.s32.totalorder %s137, %s138
    %p147 = scmp.eq.s32.totalorder %s22, 0
    %p148 = por %p146, %p147
    %p149 = scmp.ne.s32.totalorder %s137, %s138
    %p150 = scmp.eq.s32.totalorder %s23, 7
    %p151 = por %p149, %p150
    %p153 = scmp.ne.s32.totalorder %s138, %s152
    %p154 = scmp.eq.s32.totalorder %s23, 0
    %p155 = por %p153, %p154
    %s156 = ssub.s32 %s17, %s24
    %p157 = scmp.eq.s32.totalorder %s156, 0
    %s159 = sadd.s32 %s158, 1
    %s160 = scalar_select %p157, %s158, %s159
    %p163 = pneg %p157
    %p164 = scmp.eq.s32.totalorder %s17, 7
    %p165 = por %p163, %p164
    %p166 = scmp.ne.s32.totalorder %s158, %s161
    %p167 = scmp.eq.s32.totalorder %s17, 0
    %p168 = por %p166, %p167
    %p169 = scmp.ne.s32.totalorder %s158, %s161
    %p170 = scmp.eq.s32.totalorder %s22, 7
    %p171 = por %p169, %p170
    %p172 = scmp.ne.s32.totalorder %s161, %s162
    %p173 = scmp.eq.s32.totalorder %s22, 0
    %p174 = por %p172, %p173
    %p175 = scmp.ne.s32.totalorder %s161, %s162
    %p176 = scmp.eq.s32.totalorder %s23, 7
    %p177 = por %p175, %p176
    %p179 = scmp.ne.s32.totalorder %s162, %s178
    %p180 = scmp.eq.s32.totalorder %s23, 0
    %p181 = por %p179, %p180
    %s182 = ssub.s32 %s17, %s24
    %p183 = scmp.eq.s32.totalorder %s182, 0
    %s185 = sadd.s32 %s184, 1
    %s186 = scalar_select %p183, %s184, %s185
    %p189 = pneg %p183
    %p190 = scmp.eq.s32.totalorder %s17, 7
    %p191 = por %p189, %p190
    %p192 = scmp.ne.s32.totalorder %s184, %s187
    %p193 = scmp.eq.s32.totalorder %s17, 0
    %p194 = por %p192, %p193
    %p195 = scmp.ne.s32.totalorder %s184, %s187
    %p196 = scmp.eq.s32.totalorder %s22, 7
    %p197 = por %p195, %p196
    %p198 = scmp.ne.s32.totalorder %s187, %s188
    %p199 = scmp.eq.s32.totalorder %s22, 0
    %p200 = por %p198, %p199
    %p201 = scmp.ne.s32.totalorder %s187, %s188
    %p202 = scmp.eq.s32.totalorder %s23, 7
    %p203 = por %p201, %p202
    %p205 = scmp.ne.s32.totalorder %s188, %s204
    %p206 = scmp.eq.s32.totalorder %s23, 0
    %p207 = por %p205, %p206
    %s208 = ssub.s32 %s17, %s24
    %p209 = scmp.eq.s32.totalorder %s208, 0
    %s211 = sadd.s32 %s210, 1
    %s212 = scalar_select %p209, %s210, %s211
    %p215 = pneg %p209
    %p216 = scmp.eq.s32.totalorder %s17, 7
    %p217 = por %p215, %p216
    %p218 = scmp.ne.s32.totalorder %s210, %s213
    %p219 = scmp.eq.s32.totalorder %s17, 0
    %p220 = por %p218, %p219
    %p221 = scmp.ne.s32.totalorder %s210, %s213
    %p222 = scmp.eq.s32.totalorder %s22, 7
    %p223 = por %p221, %p222
    %p224 = scmp.ne.s32.totalorder %s213, %s214
    %p225 = scmp.eq.s32.totalorder %s22, 0
    %p226 = por %p224, %p225
    %p227 = scmp.ne.s32.totalorder %s213, %s214
    %p228 = scmp.eq.s32.totalorder %s23, 7
    %p229 = por %p227, %p228
    %p231 = scmp.ne.s32.totalorder %s214, %s230
    %p232 = scmp.eq.s32.totalorder %s23, 0
    %p233 = por %p231, %p232
    %s234 = ssub.s32 %s17, %s24
    %p235 = scmp.eq.s32.totalorder %s234, 0
    %s237 = sadd.s32 %s236, 1
    %s238 = scalar_select %p235, %s236, %s237
    %p241 = pneg %p235
    %p242 = scmp.eq.s32.totalorder %s17, 7
    %p243 = por %p241, %p242
    %p244 = scmp.ne.s32.totalorder %s236, %s239
    %p245 = scmp.eq.s32.totalorder %s17, 0
    %p246 = por %p244, %p245
    %p247 = scmp.ne.s32.totalorder %s236, %s239
    %p248 = scmp.eq.s32.totalorder %s22, 7
    %p249 = por %p247, %p248
    %p250 = scmp.ne.s32.totalorder %s239, %s240
    %p251 = scmp.eq.s32.totalorder %s22, 0
    %p252 = por %p250, %p251
    %p253 = scmp.ne.s32.totalorder %s239, %s240
    %p254 = scmp.eq.s32.totalorder %s23, 7
    %p255 = por %p253, %p254
    %p257 = scmp.ne.s32.totalorder %s240, %s256
    %p258 = scmp.eq.s32.totalorder %s23, 0
    %p259 = por %p257, %p258
    %s260 = ssub.s32 %s17, %s24
    %p261 = scmp.eq.s32.totalorder %s260, 0
    %s263 = sadd.s32 %s262, 1
    %s264 = scalar_select %p261, %s262, %s263
    %p267 = pneg %p261
    %p268 = scmp.eq.s32.totalorder %s17, 7
    %p269 = por %p267, %p268
    %p270 = scmp.ne.s32.totalorder %s262, %s265
    %p271 = scmp.eq.s32.totalorder %s17, 0
    %p272 = por %p270, %p271
    %p273 = scmp.ne.s32.totalorder %s262, %s265
    %p274 = scmp.eq.s32.totalorder %s22, 7
    %p275 = por %p273, %p274
    %p276 = scmp.ne.s32.totalorder %s265, %s266
    %p277 = scmp.eq.s32.totalorder %s22, 0
    %p278 = por %p276, %p277
    %p279 = scmp.ne.s32.totalorder %s265, %s266
    %p280 = scmp.eq.s32.totalorder %s23, 7
    %p281 = por %p279, %p280
    %p283 = scmp.ne.s32.totalorder %s266, %s282
    %p284 = scmp.eq.s32.totalorder %s23, 0
    %p285 = por %p283, %p284
    %p286 = scmp.le.s32.totalorder 1, %s17
    %p287 = scmp.lt.s32.totalorder %s17, 9
    %p288 = pnand %p286, %p287
    %p289 = pneg %p288
    // Predicated region
    $region9: #{forward.4} parent=5 // pred_check
      _
    $region10: #{forward.4} parent=5 // pred_check_branch
      %291 = sbr.rel (%p288) target = $region12
    $region11: #{forward.4} parent=5 // pred_region
      %s292 = ssub.s32 %s17, 1
      // Predicated region
      $region13: #{forward.4} parent=11 // pred_check
        %p293 = pneg %p64
      $region14: #{forward.4} parent=11 // pred_check_branch
        %295 = sbr.rel (%p293) target = $region16
      $region15: #{forward.4} parent=11 // pred_region
        _
      $region16: #{forward.4} parent=11 // pred_fallthru
        _
      // Predicated region
      $region17: #{forward.4} parent=11 // pred_check
        %p296 = pneg %p85
      $region18: #{forward.4} parent=11 // pred_check_branch
        %298 = sbr.rel (%p296) target = $region20
      $region19: #{forward.4} parent=11 // pred_region
        _
      $region20: #{forward.4} parent=11 // pred_fallthru
        _
      // Predicated region
      $region21: #{forward.4} parent=11 // pred_check
        %p299 = pneg %p106
      $region22: #{forward.4} parent=11 // pred_check_branch
        %301 = sbr.rel (%p299) target = $region24
      $region23: #{forward.4} parent=11 // pred_region
        _
      $region24: #{forward.4} parent=11 // pred_fallthru
        _
      // Predicated region
      $region25: #{forward.4} parent=11 // pred_check
        %p302 = pneg %p127
      $region26: #{forward.4} parent=11 // pred_check_branch
        %304 = sbr.rel (%p302) target = $region28
      $region27: #{forward.4} parent=11 // pred_region
        _
      $region28: #{forward.4} parent=11 // pred_fallthru
        _
      // Predicated region
      $region29: #{forward.4} parent=11 // pred_check
        %p305 = pneg %p148
      $region30: #{forward.4} parent=11 // pred_check_branch
        %307 = sbr.rel (%p305) target = $region32
      $region31: #{forward.4} parent=11 // pred_region
        _
      $region32: #{forward.4} parent=11 // pred_fallthru
        _
    $region12: #{forward.4} parent=5 // pred_fallthru
      _
    %p308 = scmp.lt.s32.totalorder %s17, 8
    // Predicated region
    $region33: #{forward.4} parent=5 // pred_check
      %p309 = pneg %p308
    $region34: #{forward.4} parent=5 // pred_check_branch
      %311 = sbr.rel (%p309) target = $region36
    $region35: #{forward.4} parent=5 // pred_region
      // Predicated region
      $region37: #{forward.4} parent=35 // pred_check
        %p312 = pneg %p37
      $region38: #{forward.4} parent=35 // pred_check_branch
        %314 = sbr.rel (%p312) target = $region40
      $region39: #{forward.4} parent=35 // pred_region
        %p315 = scmp.lt.s32.totalorder %s17, 7
        %s316 = scalar_select %p315, %s17, 7
        %s317 = smul.addr %s316, 2
        %s318 = scalar_lea.vmem %s0, %s317
      $region40: #{forward.4} parent=35 // pred_fallthru
        _
      // Predicated region
      $region41: #{forward.4} parent=35 // pred_check
        %p319 = pneg %p168
      $region42: #{forward.4} parent=35 // pred_check_branch
        %321 = sbr.rel (%p319) target = $region44
      $region43: #{forward.4} parent=35 // pred_region
        %p322 = scmp.lt.s32.totalorder %s17, 7
        %s323 = scalar_select %p322, %s17, 7
        %s324 = smul.addr %s323, 4
        %s325 = smul.addr %s324, 8
        %s326 = scalar_lea.vmem %s6, %s325
      $region44: #{forward.4} parent=35 // pred_fallthru
        _
      // Predicated region
      $region45: #{forward.4} parent=35 // pred_check
        %p327 = pneg %p194
      $region46: #{forward.4} parent=35 // pred_check_branch
        %329 = sbr.rel (%p327) target = $region48
      $region47: #{forward.4} parent=35 // pred_region
        %p330 = scmp.lt.s32.totalorder %s17, 7
        %s331 = scalar_select %p330, %s17, 7
        %s332 = smul.addr %s331, 2
        %s333 = scalar_lea.vmem %s7, %s332
      $region48: #{forward.4} parent=35 // pred_fallthru
        _
    $region36: #{forward.4} parent=5 // pred_fallthru
      _
    %p334 = scmp.le.s32.totalorder 1, %s17
    %p335 = scmp.lt.s32.totalorder %s17, 9
    %p336 = pnand %p334, %p335
    %p337 = pneg %p336
    // Predicated region
    $region49: #{forward.4} parent=5 // pred_check
      _
    $region50: #{forward.4} parent=5 // pred_check_branch
      %339 = sbr.rel (%p336) target = $region52
    $region51: #{forward.4} parent=5 // pred_region
      %s340 = ssub.s32 %s17, 1
      %p341 = scmp.lt.s32.totalorder %s22, 7
      %s342 = scalar_select %p341, %s22, 7
      %s343 = smul.addr %s342, 2
      %s344 = scalar_lea.vmem %s0, %s343
      %p345 = pneg %p43
      %p346 = pneg %p40
      %p347 = pneg %p64
      %p348 = pneg %p61
      %p349 = pneg %p85
      %p350 = pneg %p82
      %p351 = pneg %p106
      %p352 = pneg %p103
      %p353 = pneg %p127
      %p354 = pneg %p124
      %p355 = pneg %p148
      %p356 = pneg %p145
      %p357 = scmp.lt.s32.totalorder %s22, 7
      %s358 = scalar_select %p357, %s22, 7
      %s359 = smul.addr %s358, 4
      %s360 = smul.addr %s359, 8
      %s361 = scalar_lea.vmem %s6, %s360
      %p362 = pneg %p174
      %p363 = pneg %p171
      %p364 = scmp.lt.s32.totalorder %s22, 7
      %s365 = scalar_select %p364, %s22, 7
      %s366 = smul.addr %s365, 2
      %s367 = scalar_lea.vmem %s7, %s366
      %p368 = pneg %p200
      %p369 = pneg %p197
      %p370 = pneg %p226
      %p371 = pneg %p223
      %p372 = scmp.lt.s32.totalorder %s22, 7
      %s373 = scalar_select %p372, %s22, 7
      %s374 = smul.addr %s373, 2
      %s375 = scalar_lea.vmem %s8, %s374
      %p376 = pneg %p252
      %p377 = pneg %p249
      %p378 = scmp.lt.s32.totalorder %s22, 7
      %s379 = scalar_select %p378, %s22, 7
      %s380 = smul.addr %s379, 4
      %s381 = smul.addr %s380, 8
      %s382 = scalar_lea.vmem %s9, %s381
      %p383 = pneg %p278
      %p384 = pneg %p275
      %p385 = scmp.lt.s32.totalorder %s22, 7
      %s386 = scalar_select %p385, %s22, 7
      %s387 = smul.addr %s386, 2
      %s388 = scalar_lea.vmem %s10, %s387
      %p389 = scmp.lt.s32.totalorder %s22, 7
      %s390 = scalar_select %p389, %s22, 7
      %s391 = smul.addr %s390, 2
      %s392 = scalar_lea.vmem %s0, %s391
      %p393 = scmp.lt.s32.totalorder %s22, 7
      %s394 = scalar_select %p393, %s22, 7
      %s395 = smul.addr %s394, 4
      %s396 = smul.addr %s395, 8
      %s397 = scalar_lea.vmem %s6, %s396
      %p398 = scmp.lt.s32.totalorder %s22, 7
      %s399 = scalar_select %p398, %s22, 7
      %s400 = smul.addr %s399, 2
      %s401 = scalar_lea.vmem %s7, %s400
      %p402 = scmp.lt.s32.totalorder %s22, 7
      %s403 = scalar_select %p402, %s22, 7
      %s404 = smul.addr %s403, 2
      %s405 = scalar_lea.vmem %s8, %s404
      %p406 = scmp.lt.s32.totalorder %s22, 7
      %s407 = scalar_select %p406, %s22, 7
      %s408 = smul.addr %s407, 4
      %s409 = smul.addr %s408, 8
      %s410 = scalar_lea.vmem %s9, %s409
      %p411 = scmp.lt.s32.totalorder %s22, 7
      %s412 = scalar_select %p411, %s22, 7
      %s413 = smul.addr %s412, 2
      %s414 = scalar_lea.vmem %s10, %s413
      %v416 = vld [vmem:[%s392] sm:$0x3]
      %v417 = vld [vmem:[%s1] sm:$0xf]
      %v418 = vld [vmem:[%s1 + $0x4] sm:$0xf]
      %v419 = vld [vmem:[%s1 + $0x8] sm:$0xf]
      %v420 = vld [vmem:[%s1 + $0xc] sm:$0xf]
      %v421 = vld [vmem:[%s1 + $0x10] sm:$0xf]
      %v422 = vld [vmem:[%s1 + $0x14] sm:$0xf]
      %v423 = vld [vmem:[%s1 + $0x18] sm:$0xf]
      %v424 = vld [vmem:[%s1 + $0x1c] sm:$0xf]
      %v429 = vunpack.c.l.b16 %v417
      %v430 = vunpack.c.l.b16 %v418
      %v431 = vunpack.c.l.b16 %v419
      %v432 = vunpack.c.l.b16 %v420
      %v433 = vpack.c.b16 %v430, %v429
      %v434 = vpack.c.b16 %v432, %v431
      %vm437 = vcmask 261120
      %v439 = vsel %vm437, %v416, 0
      %441 = vmatprep.subr.bf16.mxu0 0
      %442 = vmatpush1.bf16.msra.mxu0 %v433
      %443 = vmatprep.subr.bf16.mxu0 0
      %444 = vmatpush1.bf16.msra.mxu0 %v434
      %445 = vmatprep.subr.bf16.mxu0 0
      %446 = vmatpush1.bf16.msra.mxu0 0
      %447 = vmatprep.subr.bf16.mxu0 0
      %448 = vmatpush1.bf16.msra.mxu0 0
      %449 = vmatprep.subr.bf16.mxu0 0
      %450 = vmatpush1.bf16.msra.mxu0 0
      %451 = vmatprep.subr.bf16.mxu0 0
      %452 = vmatpush1.bf16.msra.mxu0 0
      %453 = vmatprep.subr.bf16.mxu0 0
      %454 = vmatpush1.bf16.msra.mxu0 0
      %455 = vmatprep.subr.bf16.mxu0 0
      %456 = vmatpush1.bf16.msra.mxu0 0
      %457 = vmatprep.subr.bf16.mxu0 0
      %458 = vmatpush1.bf16.msra.mxu0 0
      %459 = vmatprep.subr.bf16.mxu0 0
      %460 = vmatpush1.bf16.msra.mxu0 0
      %461 = vmatprep.subr.bf16.mxu0 0
      %462 = vmatpush1.bf16.msra.mxu0 0
      %463 = vmatprep.subr.bf16.mxu0 0
      %464 = vmatpush1.bf16.msra.mxu0 0
      %465 = vmatprep.subr.bf16.mxu0 0
      %466 = vmatpush1.bf16.msra.mxu0 0
      %467 = vmatprep.subr.bf16.mxu0 0
      %468 = vmatpush1.bf16.msra.mxu0 0
      %469 = vmatprep.subr.bf16.mxu0 0
      %470 = vmatpush1.bf16.msra.mxu0 0
      %471 = vmatprep.subr.bf16.mxu0 0
      %472 = vmatpush1.bf16.msra.mxu0 0
      %473 = vmatprep.mubr.bf16.mxu0 0
      %474 = vmatmul.mubr.bf16.gmra.mrb[0].mxu0 %v439
      %v475 = vpop.f32.mrb[0].mxu0
      %v476 = vadd.f32 0.0, %v475
      %v477 = vpop.f32.mrb[0].mxu0
      %v478 = vpop.f32.mrb[0].mxu0
      %v479 = vpop.f32.mrb[0].mxu0
      %480 = vdwg.mxu0
      %v485 = vunpack.c.l.b16 %v421
      %v486 = vunpack.c.l.b16 %v422
      %v487 = vunpack.c.l.b16 %v423
      %v488 = vunpack.c.l.b16 %v424
      %v489 = vpack.c.b16 %v486, %v485
      %v490 = vpack.c.b16 %v488, %v487
      %493 = vmatprep.subr.bf16.mxu0 0
      %494 = vmatpush1.bf16.msra.mxu0 %v489
      %495 = vmatprep.subr.bf16.mxu0 0
      %496 = vmatpush1.bf16.msra.mxu0 %v490
      %497 = vmatprep.subr.bf16.mxu0 0
      %498 = vmatpush1.bf16.msra.mxu0 0
      %499 = vmatprep.subr.bf16.mxu0 0
      %500 = vmatpush1.bf16.msra.mxu0 0
      %501 = vmatprep.subr.bf16.mxu0 0
      %502 = vmatpush1.bf16.msra.mxu0 0
      %503 = vmatprep.subr.bf16.mxu0 0
      %504 = vmatpush1.bf16.msra.mxu0 0
      %505 = vmatprep.subr.bf16.mxu0 0
      %506 = vmatpush1.bf16.msra.mxu0 0
      %507 = vmatprep.subr.bf16.mxu0 0
      %508 = vmatpush1.bf16.msra.mxu0 0
      %509 = vmatprep.subr.bf16.mxu0 0
      %510 = vmatpush1.bf16.msra.mxu0 0
      %511 = vmatprep.subr.bf16.mxu0 0
      %512 = vmatpush1.bf16.msra.mxu0 0
      %513 = vmatprep.subr.bf16.mxu0 0
      %514 = vmatpush1.bf16.msra.mxu0 0
      %515 = vmatprep.subr.bf16.mxu0 0
      %516 = vmatpush1.bf16.msra.mxu0 0
      %517 = vmatprep.subr.bf16.mxu0 0
      %518 = vmatpush1.bf16.msra.mxu0 0
      %519 = vmatprep.subr.bf16.mxu0 0
      %520 = vmatpush1.bf16.msra.mxu0 0
      %521 = vmatprep.subr.bf16.mxu0 0
      %522 = vmatpush1.bf16.msra.mxu0 0
      %523 = vmatprep.subr.bf16.mxu0 0
      %524 = vmatpush1.bf16.msra.mxu0 0
      %525 = vmatprep.mubr.bf16.mxu0 0
      %526 = vmatmul.mubr.bf16.gmra.mrb[0].mxu0 %v439
      %v527 = vpop.f32.mrb[0].mxu0
      %v528 = vadd.f32 0.0, %v527
      %v529 = vpop.f32.mrb[0].mxu0
      %v530 = vpop.f32.mrb[0].mxu0
      %v531 = vpop.f32.mrb[0].mxu0
      %532 = vdwg.mxu0
      %v533 = vld [vmem:[%s2] sm:$0xf]
      %v534 = vld [vmem:[%s2 + $0x4] sm:$0xf]
      %v535 = vld [vmem:[%s2 + $0x8] sm:$0xf]
      %v536 = vld [vmem:[%s2 + $0xc] sm:$0xf]
      %v537 = vld [vmem:[%s2 + $0x10] sm:$0xf]
      %v538 = vld [vmem:[%s2 + $0x14] sm:$0xf]
      %v539 = vld [vmem:[%s2 + $0x18] sm:$0xf]
      %v540 = vld [vmem:[%s2 + $0x1c] sm:$0xf]
      %v545 = vunpack.c.l.b16 %v533
      %v546 = vunpack.c.l.b16 %v534
      %v547 = vunpack.c.l.b16 %v535
      %v548 = vunpack.c.l.b16 %v536
      %v549 = vpack.c.b16 %v546, %v545
      %v550 = vpack.c.b16 %v548, %v547
      %553 = vmatprep.subr.bf16.mxu0 0
      %554 = vmatpush1.bf16.msra.mxu0 %v549
      %555 = vmatprep.subr.bf16.mxu0 0
      %556 = vmatpush1.bf16.msra.mxu0 %v550
      %557 = vmatprep.subr.bf16.mxu0 0
      %558 = vmatpush1.bf16.msra.mxu0 0
      %559 = vmatprep.subr.bf16.mxu0 0
      %560 = vmatpush1.bf16.msra.mxu0 0
      %561 = vmatprep.subr.bf16.mxu0 0
      %562 = vmatpush1.bf16.msra.mxu0 0
      %563 = vmatprep.subr.bf16.mxu0 0
      %564 = vmatpush1.bf16.msra.mxu0 0
      %565 = vmatprep.subr.bf16.mxu0 0
      %566 = vmatpush1.bf16.msra.mxu0 0
      %567 = vmatprep.subr.bf16.mxu0 0
      %568 = vmatpush1.bf16.msra.mxu0 0
      %569 = vmatprep.subr.bf16.mxu0 0
      %570 = vmatpush1.bf16.msra.mxu0 0
      %571 = vmatprep.subr.bf16.mxu0 0
      %572 = vmatpush1.bf16.msra.mxu0 0
      %573 = vmatprep.subr.bf16.mxu0 0
      %574 = vmatpush1.bf16.msra.mxu0 0
      %575 = vmatprep.subr.bf16.mxu0 0
      %576 = vmatpush1.bf16.msra.mxu0 0
      %577 = vmatprep.subr.bf16.mxu0 0
      %578 = vmatpush1.bf16.msra.mxu0 0
      %579 = vmatprep.subr.bf16.mxu0 0
      %580 = vmatpush1.bf16.msra.mxu0 0
      %581 = vmatprep.subr.bf16.mxu0 0
      %582 = vmatpush1.bf16.msra.mxu0 0
      %583 = vmatprep.subr.bf16.mxu0 0
      %584 = vmatpush1.bf16.msra.mxu0 0
      %585 = vmatprep.mubr.bf16.mxu0 0
      %586 = vmatmul.mubr.bf16.gmra.mrb[0].mxu0 %v439
      %v587 = vpop.f32.mrb[0].mxu0
      %v588 = vadd.f32 0.0, %v587
      %v589 = vpop.f32.mrb[0].mxu0
      %v590 = vpop.f32.mrb[0].mxu0
      %v591 = vpop.f32.mrb[0].mxu0
      %592 = vdwg.mxu0
      %v597 = vunpack.c.l.b16 %v537
      %v598 = vunpack.c.l.b16 %v538
      %v599 = vunpack.c.l.b16 %v539
      %v600 = vunpack.c.l.b16 %v540
      %v601 = vpack.c.b16 %v598, %v597
      %v602 = vpack.c.b16 %v600, %v599
      %605 = vmatprep.subr.bf16.mxu0 0
      %606 = vmatpush1.bf16.msra.mxu0 %v601
      %607 = vmatprep.subr.bf16.mxu0 0
      %608 = vmatpush1.bf16.msra.mxu0 %v602
      %609 = vmatprep.subr.bf16.mxu0 0
      %610 = vmatpush1.bf16.msra.mxu0 0
      %611 = vmatprep.subr.bf16.mxu0 0
      %612 = vmatpush1.bf16.msra.mxu0 0
      %613 = vmatprep.subr.bf16.mxu0 0
      %614 = vmatpush1.bf16.msra.mxu0 0
      %615 = vmatprep.subr.bf16.mxu0 0
      %616 = vmatpush1.bf16.msra.mxu0 0
      %617 = vmatprep.subr.bf16.mxu0 0
      %618 = vmatpush1.bf16.msra.mxu0 0
      %619 = vmatprep.subr.bf16.mxu0 0
      %620 = vmatpush1.bf16.msra.mxu0 0
      %621 = vmatprep.subr.bf16.mxu0 0
      %622 = vmatpush1.bf16.msra.mxu0 0
      %623 = vmatprep.subr.bf16.mxu0 0
      %624 = vmatpush1.bf16.msra.mxu0 0
      %625 = vmatprep.subr.bf16.mxu0 0
      %626 = vmatpush1.bf16.msra.mxu0 0
      %627 = vmatprep.subr.bf16.mxu0 0
      %628 = vmatpush1.bf16.msra.mxu0 0
      %629 = vmatprep.subr.bf16.mxu0 0
      %630 = vmatpush1.bf16.msra.mxu0 0
      %631 = vmatprep.subr.bf16.mxu0 0
      %632 = vmatpush1.bf16.msra.mxu0 0
      %633 = vmatprep.subr.bf16.mxu0 0
      %634 = vmatpush1.bf16.msra.mxu0 0
      %635 = vmatprep.subr.bf16.mxu0 0
      %636 = vmatpush1.bf16.msra.mxu0 0
      %637 = vmatprep.mubr.bf16.mxu0 0
      %638 = vmatmul.mubr.bf16.gmra.mrb[0].mxu0 %v439
      %v639 = vpop.f32.mrb[0].mxu0
      %v640 = vadd.f32 0.0, %v639
      %v641 = vpop.f32.mrb[0].mxu0
      %v642 = vpop.f32.mrb[0].mxu0
      %v643 = vpop.f32.mrb[0].mxu0
      %644 = vdwg.mxu0
      %v645 = vld [vmem:[%s3] sm:$0xf]
      %v646 = vld [vmem:[%s3 + $0x4] sm:$0xf]
      %v647 = vld [vmem:[%s3 + $0x8] sm:$0xf]
      %v648 = vld [vmem:[%s3 + $0xc] sm:$0xf]
      %v649 = vld [vmem:[%s3 + $0x10] sm:$0xf]
      %v650 = vld [vmem:[%s3 + $0x14] sm:$0xf]
      %v651 = vld [vmem:[%s3 + $0x18] sm:$0xf]
      %v652 = vld [vmem:[%s3 + $0x1c] sm:$0xf]
      %v657 = vunpack.c.l.b16 %v645
      %v658 = vunpack.c.l.b16 %v646
      %v659 = vunpack.c.l.b16 %v647
      %v660 = vunpack.c.l.b16 %v648
      %v661 = vpack.c.b16 %v658, %v657
      %v662 = vpack.c.b16 %v660, %v659
      %665 = vmatprep.subr.bf16.mxu0 0
      %666 = vmatpush1.bf16.msra.mxu0 %v661
      %667 = vmatprep.subr.bf16.mxu0 0
      %668 = vmatpush1.bf16.msra.mxu0 %v662
      %669 = vmatprep.subr.bf16.mxu0 0
      %670 = vmatpush1.bf16.msra.mxu0 0
      %671 = vmatprep.subr.bf16.mxu0 0
      %672 = vmatpush1.bf16.msra.mxu0 0
      %673 = vmatprep.subr.bf16.mxu0 0
      %674 = vmatpush1.bf16.msra.mxu0 0
      %675 = vmatprep.subr.bf16.mxu0 0
      %676 = vmatpush1.bf16.msra.mxu0 0
      %677 = vmatprep.subr.bf16.mxu0 0
      %678 = vmatpush1.bf16.msra.mxu0 0
      %679 = vmatprep.subr.bf16.mxu0 0
      %680 = vmatpush1.bf16.msra.mxu0 0
      %681 = vmatprep.subr.bf16.mxu0 0
      %682 = vmatpush1.bf16.msra.mxu0 0
      %683 = vmatprep.subr.bf16.mxu0 0
      %684 = vmatpush1.bf16.msra.mxu0 0
      %685 = vmatprep.subr.bf16.mxu0 0
      %686 = vmatpush1.bf16.msra.mxu0 0
      %687 = vmatprep.subr.bf16.mxu0 0
      %688 = vmatpush1.bf16.msra.mxu0 0
      %689 = vmatprep.subr.bf16.mxu0 0
      %690 = vmatpush1.bf16.msra.mxu0 0
      %691 = vmatprep.subr.bf16.mxu0 0
      %692 = vmatpush1.bf16.msra.mxu0 0
      %693 = vmatprep.subr.bf16.mxu0 0
      %694 = vmatpush1.bf16.msra.mxu0 0
      %695 = vmatprep.subr.bf16.mxu0 0
      %696 = vmatpush1.bf16.msra.mxu0 0
      %697 = vmatprep.mubr.bf16.mxu0 0
      %698 = vmatmul.mubr.bf16.gmra.mrb[0].mxu0 %v439
      %v699 = vpop.f32.mrb[0].mxu0
      %v700 = vadd.f32 0.0, %v699
      %v701 = vpop.f32.mrb[0].mxu0
      %v702 = vpop.f32.mrb[0].mxu0
      %v703 = vpop.f32.mrb[0].mxu0
      %704 = vdwg.mxu0
      %v709 = vunpack.c.l.b16 %v649
      %v710 = vunpack.c.l.b16 %v650
      %v711 = vunpack.c.l.b16 %v651
      %v712 = vunpack.c.l.b16 %v652
      %v713 = vpack.c.b16 %v710, %v709
      %v714 = vpack.c.b16 %v712, %v711
      %717 = vmatprep.subr.bf16.mxu0 0
      %718 = vmatpush1.bf16.msra.mxu0 %v713
      %719 = vmatprep.subr.bf16.mxu0 0
      %720 = vmatpush1.bf16.msra.mxu0 %v714
      %721 = vmatprep.subr.bf16.mxu0 0
      %722 = vmatpush1.bf16.msra.mxu0 0
      %723 = vmatprep.subr.bf16.mxu0 0
      %724 = vmatpush1.bf16.msra.mxu0 0
      %725 = vmatprep.subr.bf16.mxu0 0
      %726 = vmatpush1.bf16.msra.mxu0 0
      %727 = vmatprep.subr.bf16.mxu0 0
      %728 = vmatpush1.bf16.msra.mxu0 0
      %729 = vmatprep.subr.bf16.mxu0 0
      %730 = vmatpush1.bf16.msra.mxu0 0
      %731 = vmatprep.subr.bf16.mxu0 0
      %732 = vmatpush1.bf16.msra.mxu0 0
      %733 = vmatprep.subr.bf16.mxu0 0
      %734 = vmatpush1.bf16.msra.mxu0 0
      %735 = vmatprep.subr.bf16.mxu0 0
      %736 = vmatpush1.bf16.msra.mxu0 0
      %737 = vmatprep.subr.bf16.mxu0 0
      %738 = vmatpush1.bf16.msra.mxu0 0
      %739 = vmatprep.subr.bf16.mxu0 0
      %740 = vmatpush1.bf16.msra.mxu0 0
      %741 = vmatprep.subr.bf16.mxu0 0
      %742 = vmatpush1.bf16.msra.mxu0 0
      %743 = vmatprep.subr.bf16.mxu0 0
      %744 = vmatpush1.bf16.msra.mxu0 0
      %745 = vmatprep.subr.bf16.mxu0 0
      %746 = vmatpush1.bf16.msra.mxu0 0
      %747 = vmatprep.subr.bf16.mxu0 0
      %748 = vmatpush1.bf16.msra.mxu0 0
      %749 = vmatprep.mubr.bf16.mxu0 0
      %750 = vmatmul.mubr.bf16.gmra.mrb[0].mxu0 %v439
      %v751 = vpop.f32.mrb[0].mxu0
      %v752 = vadd.f32 0.0, %v751
      %v753 = vpop.f32.mrb[0].mxu0
      %v754 = vpop.f32.mrb[0].mxu0
      %v755 = vpop.f32.mrb[0].mxu0
      %756 = vdwg.mxu0
      %v757 = vmul.f32 %v476, 0.25
      %v758 = vmul.f32 %v528, 0.25
      %v759 = vpack.c.bf16 %v757, %v757
      %v760 = vpack.c.bf16 %v758, %v758
      %v761 = vpack.c.bf16 %v588, %v588
      %v762 = vpack.c.bf16 %v640, %v640
      %vm763 = vcmask 130048
      %v765 = vsel %vm763, %v759, 0
      %v768 = vsel %vm763, %v761, 0
      %770 = vmatprep.subr.bf16.mxu0 0
      %771 = vmatpush1.bf16.xpose.msra.mxu0 %v768
      %772 = vmatprep.subr.bf16.mxu0 0
      %773 = vmatpush1.bf16.xpose.msra.mxu0 0
      %774 = vmatprep.subr.bf16.mxu0 0
      %775 = vmatpush1.bf16.xpose.msra.mxu0 0
      %776 = vmatprep.subr.bf16.mxu0 0
      %777 = vmatpush1.bf16.xpose.msra.mxu0 0
      %778 = vmatprep.subr.bf16.mxu0 0
      %779 = vmatpush1.bf16.xpose.msra.mxu0 0
      %780 = vmatprep.subr.bf16.mxu0 0
      %781 = vmatpush1.bf16.xpose.msra.mxu0 0
      %782 = vmatprep.subr.bf16.mxu0 0
      %783 = vmatpush1.bf16.xpose.msra.mxu0 0
      %784 = vmatprep.subr.bf16.mxu0 0
      %785 = vmatpush1.bf16.xpose.msra.mxu0 0
      %786 = vmatprep.subr.bf16.mxu0 0
      %787 = vmatpush1.bf16.xpose.msra.mxu0 0
      %788 = vmatprep.subr.bf16.mxu0 0
      %789 = vmatpush1.bf16.xpose.msra.mxu0 0
      %790 = vmatprep.subr.bf16.mxu0 0
      %791 = vmatpush1.bf16.xpose.msra.mxu0 0
      %792 = vmatprep.subr.bf16.mxu0 0
      %793 = vmatpush1.bf16.xpose.msra.mxu0 0
      %794 = vmatprep.subr.bf16.mxu0 0
      %795 = vmatpush1.bf16.xpose.msra.mxu0 0
      %796 = vmatprep.subr.bf16.mxu0 0
      %797 = vmatpush1.bf16.xpose.msra.mxu0 0
      %798 = vmatprep.subr.bf16.mxu0 0
      %799 = vmatpush1.bf16.xpose.msra.mxu0 0
      %800 = vmatprep.subr.bf16.mxu0 0
      %801 = vmatpush1.bf16.xpose.msra.mxu0 0
      %802 = vmatprep.mubr.bf16.mxu0 0
      %803 = vmatmul.mubr.bf16.gmra.mrb[0].mxu0 %v765
      %v804 = vpop.f32.mrb[0].mxu0
      %v805 = vadd.f32 0.0, %v804
      %v806 = vpop.f32.mrb[0].mxu0
      %v807 = vpop.f32.mrb[0].mxu0
      %v808 = vpop.f32.mrb[0].mxu0
      %809 = vdwg.mxu0
      %v811 = vsel %vm763, %v760, 0
      %v814 = vsel %vm763, %v762, 0
      %816 = vmatprep.subr.bf16.mxu0 0
      %817 = vmatpush1.bf16.xpose.msra.mxu0 %v814
      %818 = vmatprep.subr.bf16.mxu0 0
      %819 = vmatpush1.bf16.xpose.msra.mxu0 0
      %820 = vmatprep.subr.bf16.mxu0 0
      %821 = vmatpush1.bf16.xpose.msra.mxu0 0
      %822 = vmatprep.subr.bf16.mxu0 0
      %823 = vmatpush1.bf16.xpose.msra.mxu0 0
      %824 = vmatprep.subr.bf16.mxu0 0
      %825 = vmatpush1.bf16.xpose.msra.mxu0 0
      %826 = vmatprep.subr.bf16.mxu0 0
      %827 = vmatpush1.bf16.xpose.msra.mxu0 0
      %828 = vmatprep.subr.bf16.mxu0 0
      %829 = vmatpush1.bf16.xpose.msra.mxu0 0
      %830 = vmatprep.subr.bf16.mxu0 0
      %831 = vmatpush1.bf16.xpose.msra.mxu0 0
      %832 = vmatprep.subr.bf16.mxu0 0
      %833 = vmatpush1.bf16.xpose.msra.mxu0 0
      %834 = vmatprep.subr.bf16.mxu0 0
      %835 = vmatpush1.bf16.xpose.msra.mxu0 0
      %836 = vmatprep.subr.bf16.mxu0 0
      %837 = vmatpush1.bf16.xpose.msra.mxu0 0
      %838 = vmatprep.subr.bf16.mxu0 0
      %839 = vmatpush1.bf16.xpose.msra.mxu0 0
      %840 = vmatprep.subr.bf16.mxu0 0
      %841 = vmatpush1.bf16.xpose.msra.mxu0 0
      %842 = vmatprep.subr.bf16.mxu0 0
      %843 = vmatpush1.bf16.xpose.msra.mxu0 0
      %844 = vmatprep.subr.bf16.mxu0 0
      %845 = vmatpush1.bf16.xpose.msra.mxu0 0
      %846 = vmatprep.subr.bf16.mxu0 0
      %847 = vmatpush1.bf16.xpose.msra.mxu0 0
      %848 = vmatprep.mubr.bf16.mxu0 0
      %849 = vmatmul.mubr.bf16.gmra.mrb[0].mxu0 %v811
      %v850 = vpop.f32.mrb[0].mxu0
      %v851 = vadd.f32 0.0, %v850
      %v852 = vpop.f32.mrb[0].mxu0
      %v853 = vpop.f32.mrb[0].mxu0
      %v854 = vpop.f32.mrb[0].mxu0
      %855 = vdwg.mxu0
      %v856 = vlaneseq
      %v857 = vshrl.u32 %v856, 7
      %v858 = vlaneseq
      %v859 = vand.u32 %v858, 127
      %vm860 = vcmp.le.s32.totalorder %v859, %v857
      %v861 = vsel %vm860, %v805, -1e+30
      %v862 = vsel %vm860, %v851, -1e+30
      %vm863 = vcmask 27648
      %v864 = vsel %vm863, %v861, -inf
      %865 = vmax.xlane.f32.xlu0 %v864
      %v866 = vpop.xlane.xlu0 %865
      %v867 = vsel %vm863, %v862, -inf
      %868 = vmax.xlane.f32.xlu0 %v867
      %v869 = vpop.xlane.xlu0 %868
      %v870 = vsub.f32 %v861, %v866
      %v871 = vsub.f32 %v862, %v869
      %v872 = vmul.f32 %v870, 1.442695
      %v873 = vpow.pop %v872
      %v874 = vmul.f32 %v871, 1.442695
      %v875 = vpow.pop %v874
      %v876 = vsel %vm863, %v873, 0.0
      %877 = vadd.xlane.f32.xlu0 %v876
      %v878 = vpop.xlane.xlu0 %877
      %v879 = vsel %vm863, %v875, 0.0
      %880 = vadd.xlane.f32.xlu0 %v879
      %v881 = vpop.xlane.xlu0 %880
      %v882 = vrcp.pop %v878
      %v883 = vrcp.pop %v881
      %v884 = vmul.f32 %v873, %v882
      %v885 = vmul.f32 %v875, %v883
      %v886 = vpack.c.bf16 %v884, %v884
      %v887 = vpack.c.bf16 %v885, %v885
      %v888 = vpack.c.bf16 %v700, %v700
      %v889 = vpack.c.bf16 %v752, %v752
      %vm890 = vcmask 31744
      %v892 = vsel %vm890, %v886, 0
      %vm894 = vcmask 1041408
      %v896 = vsel %vm894, %v888, 0
      %898 = vmatprep.subr.bf16.mxu0 0
      %899 = vmatpush1.bf16.msra.mxu0 %v896
      %900 = vmatprep.subr.bf16.mxu0 0
      %901 = vmatpush1.bf16.msra.mxu0 0
      %902 = vmatprep.subr.bf16.mxu0 0
      %903 = vmatpush1.bf16.msra.mxu0 0
      %904 = vmatprep.subr.bf16.mxu0 0
      %905 = vmatpush1.bf16.msra.mxu0 0
      %906 = vmatprep.subr.bf16.mxu0 0
      %907 = vmatpush1.bf16.msra.mxu0 0
      %908 = vmatprep.subr.bf16.mxu0 0
      %909 = vmatpush1.bf16.msra.mxu0 0
      %910 = vmatprep.subr.bf16.mxu0 0
      %911 = vmatpush1.bf16.msra.mxu0 0
      %912 = vmatprep.subr.bf16.mxu0 0
      %913 = vmatpush1.bf16.msra.mxu0 0
      %914 = vmatprep.subr.bf16.mxu0 0
      %915 = vmatpush1.bf16.msra.mxu0 0
      %916 = vmatprep.subr.bf16.mxu0 0
      %917 = vmatpush1.bf16.msra.mxu0 0
      %918 = vmatprep.subr.bf16.mxu0 0
      %919 = vmatpush1.bf16.msra.mxu0 0
      %920 = vmatprep.subr.bf16.mxu0 0
      %921 = vmatpush1.bf16.msra.mxu0 0
      %922 = vmatprep.subr.bf16.mxu0 0
      %923 = vmatpush1.bf16.msra.mxu0 0
      %924 = vmatprep.subr.bf16.mxu0 0
      %925 = vmatpush1.bf16.msra.mxu0 0
      %926 = vmatprep.subr.bf16.mxu0 0
      %927 = vmatpush1.bf16.msra.mxu0 0
      %928 = vmatprep.subr.bf16.mxu0 0
      %929 = vmatpush1.bf16.msra.mxu0 0
      %930 = vmatprep.mubr.bf16.mxu0 0
      %931 = vmatmul.mubr.bf16.gmra.mrb[0].mxu0 %v892
      %v932 = vpop.f32.mrb[0].mxu0
      %v933 = vadd.f32 0.0, %v932
      %v934 = vpop.f32.mrb[0].mxu0
      %v935 = vpop.f32.mrb[0].mxu0
      %v936 = vpop.f32.mrb[0].mxu0
      %937 = vdwg.mxu0
      %v939 = vsel %vm890, %v887, 0
      %v942 = vsel %vm894, %v889, 0
      %944 = vmatprep.subr.bf16.mxu0 0
      %945 = vmatpush1.bf16.msra.mxu0 %v942
      %946 = vmatprep.subr.bf16.mxu0 0
      %947 = vmatpush1.bf16.msra.mxu0 0
      %948 = vmatprep.subr.bf16.mxu0 0
      %949 = vmatpush1.bf16.msra.mxu0 0
      %950 = vmatprep.subr.bf16.mxu0 0
      %951 = vmatpush1.bf16.msra.mxu0 0
      %952 = vmatprep.subr.bf16.mxu0 0
      %953 = vmatpush1.bf16.msra.mxu0 0
      %954 = vmatprep.subr.bf16.mxu0 0
      %955 = vmatpush1.bf16.msra.mxu0 0
      %956 = vmatprep.subr.bf16.mxu0 0
      %957 = vmatpush1.bf16.msra.mxu0 0
      %958 = vmatprep.subr.bf16.mxu0 0
      %959 = vmatpush1.bf16.msra.mxu0 0
      %960 = vmatprep.subr.bf16.mxu0 0
      %961 = vmatpush1.bf16.msra.mxu0 0
      %962 = vmatprep.subr.bf16.mxu0 0
      %963 = vmatpush1.bf16.msra.mxu0 0
      %964 = vmatprep.subr.bf16.mxu0 0
      %965 = vmatpush1.bf16.msra.mxu0 0
      %966 = vmatprep.subr.bf16.mxu0 0
      %967 = vmatpush1.bf16.msra.mxu0 0
      %968 = vmatprep.subr.bf16.mxu0 0
      %969 = vmatpush1.bf16.msra.mxu0 0
      %970 = vmatprep.subr.bf16.mxu0 0
      %971 = vmatpush1.bf16.msra.mxu0 0
      %972 = vmatprep.subr.bf16.mxu0 0
      %973 = vmatpush1.bf16.msra.mxu0 0
      %974 = vmatprep.subr.bf16.mxu0 0
      %975 = vmatpush1.bf16.msra.mxu0 0
      %976 = vmatprep.mubr.bf16.mxu0 0
      %977 = vmatmul.mubr.bf16.gmra.mrb[0].mxu0 %v939
      %v978 = vpop.f32.mrb[0].mxu0
      %v979 = vadd.f32 0.0, %v978
      %v980 = vpop.f32.mrb[0].mxu0
      %v981 = vpop.f32.mrb[0].mxu0
      %v982 = vpop.f32.mrb[0].mxu0
      %983 = vdwg.mxu0
      %vm984 = vcmp.gt.f32.partialorder %v476, 0.0
      %vm985 = vcmp.gt.f32.partialorder %v528, 0.0
      %v986 = vadd.f32 %v476, 1.0
      %v987 = vadd.f32 %v528, 1.0
      %v988 = vmul.f32 %v476, 1.442695
      %v989 = vpow.pop %v988
      %v990 = vmul.f32 %v528, 1.442695
      %v991 = vpow.pop %v990
      %v992 = vsel %vm984, %v986, %v989
      %v993 = vsel %vm985, %v987, %v991
      %v994 = vld [vmem:[%s397] sm:$0xff]
      %v995 = vld [vmem:[%s397 + $0x8] sm:$0xff]
      %v996 = vld [vmem:[%s397 + $0x10] sm:$0xff]
      %v997 = vld [vmem:[%s397 + $0x18] sm:$0xff]
      %v998 = vld [vmem:[%s401] sm:$0x3]
      %v1000 = vsel %vm763, %v992, 0
      %1002 = vmatprep.subr.mxu0 0.0
      %1003 = vmatpush1.msra.mxu0 %v994
      %1004 = vmatprep.subr.mxu0 0.0
      %1005 = vmatpush1.msra.mxu0 %v995
      %1006 = vmatprep.subr.mxu0 0.0
      %1007 = vmatpush1.msra.mxu0 0.0
      %1008 = vmatprep.subr.mxu0 0.0
      %1009 = vmatpush1.msra.mxu0 0.0
      %1010 = vmatprep.subr.mxu0 0.0
      %1011 = vmatpush1.msra.mxu0 0.0
      %1012 = vmatprep.subr.mxu0 0.0
      %1013 = vmatpush1.msra.mxu0 0.0
      %1014 = vmatprep.subr.mxu0 0.0
      %1015 = vmatpush1.msra.mxu0 0.0
      %1016 = vmatprep.subr.mxu0 0.0
      %1017 = vmatpush1.msra.mxu0 0.0
      %1018 = vmatprep.subr.mxu0 0.0
      %1019 = vmatpush1.msra.mxu0 0.0
      %1020 = vmatprep.subr.mxu0 0.0
      %1021 = vmatpush1.msra.mxu0 0.0
      %1022 = vmatprep.subr.mxu0 0.0
      %1023 = vmatpush1.msra.mxu0 0.0
      %1024 = vmatprep.subr.mxu0 0.0
      %1025 = vmatpush1.msra.mxu0 0.0
      %1026 = vmatprep.subr.mxu0 0.0
      %1027 = vmatpush1.msra.mxu0 0.0
      %1028 = vmatprep.subr.mxu0 0.0
      %1029 = vmatpush1.msra.mxu0 0.0
      %1030 = vmatprep.subr.mxu0 0.0
      %1031 = vmatpush1.msra.mxu0 0.0
      %1032 = vmatprep.subr.mxu0 0.0
      %1033 = vmatpush1.msra.mxu0 0.0
      %1034 = vmatprep.subr.mxu0 0.0
      %1035 = vmatpush1.msra.mxu0 0.0
      %1036 = vmatprep.subr.mxu0 0.0
      %1037 = vmatpush1.msra.mxu0 0.0
      %1038 = vmatprep.subr.mxu0 0.0
      %1039 = vmatpush1.msra.mxu0 0.0
      %1040 = vmatprep.subr.mxu0 0.0
      %1041 = vmatpush1.msra.mxu0 0.0
      %1042 = vmatprep.subr.mxu0 0.0
      %1043 = vmatpush1.msra.mxu0 0.0
      %1044 = vmatprep.subr.mxu0 0.0
      %1045 = vmatpush1.msra.mxu0 0.0
      %1046 = vmatprep.subr.mxu0 0.0
      %1047 = vmatpush1.msra.mxu0 0.0
      %1048 = vmatprep.subr.mxu0 0.0
      %1049 = vmatpush1.msra.mxu0 0.0
      %1050 = vmatprep.subr.mxu0 0.0
      %1051 = vmatpush1.msra.mxu0 0.0
      %1052 = vmatprep.subr.mxu0 0.0
      %1053 = vmatpush1.msra.mxu0 0.0
      %1054 = vmatprep.subr.mxu0 0.0
      %1055 = vmatpush1.msra.mxu0 0.0
      %1056 = vmatprep.subr.mxu0 0.0
      %1057 = vmatpush1.msra.mxu0 0.0
      %1058 = vmatprep.subr.mxu0 0.0
      %1059 = vmatpush1.msra.mxu0 0.0
      %1060 = vmatprep.subr.mxu0 0.0
      %1061 = vmatpush1.msra.mxu0 0.0
      %1062 = vmatprep.subr.mxu0 0.0
      %1063 = vmatpush1.msra.mxu0 0.0
      %1064 = vmatprep.subr.mxu0 0.0
      %1065 = vmatpush1.msra.mxu0 0.0
      %1066 = vmatprep.mubr.f32.mxu0 0.0
      %1067 = vmatmul.mubr.f32.gmra.mrb[0].mxu0 %v1000
      %v1068 = vpop.f32.mrb[0].mxu0
      %v1069 = vadd.f32 0.0, %v1068
      %v1070 = vpop.f32.mrb[0].mxu0
      %1071 = vdwg.mxu0
      %v1073 = vsel %vm763, %v993, 0
      %1075 = vmatprep.subr.mxu0 0.0
      %1076 = vmatpush1.msra.mxu0 %v996
      %1077 = vmatprep.subr.mxu0 0.0
      %1078 = vmatpush1.msra.mxu0 %v997
      %1079 = vmatprep.subr.mxu0 0.0
      %1080 = vmatpush1.msra.mxu0 0.0
      %1081 = vmatprep.subr.mxu0 0.0
      %1082 = vmatpush1.msra.mxu0 0.0
      %1083 = vmatprep.subr.mxu0 0.0
      %1084 = vmatpush1.msra.mxu0 0.0
      %1085 = vmatprep.subr.mxu0 0.0
      %1086 = vmatpush1.msra.mxu0 0.0
      %1087 = vmatprep.subr.mxu0 0.0
      %1088 = vmatpush1.msra.mxu0 0.0
      %1089 = vmatprep.subr.mxu0 0.0
      %1090 = vmatpush1.msra.mxu0 0.0
      %1091 = vmatprep.subr.mxu0 0.0
      %1092 = vmatpush1.msra.mxu0 0.0
      %1093 = vmatprep.subr.mxu0 0.0
      %1094 = vmatpush1.msra.mxu0 0.0
      %1095 = vmatprep.subr.mxu0 0.0
      %1096 = vmatpush1.msra.mxu0 0.0
      %1097 = vmatprep.subr.mxu0 0.0
      %1098 = vmatpush1.msra.mxu0 0.0
      %1099 = vmatprep.subr.mxu0 0.0
      %1100 = vmatpush1.msra.mxu0 0.0
      %1101 = vmatprep.subr.mxu0 0.0
      %1102 = vmatpush1.msra.mxu0 0.0
      %1103 = vmatprep.subr.mxu0 0.0
      %1104 = vmatpush1.msra.mxu0 0.0
      %1105 = vmatprep.subr.mxu0 0.0
      %1106 = vmatpush1.msra.mxu0 0.0
      %1107 = vmatprep.subr.mxu0 0.0
      %1108 = vmatpush1.msra.mxu0 0.0
      %1109 = vmatprep.subr.mxu0 0.0
      %1110 = vmatpush1.msra.mxu0 0.0
      %1111 = vmatprep.subr.mxu0 0.0
      %1112 = vmatpush1.msra.mxu0 0.0
      %1113 = vmatprep.subr.mxu0 0.0
      %1114 = vmatpush1.msra.mxu0 0.0
      %1115 = vmatprep.subr.mxu0 0.0
      %1116 = vmatpush1.msra.mxu0 0.0
      %1117 = vmatprep.subr.mxu0 0.0
      %1118 = vmatpush1.msra.mxu0 0.0
      %1119 = vmatprep.subr.mxu0 0.0
      %1120 = vmatpush1.msra.mxu0 0.0
      %1121 = vmatprep.subr.mxu0 0.0
      %1122 = vmatpush1.msra.mxu0 0.0
      %1123 = vmatprep.subr.mxu0 0.0
      %1124 = vmatpush1.msra.mxu0 0.0
      %1125 = vmatprep.subr.mxu0 0.0
      %1126 = vmatpush1.msra.mxu0 0.0
      %1127 = vmatprep.subr.mxu0 0.0
      %1128 = vmatpush1.msra.mxu0 0.0
      %1129 = vmatprep.subr.mxu0 0.0
      %1130 = vmatpush1.msra.mxu0 0.0
      %1131 = vmatprep.subr.mxu0 0.0
      %1132 = vmatpush1.msra.mxu0 0.0
      %1133 = vmatprep.subr.mxu0 0.0
      %1134 = vmatpush1.msra.mxu0 0.0
      %1135 = vmatprep.subr.mxu0 0.0
      %1136 = vmatpush1.msra.mxu0 0.0
      %1137 = vmatprep.subr.mxu0 0.0
      %1138 = vmatpush1.msra.mxu0 0.0
      %1139 = vmatprep.mubr.f32.mxu0 0.0
      %1140 = vmatmul.mubr.f32.gmra.mrb[0].mxu0 %v1073
      %v1141 = vpop.f32.mrb[0].mxu0
      %v1142 = vadd.f32 0.0, %v1141
      %v1143 = vpop.f32.mrb[0].mxu0
      %1144 = vdwg.mxu0
      %v1147 = vunpack.c.l.s4 1966171168
      %v1148 = vunpack.c.0.s8 %v1147
      %v1149 = vlaneseq
      %v1150 = vshrl.u32 %v1149, 7
      %v1151 = vsub.s32 %v1148, %v1150
      %v1152 = vrot.slane %v998, %v1151
      %v1153 = vcombine.high %v1152, %v1152
      %v1155 = vunpack.c.l.s4 1966171168
      %v1156 = vunpack.c.0.s8 %v1155
      %v1157 = vlaneseq
      %v1158 = vshrl.u32 %v1157, 7
      %v1159 = vsub.s32 %v1156, %v1158
      %v1160 = vrot.slane %v1152, %v1159
      %v1162 = vunpack.c.l.s4 1966171168
      %v1163 = vunpack.c.0.s8 %v1162
      %v1164 = vlaneseq
      %v1165 = vshrl.u32 %v1164, 7
      %v1166 = vsub.s32 %v1163, %v1165
      %v1167 = vrot.slane %v1153, %v1166
      %v1168 = vlaneseq
      %v1169 = vshrl.u32 %v1168, 7
      %v1170 = vsub.s32 0, %v1169
      %v1171 = vrot.slane %v1160, %v1170
      %v1172 = vlaneseq
      %v1173 = vshrl.u32 %v1172, 7
      %v1174 = vsub.s32 0, %v1173
      %v1175 = vrot.slane %v1167, %v1174
      %v1178 = vmul.f32 %v992, %v1171
      %v1179 = vmul.f32 %v993, %v1175
      %vm1180 = vcmask 125952
      %v1181 = vsel %vm1180, %v1178, 0.0
      %1182 = vadd.xlane.f32.xlu0 %v1181
      %v1183 = vpop.xlane.xlu0 %1182
      %v1184 = vsel %vm1180, %v1179, 0.0
      %1185 = vadd.xlane.f32.xlu0 %v1184
      %v1186 = vpop.xlane.xlu0 %1185
      %v1187 = vadd.f32 %v1183, 1e-06
      %v1188 = vadd.f32 %v1186, 1e-06
      %v1189 = vrcp.pop %v1187
      %v1190 = vrcp.pop %v1188
      %v1191 = vmul.f32 %v1069, %v1189
      %v1192 = vmul.f32 %v1142, %v1190
      %v1193 = vld [vmem:[%s5] sm:$0x1]
      %v1194 = vld [vmem:[%s5 + $0x1] sm:$0x1]
      %v1195 = vxor.u32 %v1193, 2147483648
      %v1196 = vxor.u32 %v1194, 2147483648
      %v1197 = vmul.f32 %v1195, 1.442695
      %v1198 = vpow.pop %v1197
      %v1199 = vmul.f32 %v1196, 1.442695
      %v1200 = vpow.pop %v1199
      %v1201 = vadd.f32 %v1198, 1.0
      %v1202 = vadd.f32 %v1200, 1.0
      %v1203 = vrcp.pop %v1201
      %v1204 = vmul.f32 1.0, %v1203
      %v1205 = vrcp.pop %v1202
      %v1206 = vmul.f32 1.0, %v1205
      %v1209 = vlaneseq
      %v1210 = vshrl.u32 %v1209, 7
      %v1211 = vsub.s32 0, %v1210
      %v1212 = vrot.slane %v1204, %v1211
      %v1213 = vlaneseq
      %v1214 = vshrl.u32 %v1213, 7
      %v1215 = vsub.s32 0, %v1214
      %v1216 = vrot.slane %v1206, %v1215
      %1217 = vset.pattern.permute.xlu0 0
      %1218 = vperm.xlu0 %1217, %v1212
      %v1219 = vpop.permute.xlu0 %1218
      %1221 = vset.pattern.permute.xlu0 0
      %1222 = vperm.xlu0 %1221, %v1216
      %v1223 = vpop.permute.xlu0 %1222
      %v1225 = vmul.f32 %v1219, %v1191
      %v1226 = vmul.f32 %v1223, %v1192
      %v1227 = vsub.f32 1.0, %v1204
      %v1228 = vsub.f32 1.0, %v1206
      %v1231 = vlaneseq
      %v1232 = vshrl.u32 %v1231, 7
      %v1233 = vsub.s32 0, %v1232
      %v1234 = vrot.slane %v1227, %v1233
      %v1235 = vlaneseq
      %v1236 = vshrl.u32 %v1235, 7
      %v1237 = vsub.s32 0, %v1236
      %v1238 = vrot.slane %v1228, %v1237
      %1239 = vset.pattern.permute.xlu0 0
      %1240 = vperm.xlu0 %1239, %v1234
      %v1241 = vpop.permute.xlu0 %1240
      %1243 = vset.pattern.permute.xlu0 0
      %1244 = vperm.xlu0 %1243, %v1238
      %v1245 = vpop.permute.xlu0 %1244
      %v1247 = vmul.f32 %v1241, %v933
      %v1248 = vmul.f32 %v1245, %v979
      %v1249 = vadd.f32 %v1225, %v1247
      %v1250 = vadd.f32 %v1226, %v1248
      %v1251 = vpack.c.bf16 %v1249, %v1249
      %v1252 = vpack.c.bf16 %v1250, %v1250
      %v1253 = vld [vmem:[%s4] sm:$0xf]
      %v1254 = vld [vmem:[%s4 + $0x4] sm:$0xf]
      %v1255 = vld [vmem:[%s4 + $0x8] sm:$0xf]
      %v1256 = vld [vmem:[%s4 + $0xc] sm:$0xf]
      %v1259 = vunpack.c.l.b16 %v1253
      %v1260 = vunpack.c.l.b16 %v1254
      %v1261 = vpack.c.b16 %v1260, %v1259
      %v1264 = vsel %vm763, %v1251, 0
      %1266 = vmatprep.subr.bf16.mxu0 0
      %1267 = vmatpush1.bf16.msra.mxu0 %v1261
      %1268 = vmatprep.subr.bf16.mxu0 0
      %1269 = vmatpush1.bf16.msra.mxu0 0
      %1270 = vmatprep.subr.bf16.mxu0 0
      %1271 = vmatpush1.bf16.msra.mxu0 0
      %1272 = vmatprep.subr.bf16.mxu0 0
      %1273 = vmatpush1.bf16.msra.mxu0 0
      %1274 = vmatprep.subr.bf16.mxu0 0
      %1275 = vmatpush1.bf16.msra.mxu0 0
      %1276 = vmatprep.subr.bf16.mxu0 0
      %1277 = vmatpush1.bf16.msra.mxu0 0
      %1278 = vmatprep.subr.bf16.mxu0 0
      %1279 = vmatpush1.bf16.msra.mxu0 0
      %1280 = vmatprep.subr.bf16.mxu0 0
      %1281 = vmatpush1.bf16.msra.mxu0 0
      %1282 = vmatprep.subr.bf16.mxu0 0
      %1283 = vmatpush1.bf16.msra.mxu0 0
      %1284 = vmatprep.subr.bf16.mxu0 0
      %1285 = vmatpush1.bf16.msra.mxu0 0
      %1286 = vmatprep.subr.bf16.mxu0 0
      %1287 = vmatpush1.bf16.msra.mxu0 0
      %1288 = vmatprep.subr.bf16.mxu0 0
      %1289 = vmatpush1.bf16.msra.mxu0 0
      %1290 = vmatprep.subr.bf16.mxu0 0
      %1291 = vmatpush1.bf16.msra.mxu0 0
      %1292 = vmatprep.subr.bf16.mxu0 0
      %1293 = vmatpush1.bf16.msra.mxu0 0
      %1294 = vmatprep.subr.bf16.mxu0 0
      %1295 = vmatpush1.bf16.msra.mxu0 0
      %1296 = vmatprep.subr.bf16.mxu0 0
      %1297 = vmatpush1.bf16.msra.mxu0 0
      %1298 = vmatprep.mubr.bf16.mxu0 0
      %1299 = vmatmul.mubr.bf16.gmra.mrb[0].mxu0 %v1264
      %v1300 = vpop.f32.mrb[0].mxu0
      %v1301 = vadd.f32 0.0, %v1300
      %v1302 = vpop.f32.mrb[0].mxu0
      %v1303 = vpop.f32.mrb[0].mxu0
      %v1304 = vpop.f32.mrb[0].mxu0
      %1305 = vdwg.mxu0
      %v1308 = vunpack.c.l.b16 %v1255
      %v1309 = vunpack.c.l.b16 %v1256
      %v1310 = vpack.c.b16 %v1309, %v1308
      %v1313 = vsel %vm763, %v1252, 0
      %1315 = vmatprep.subr.bf16.mxu0 0
      %1316 = vmatpush1.bf16.msra.mxu0 %v1310
      %1317 = vmatprep.subr.bf16.mxu0 0
      %1318 = vmatpush1.bf16.msra.mxu0 0
      %1319 = vmatprep.subr.bf16.mxu0 0
      %1320 = vmatpush1.bf16.msra.mxu0 0
      %1321 = vmatprep.subr.bf16.mxu0 0
      %1322 = vmatpush1.bf16.msra.mxu0 0
      %1323 = vmatprep.subr.bf16.mxu0 0
      %1324 = vmatpush1.bf16.msra.mxu0 0
      %1325 = vmatprep.subr.bf16.mxu0 0
      %1326 = vmatpush1.bf16.msra.mxu0 0
      %1327 = vmatprep.subr.bf16.mxu0 0
      %1328 = vmatpush1.bf16.msra.mxu0 0
      %1329 = vmatprep.subr.bf16.mxu0 0
      %1330 = vmatpush1.bf16.msra.mxu0 0
      %1331 = vmatprep.subr.bf16.mxu0 0
      %1332 = vmatpush1.bf16.msra.mxu0 0
      %1333 = vmatprep.subr.bf16.mxu0 0
      %1334 = vmatpush1.bf16.msra.mxu0 0
      %1335 = vmatprep.subr.bf16.mxu0 0
      %1336 = vmatpush1.bf16.msra.mxu0 0
      %1337 = vmatprep.subr.bf16.mxu0 0
      %1338 = vmatpush1.bf16.msra.mxu0 0
      %1339 = vmatprep.subr.bf16.mxu0 0
      %1340 = vmatpush1.bf16.msra.mxu0 0
      %1341 = vmatprep.subr.bf16.mxu0 0
      %1342 = vmatpush1.bf16.msra.mxu0 0
      %1343 = vmatprep.subr.bf16.mxu0 0
      %1344 = vmatpush1.bf16.msra.mxu0 0
      %1345 = vmatprep.subr.bf16.mxu0 0
      %1346 = vmatpush1.bf16.msra.mxu0 0
      %1347 = vmatprep.mubr.bf16.mxu0 0
      %1348 = vmatmul.mubr.bf16.gmra.mrb[0].mxu0 %v1313
      %v1349 = vpop.f32.mrb[0].mxu0
      %v1350 = vadd.f32 0.0, %v1349
      %v1351 = vpop.f32.mrb[0].mxu0
      %v1352 = vpop.f32.mrb[0].mxu0
      %v1353 = vpop.f32.mrb[0].mxu0
      %1354 = vdwg.mxu0
      %v1355 = vunpack.c.l.bf16 %v416
      %vm1356 = vcmask 257024
      %v1357 = vsel %vm1356, %v1301, 0.0
      %v1358 = vsel %vm1356, %v1350, 0.0
      %v1359 = vadd.f32 %v1357, %v1358
      %v1360 = vadd.f32 %v1355, %v1359
      %v1361 = vpack.c.bf16 %v1360, %v1360
      %vm1362 = vcmask 254976
      %1363 = vst.msk [vmem:[%s405] sm:$0x3] %vm1362, %v1361
      %vm1364 = vcmp.gt.f32.partialorder %v588, 0.0
      %vm1365 = vcmp.gt.f32.partialorder %v640, 0.0
      %v1366 = vadd.f32 %v588, 1.0
      %v1367 = vadd.f32 %v640, 1.0
      %v1368 = vmul.f32 %v588, 1.442695
      %v1369 = vpow.pop %v1368
      %v1370 = vmul.f32 %v640, 1.442695
      %v1371 = vpow.pop %v1370
      %v1372 = vsel %vm1364, %v1366, %v1369
      %v1373 = vsel %vm1365, %v1367, %v1371
      %1374 = vxpose.xlu0.b32.start [1/16] %v1372, 128
      %1375 = vxpose.xlu0.b32.cont [2/16] 0.0, 128
      %1376 = vxpose.xlu0.b32.cont [3/16] 0.0, 128
      %1377 = vxpose.xlu0.b32.cont [4/16] 0.0, 128
      %1378 = vxpose.xlu0.b32.cont [5/16] 0.0, 128
      %1379 = vxpose.xlu0.b32.cont [6/16] 0.0, 128
      %1380 = vxpose.xlu0.b32.cont [7/16] 0.0, 128
      %1381 = vxpose.xlu0.b32.cont [8/16] 0.0, 128
      %1382 = vxpose.xlu0.b32.cont [9/16] 0.0, 128
      %1383 = vxpose.xlu0.b32.cont [10/16] 0.0, 128
      %1384 = vxpose.xlu0.b32.cont [11/16] 0.0, 128
      %1385 = vxpose.xlu0.b32.cont [12/16] 0.0, 128
      %1386 = vxpose.xlu0.b32.cont [13/16] 0.0, 128
      %1387 = vxpose.xlu0.b32.cont [14/16] 0.0, 128
      %1388 = vxpose.xlu0.b32.cont [15/16] 0.0, 128
      %1389 = vxpose.xlu0.b32.end [16/16] 0.0, 128
      %v1390 = vpop.trf.xlu0
      %v1391 = vpop.trf.xlu0
      %v1392 = vpop.trf.xlu0
      %v1393 = vpop.trf.xlu0
      %v1394 = vpop.trf.xlu0
      %v1395 = vpop.trf.xlu0
      %v1396 = vpop.trf.xlu0
      %v1397 = vpop.trf.xlu0
      %v1398 = vpop.trf.xlu0
      %v1399 = vpop.trf.xlu0
      %v1400 = vpop.trf.xlu0
      %v1401 = vpop.trf.xlu0
      %v1402 = vpop.trf.xlu0
      %v1403 = vpop.trf.xlu0
      %v1404 = vpop.trf.xlu0
      %v1405 = vpop.trf.xlu0
      %v1407 = vsel %vm890, %v1390, 0
      %v1410 = vsel %vm890, %v1391, 0
      %vm1412 = vcmask 1043456
      %v1414 = vsel %vm1412, %v700, 0
      %1416 = vmatprep.subr.mxu0 0.0
      %1417 = vmatpush1.msra.mxu0 %v1414
      %1418 = vmatprep.subr.mxu0 0.0
      %1419 = vmatpush1.msra.mxu0 0.0
      %1420 = vmatprep.subr.mxu0 0.0
      %1421 = vmatpush1.msra.mxu0 0.0
      %1422 = vmatprep.subr.mxu0 0.0
      %1423 = vmatpush1.msra.mxu0 0.0
      %1424 = vmatprep.subr.mxu0 0.0
      %1425 = vmatpush1.msra.mxu0 0.0
      %1426 = vmatprep.subr.mxu0 0.0
      %1427 = vmatpush1.msra.mxu0 0.0
      %1428 = vmatprep.subr.mxu0 0.0
      %1429 = vmatpush1.msra.mxu0 0.0
      %1430 = vmatprep.subr.mxu0 0.0
      %1431 = vmatpush1.msra.mxu0 0.0
      %1432 = vmatprep.subr.mxu0 0.0
      %1433 = vmatpush1.msra.mxu0 0.0
      %1434 = vmatprep.subr.mxu0 0.0
      %1435 = vmatpush1.msra.mxu0 0.0
      %1436 = vmatprep.subr.mxu0 0.0
      %1437 = vmatpush1.msra.mxu0 0.0
      %1438 = vmatprep.subr.mxu0 0.0
      %1439 = vmatpush1.msra.mxu0 0.0
      %1440 = vmatprep.subr.mxu0 0.0
      %1441 = vmatpush1.msra.mxu0 0.0
      %1442 = vmatprep.subr.mxu0 0.0
      %1443 = vmatpush1.msra.mxu0 0.0
      %1444 = vmatprep.subr.mxu0 0.0
      %1445 = vmatpush1.msra.mxu0 0.0
      %1446 = vmatprep.subr.mxu0 0.0
      %1447 = vmatpush1.msra.mxu0 0.0
      %1448 = vmatprep.subr.mxu0 0.0
      %1449 = vmatpush1.msra.mxu0 0.0
      %1450 = vmatprep.subr.mxu0 0.0
      %1451 = vmatpush1.msra.mxu0 0.0
      %1452 = vmatprep.subr.mxu0 0.0
      %1453 = vmatpush1.msra.mxu0 0.0
      %1454 = vmatprep.subr.mxu0 0.0
      %1455 = vmatpush1.msra.mxu0 0.0
      %1456 = vmatprep.subr.mxu0 0.0
      %1457 = vmatpush1.msra.mxu0 0.0
      %1458 = vmatprep.subr.mxu0 0.0
      %1459 = vmatpush1.msra.mxu0 0.0
      %1460 = vmatprep.subr.mxu0 0.0
      %1461 = vmatpush1.msra.mxu0 0.0
      %1462 = vmatprep.subr.mxu0 0.0
      %1463 = vmatpush1.msra.mxu0 0.0
      %1464 = vmatprep.subr.mxu0 0.0
      %1465 = vmatpush1.msra.mxu0 0.0
      %1466 = vmatprep.subr.mxu0 0.0
      %1467 = vmatpush1.msra.mxu0 0.0
      %1468 = vmatprep.subr.mxu0 0.0
      %1469 = vmatpush1.msra.mxu0 0.0
      %1470 = vmatprep.subr.mxu0 0.0
      %1471 = vmatpush1.msra.mxu0 0.0
      %1472 = vmatprep.subr.mxu0 0.0
      %1473 = vmatpush1.msra.mxu0 0.0
      %1474 = vmatprep.subr.mxu0 0.0
      %1475 = vmatpush1.msra.mxu0 0.0
      %1476 = vmatprep.subr.mxu0 0.0
      %1477 = vmatpush1.msra.mxu0 0.0
      %1478 = vmatprep.subr.mxu0 0.0
      %1479 = vmatpush1.msra.mxu0 0.0
      %1480 = vmatprep.mubr.f32.mxu0 0.0
      %1481 = vmatmul.mubr.f32.gmra.mrb[0].mxu0 %v1407
      %v1482 = vpop.f32.mrb[0].mxu0
      %v1483 = vadd.f32 0.0, %v1482
      %v1484 = vpop.f32.mrb[0].mxu0
      %1485 = vmatprep.mubr.f32.mxu0 0.0
      %1486 = vmatmul.mubr.f32.gmra.mrb[0].mxu0 %v1410
      %v1487 = vpop.f32.mrb[0].mxu0
      %v1488 = vadd.f32 0.0, %v1487
      %v1489 = vpop.f32.mrb[0].mxu0
      %1490 = vdwg.mxu0
      %1491 = vxpose.xlu0.b32.start [1/16] %v1373, 128
      %1492 = vxpose.xlu0.b32.cont [2/16] 0.0, 128
      %1493 = vxpose.xlu0.b32.cont [3/16] 0.0, 128
      %1494 = vxpose.xlu0.b32.cont [4/16] 0.0, 128
      %1495 = vxpose.xlu0.b32.cont [5/16] 0.0, 128
      %1496 = vxpose.xlu0.b32.cont [6/16] 0.0, 128
      %1497 = vxpose.xlu0.b32.cont [7/16] 0.0, 128
      %1498 = vxpose.xlu0.b32.cont [8/16] 0.0, 128
      %1499 = vxpose.xlu0.b32.cont [9/16] 0.0, 128
      %1500 = vxpose.xlu0.b32.cont [10/16] 0.0, 128
      %1501 = vxpose.xlu0.b32.cont [11/16] 0.0, 128
      %1502 = vxpose.xlu0.b32.cont [12/16] 0.0, 128
      %1503 = vxpose.xlu0.b32.cont [13/16] 0.0, 128
      %1504 = vxpose.xlu0.b32.cont [14/16] 0.0, 128
      %1505 = vxpose.xlu0.b32.cont [15/16] 0.0, 128
      %1506 = vxpose.xlu0.b32.end [16/16] 0.0, 128
      %v1507 = vpop.trf.xlu0
      %v1508 = vpop.trf.xlu0
      %v1509 = vpop.trf.xlu0
      %v1510 = vpop.trf.xlu0
      %v1511 = vpop.trf.xlu0
      %v1512 = vpop.trf.xlu0
      %v1513 = vpop.trf.xlu0
      %v1514 = vpop.trf.xlu0
      %v1515 = vpop.trf.xlu0
      %v1516 = vpop.trf.xlu0
      %v1517 = vpop.trf.xlu0
      %v1518 = vpop.trf.xlu0
      %v1519 = vpop.trf.xlu0
      %v1520 = vpop.trf.xlu0
      %v1521 = vpop.trf.xlu0
      %v1522 = vpop.trf.xlu0
      %v1524 = vsel %vm890, %v1507, 0
      %v1527 = vsel %vm890, %v1508, 0
      %v1530 = vsel %vm1412, %v752, 0
      %1532 = vmatprep.subr.mxu0 0.0
      %1533 = vmatpush1.msra.mxu0 %v1530
      %1534 = vmatprep.subr.mxu0 0.0
      %1535 = vmatpush1.msra.mxu0 0.0
      %1536 = vmatprep.subr.mxu0 0.0
      %1537 = vmatpush1.msra.mxu0 0.0
      %1538 = vmatprep.subr.mxu0 0.0
      %1539 = vmatpush1.msra.mxu0 0.0
      %1540 = vmatprep.subr.mxu0 0.0
      %1541 = vmatpush1.msra.mxu0 0.0
      %1542 = vmatprep.subr.mxu0 0.0
      %1543 = vmatpush1.msra.mxu0 0.0
      %1544 = vmatprep.subr.mxu0 0.0
      %1545 = vmatpush1.msra.mxu0 0.0
      %1546 = vmatprep.subr.mxu0 0.0
      %1547 = vmatpush1.msra.mxu0 0.0
      %1548 = vmatprep.subr.mxu0 0.0
      %1549 = vmatpush1.msra.mxu0 0.0
      %1550 = vmatprep.subr.mxu0 0.0
      %1551 = vmatpush1.msra.mxu0 0.0
      %1552 = vmatprep.subr.mxu0 0.0
      %1553 = vmatpush1.msra.mxu0 0.0
      %1554 = vmatprep.subr.mxu0 0.0
      %1555 = vmatpush1.msra.mxu0 0.0
      %1556 = vmatprep.subr.mxu0 0.0
      %1557 = vmatpush1.msra.mxu0 0.0
      %1558 = vmatprep.subr.mxu0 0.0
      %1559 = vmatpush1.msra.mxu0 0.0
      %1560 = vmatprep.subr.mxu0 0.0
      %1561 = vmatpush1.msra.mxu0 0.0
      %1562 = vmatprep.subr.mxu0 0.0
      %1563 = vmatpush1.msra.mxu0 0.0
      %1564 = vmatprep.subr.mxu0 0.0
      %1565 = vmatpush1.msra.mxu0 0.0
      %1566 = vmatprep.subr.mxu0 0.0
      %1567 = vmatpush1.msra.mxu0 0.0
      %1568 = vmatprep.subr.mxu0 0.0
      %1569 = vmatpush1.msra.mxu0 0.0
      %1570 = vmatprep.subr.mxu0 0.0
      %1571 = vmatpush1.msra.mxu0 0.0
      %1572 = vmatprep.subr.mxu0 0.0
      %1573 = vmatpush1.msra.mxu0 0.0
      %1574 = vmatprep.subr.mxu0 0.0
      %1575 = vmatpush1.msra.mxu0 0.0
      %1576 = vmatprep.subr.mxu0 0.0
      %1577 = vmatpush1.msra.mxu0 0.0
      %1578 = vmatprep.subr.mxu0 0.0
      %1579 = vmatpush1.msra.mxu0 0.0
      %1580 = vmatprep.subr.mxu0 0.0
      %1581 = vmatpush1.msra.mxu0 0.0
      %1582 = vmatprep.subr.mxu0 0.0
      %1583 = vmatpush1.msra.mxu0 0.0
      %1584 = vmatprep.subr.mxu0 0.0
      %1585 = vmatpush1.msra.mxu0 0.0
      %1586 = vmatprep.subr.mxu0 0.0
      %1587 = vmatpush1.msra.mxu0 0.0
      %1588 = vmatprep.subr.mxu0 0.0
      %1589 = vmatpush1.msra.mxu0 0.0
      %1590 = vmatprep.subr.mxu0 0.0
      %1591 = vmatpush1.msra.mxu0 0.0
      %1592 = vmatprep.subr.mxu0 0.0
      %1593 = vmatpush1.msra.mxu0 0.0
      %1594 = vmatprep.subr.mxu0 0.0
      %1595 = vmatpush1.msra.mxu0 0.0
      %1596 = vmatprep.mubr.f32.mxu0 0.0
      %1597 = vmatmul.mubr.f32.gmra.mrb[0].mxu0 %v1524
      %v1598 = vpop.f32.mrb[0].mxu0
      %v1599 = vadd.f32 0.0, %v1598
      %v1600 = vpop.f32.mrb[0].mxu0
      %1601 = vmatprep.mubr.f32.mxu0 0.0
      %1602 = vmatmul.mubr.f32.gmra.mrb[0].mxu0 %v1527
      %v1603 = vpop.f32.mrb[0].mxu0
      %v1604 = vadd.f32 0.0, %v1603
      %v1605 = vpop.f32.mrb[0].mxu0
      %1606 = vdwg.mxu0
      %v1607 = vadd.f32 %v994, %v1483
      %v1608 = vadd.f32 %v995, %v1488
      %v1609 = vadd.f32 %v996, %v1599
      %v1610 = vadd.f32 %v997, %v1604
      %1611 = vst.msk [vmem:[%s410] sm:$0xff] %vm763, %v1607
      %1612 = vst.msk [vmem:[%s410 + $0x8] sm:$0xff] %vm763, %v1608
      %1613 = vst.msk [vmem:[%s410 + $0x10] sm:$0xff] %vm763, %v1609
      %1614 = vst.msk [vmem:[%s410 + $0x18] sm:$0xff] %vm763, %v1610
      %v1615 = vsel %vm1180, %v1372, 0.0
      %v1616 = vrot.slane %v1615, 4
      %v1617 = vadd.f32 %v1615, %v1616
      %v1618 = vrot.slane %v1617, 2
      %v1619 = vadd.f32 %v1617, %v1618
      %v1620 = vrot.slane %v1619, 1
      %v1621 = vadd.f32 %v1619, %v1620
      %v1622 = vsel %vm1180, %v1373, 0.0
      %v1623 = vrot.slane %v1622, 4
      %v1624 = vadd.f32 %v1622, %v1623
      %v1625 = vrot.slane %v1624, 2
      %v1626 = vadd.f32 %v1624, %v1625
      %v1627 = vrot.slane %v1626, 1
      %v1628 = vadd.f32 %v1626, %v1627
      %vm1631 = vcmask 1041409
      %v1632 = vsel %vm1631, %v1628, %v1621
      %v1634 = vadd.f32 %v998, %v1632
      %vm1635 = vcmask 123904
      %1636 = vst.msk [vmem:[%s414] sm:$0x3] %vm1635, %v1634
      %p1637 = scmp.lt.s32.totalorder %s22, 7
      %s1638 = scalar_select %p1637, %s22, 7
      %s1639 = smul.addr %s1638, 2
      %s1640 = scalar_lea.vmem %s8, %s1639
      %p1641 = scmp.lt.s32.totalorder %s22, 7
      %s1642 = scalar_select %p1641, %s22, 7
      %s1643 = smul.addr %s1642, 4
      %s1644 = smul.addr %s1643, 8
      %s1645 = scalar_lea.vmem %s9, %s1644
      %p1646 = scmp.lt.s32.totalorder %s22, 7
      %s1647 = scalar_select %p1646, %s22, 7
      %s1648 = smul.addr %s1647, 2
      %s1649 = scalar_lea.vmem %s10, %s1648
      // Predicated region
      $region53: #{forward.4} parent=51 // pred_check
        %p1650 = pneg %p223
      $region54: #{forward.4} parent=51 // pred_check_branch
        %1652 = sbr.rel (%p1650) target = $region56
      $region55: #{forward.4} parent=51 // pred_region
        _
      $region56: #{forward.4} parent=51 // pred_fallthru
        _
      // Predicated region
      $region57: #{forward.4} parent=51 // pred_check
        %p1653 = pneg %p249
      $region58: #{forward.4} parent=51 // pred_check_branch
        %1655 = sbr.rel (%p1653) target = $region60
      $region59: #{forward.4} parent=51 // pred_region
        _
      $region60: #{forward.4} parent=51 // pred_fallthru
        _
      // Predicated region
      $region61: #{forward.4} parent=51 // pred_check
        %p1656 = pneg %p275
      $region62: #{forward.4} parent=51 // pred_check_branch
        %1658 = sbr.rel (%p1656) target = $region64
      $region63: #{forward.4} parent=51 // pred_region
        _
      $region64: #{forward.4} parent=51 // pred_fallthru
        _
    $region52: #{forward.4} parent=5 // pred_fallthru
      _
    %p1659 = scmp.le.s32.totalorder 2, %s17
    // Predicated region
    $region65: #{forward.4} parent=5 // pred_check
      %p1660 = pneg %p1659
    $region66: #{forward.4} parent=5 // pred_check_branch
      %1662 = sbr.rel (%p1660) target = $region68
    $region67: #{forward.4} parent=5 // pred_region
      %s1663 = ssub.s32 %s17, 2
      // Predicated region
      $region69: #{forward.4} parent=67 // pred_check
        %p1664 = pneg %p229
      $region70: #{forward.4} parent=67 // pred_check_branch
        %1666 = sbr.rel (%p1664) target = $region72
      $region71: #{forward.4} parent=67 // pred_region
        %p1667 = scmp.lt.s32.totalorder %s23, 7
        %s1668 = scalar_select %p1667, %s23, 7
        %s1669 = smul.addr %s1668, 2
        %s1670 = scalar_lea.vmem %s8, %s1669
      $region72: #{forward.4} parent=67 // pred_fallthru
        _
      // Predicated region
      $region73: #{forward.4} parent=67 // pred_check
        %p1671 = pneg %p255
      $region74: #{forward.4} parent=67 // pred_check_branch
        %1673 = sbr.rel (%p1671) target = $region76
      $region75: #{forward.4} parent=67 // pred_region
        %p1674 = scmp.lt.s32.totalorder %s23, 7
        %s1675 = scalar_select %p1674, %s23, 7
        %s1676 = smul.addr %s1675, 4
        %s1677 = smul.addr %s1676, 8
        %s1678 = scalar_lea.vmem %s9, %s1677
      $region76: #{forward.4} parent=67 // pred_fallthru
        _
      // Predicated region
      $region77: #{forward.4} parent=67 // pred_check
        %p1679 = pneg %p281
      $region78: #{forward.4} parent=67 // pred_check_branch
        %1681 = sbr.rel (%p1679) target = $region80
      $region79: #{forward.4} parent=67 // pred_region
        %p1682 = scmp.lt.s32.totalorder %s23, 7
        %s1683 = scalar_select %p1682, %s23, 7
        %s1684 = smul.addr %s1683, 2
        %s1685 = scalar_lea.vmem %s10, %s1684
      $region80: #{forward.4} parent=67 // pred_fallthru
        _
    $region68: #{forward.4} parent=5 // pred_fallthru
      _
  $region6: #{forward.4} parent=0 // loop_footer
    %s21 = sadd.s32 1, %s17
  $region7: #{forward.4} parent=0 // loop_footer_branch
    %16 = sbr.rel target = $region3
  $region8: #{forward.4} parent=0 // loop_exit
    _

</llo_original>
